<compile_context>
chip_gen: v7x
topology: tpu7x:2x2x1
jax: 0.10.0
libtpu: 0.0.40
codegen_flags: <defaults>
</compile_context>

<pallas_src>
import jax
import jax.numpy as jnp
from jax import lax
from jax.experimental import pallas as pl
from jax.experimental.pallas import tpu as pltpu


# ---------------------------------------------------------------------------
# Kernel 1: per-batch phi / g build  (1x1 conv + 2x2 max-pool), bf16 outputs.
#   x_win rows are ordered (window position k, pooled pixel m), so one long matmul
#   over all 4 window positions followed by a max over the 4 slabs == maxpool(conv(x)).
# ---------------------------------------------------------------------------
def _kv_build_kernel(xw_ref, wp_ref, bp_ref, wg_ref, bg_ref, phi_ref, g_ref):
    four_m = xw_ref.shape[1]
    m = four_m // 4
    xw = xw_ref[0]                                                  # (4M, C) bf16

    def proj_pool(w_ref, b_ref):
        p = jnp.dot(xw, w_ref[...], preferred_element_type=jnp.float32)   # (4M, Cp)
        cp = p.shape[-1]
        p = p.reshape(4, m, cp).max(axis=0)                         # (M, Cp) VPU max-pool
        return p + b_ref[...]

    phi_ref[0] = proj_pool(wp_ref, bp_ref).astype(jnp.bfloat16)
    g_ref[0] = proj_pool(wg_ref, bg_ref).astype(jnp.bfloat16)


# ---------------------------------------------------------------------------
# Kernel 2 factory: flash-style attention + output projection + residual.
#   grid = (B, N_pad//TILE_N, M_pad//TILE_M); semantics (parallel, parallel, arbitrary).
# ---------------------------------------------------------------------------
def _make_attn_kernel(m_real, tile_m, m_pad):
    need_mask = (m_pad != m_real)

    def kernel(x_ref, phi_ref, g_ref, wt_ref, bt_ref, wo_ref, bo_ref,
               o_ref, theta_sc, m_sc, l_sc, acc_sc):
        mi = pl.program_id(2)

        @pl.when(mi == 0)
        def _init():
            m_sc[...] = jnp.full_like(m_sc, -jnp.inf)
            l_sc[...] = jnp.zeros_like(l_sc)
            acc_sc[...] = jnp.zeros_like(acc_sc)
            # theta = conv1x1(x) for this query tile, cached as bf16 across key tiles.
            th = jnp.dot(x_ref[0].astype(jnp.bfloat16), wt_ref[...],
                         preferred_element_type=jnp.float32) + bt_ref[...]
            theta_sc[...] = th.astype(jnp.bfloat16)

        # scores for this key tile: contract the Cp dims of theta and phi ("nt" matmul)
        f = lax.dot_general(
            theta_sc[...], phi_ref[0],
            dimension_numbers=(((1,), (1,)), ((), ())),
            preferred_element_type=jnp.float32)                     # (TILE_N, TILE_M)
        if need_mask:
            col = mi * tile_m + lax.broadcasted_iota(jnp.int32, f.shape, 1)
            f = jnp.where(col < m_real, f, -jnp.inf)

        m_new = jnp.maximum(m_sc[...], jnp.max(f, axis=-1, keepdims=True))
        alpha = jnp.exp(m_sc[...] - m_new)
        p = jnp.exp(f - m_new)
        l_sc[...] = alpha * l_sc[...] + jnp.sum(p, axis=-1, keepdims=True)
        acc_sc[...] = alpha * acc_sc[...] + jnp.dot(
            p.astype(jnp.bfloat16), g_ref[0], preferred_element_type=jnp.float32)
        m_sc[...] = m_new

        @pl.when(mi == pl.num_programs(2) - 1)
        def _finalize():
            # softmax denominator folded post-matmul via EUP reciprocal
            y = acc_sc[...] * pl.reciprocal(l_sc[...], approx=True)       # (TILE_N, Cp)
            o_ref[0] = (jnp.dot(y.astype(jnp.bfloat16), wo_ref[...],
                                preferred_element_type=jnp.float32)
                        + bo_ref[...] + x_ref[0])

    return kernel


# ---------------------------------------------------------------------------
# Wrapper: NCHW boundary plumbing, BN folding, padding, two pallas_calls.
# ---------------------------------------------------------------------------
def non_local_block_forward(x_nchw, params, tile_n=None, tile_m=256):
    B, C, H, W = x_nchw.shape
    assert H % 2 == 0 and W % 2 == 0, "sub_sample=True 2x2 maxpool assumes even H, W"
    N = H * W
    Hh, Wh = H // 2, W // 2
    M = Hh * Wh
    Cp = params["w_theta"].shape[1]

    if tile_n is None:
        # v5e MXU is 4x128x128 (128 already fills it); v6e/v7x MXU is 2x256x256.
        try:
            kind = jax.devices()[0].device_kind.lower()
        except Exception:
            kind = ""
        tile_n = 128 if "v5" in kind else 256

    TILE_N = tile_n if N >= tile_n else N
    TILE_M = tile_m if M >= tile_m else M
    N_pad = pl.cdiv(N, TILE_N) * TILE_N
    M_pad = pl.cdiv(M, TILE_M) * TILE_M

    # ---- layout plumbing (cheap XLA ops at the NCHW boundary) ---------------------------
    x_nhwc = jnp.transpose(x_nchw, (0, 2, 3, 1))                    # (B, H, W, C)
    x_flat = x_nhwc.reshape(B, N, C).astype(jnp.float32)            # residual / theta input
    # per 2x2-window-position gather, flattened to (B, 4*M, C); bf16 halves HBM traffic
    x_win = jnp.transpose(
        x_nhwc.reshape(B, Hh, 2, Wh, 2, C), (0, 2, 4, 1, 3, 5)
    ).reshape(B, 4 * M, C).astype(jnp.bfloat16)

    # bf16 MXU weights; biases stay f32
    wt = params["w_theta"].astype(jnp.bfloat16)
    wp = params["w_phi"].astype(jnp.bfloat16)
    wg = params["w_g"].astype(jnp.bfloat16)
    bt = params["b_theta"].astype(jnp.float32)
    bp = params["b_phi"].astype(jnp.float32)
    bg = params["b_g"].astype(jnp.float32)

    # fold eval-mode BN (running_mean=0, running_var=1) into the output projection
    eps = 1e-5
    scale = params["bn_gamma"] / jnp.sqrt(1.0 + eps)                # (C,)
    wo = (params["w_W"] * scale[None, :]).astype(jnp.bfloat16)      # (Cp, C)
    bo = (params["b_W"] * scale[None, :] + params["bn_beta"][None, :]).astype(jnp.float32)

    # ---- kernel 1: phi / g (projected + 2x2 max-pooled), once per batch -----------------
    phi, g = pl.pallas_call(
        _kv_build_kernel,
        out_shape=(jax.ShapeDtypeStruct((B, M, Cp), jnp.bfloat16),
                   jax.ShapeDtypeStruct((B, M, Cp), jnp.bfloat16)),
        grid_spec=pltpu.PrefetchScalarGridSpec(
            num_scalar_prefetch=0,
            grid=(B,),
            in_specs=[
                pl.BlockSpec((1, 4 * M, C), lambda b: (b, 0, 0)),
                pl.BlockSpec((C, Cp), lambda b: (0, 0)),
                pl.BlockSpec((1, Cp), lambda b: (0, 0)),
                pl.BlockSpec((C, Cp), lambda b: (0, 0)),
                pl.BlockSpec((1, Cp), lambda b: (0, 0)),
            ],
            out_specs=[
                pl.BlockSpec((1, M, Cp), lambda b: (b, 0, 0)),
                pl.BlockSpec((1, M, Cp), lambda b: (b, 0, 0)),
            ],
        ),
        compiler_params=pltpu.CompilerParams(
            dimension_semantics=("parallel",),
            vmem_limit_bytes=32 * 1024 * 1024,
        ),
    )(x_win, wp, bp, wg, bg)

    # zero-pad ragged query / key dims up to the tile grid (keys also masked in-kernel)
    if N_pad != N:
        x_flat = jnp.pad(x_flat, ((0, 0), (0, N_pad - N), (0, 0)))
    if M_pad != M:
        phi = jnp.pad(phi, ((0, 0), (0, M_pad - M), (0, 0)))
        g = jnp.pad(g, ((0, 0), (0, M_pad - M), (0, 0)))

    attn_kernel = _make_attn_kernel(M, TILE_M, M_pad)

    # ---- kernel 2: online-softmax attention + output projection + residual --------------
    z = pl.pallas_call(
        attn_kernel,
        out_shape=jax.ShapeDtypeStruct((B, N_pad, C), jnp.float32),
        grid_spec=pltpu.PrefetchScalarGridSpec(
            num_scalar_prefetch=0,
            grid=(B, N_pad // TILE_N, M_pad // TILE_M),
            in_specs=[
                pl.BlockSpec((1, TILE_N, C), lambda b, q, m: (b, q, 0)),
                pl.BlockSpec((1, TILE_M, Cp), lambda b, q, m: (b, m, 0)),
                pl.BlockSpec((1, TILE_M, Cp), lambda b, q, m: (b, m, 0)),
                pl.BlockSpec((C, Cp), lambda b, q, m: (0, 0)),
                pl.BlockSpec((1, Cp), lambda b, q, m: (0, 0)),
                pl.BlockSpec((Cp, C), lambda b, q, m: (0, 0)),
                pl.BlockSpec((1, C), lambda b, q, m: (0, 0)),
            ],
            out_specs=pl.BlockSpec((1, TILE_N, C), lambda b, q, m: (b, q, 0)),
            scratch_shapes=[
                pltpu.VMEM((TILE_N, Cp), jnp.bfloat16),   # cached theta (per query tile)
                pltpu.VMEM((TILE_N, 1), jnp.float32),     # running max
                pltpu.VMEM((TILE_N, 1), jnp.float32),     # running denominator
                pltpu.VMEM((TILE_N, Cp), jnp.float32),    # running numerator
            ],
        ),
        compiler_params=pltpu.CompilerParams(
            dimension_semantics=("parallel", "parallel", "arbitrary"),
            vmem_limit_bytes=32 * 1024 * 1024,
        ),
    )(x_flat, phi, g, wt, bt, wo, bo)

    if N_pad != N:
        z = z[:, :N, :]
    return jnp.transpose(z.reshape(B, H, W, C), (0, 3, 1, 2))


# ---------------------------------------------------------------------------
# Pure-JAX f32 reference (correctness check only; unfused BN form)
# ---------------------------------------------------------------------------
def _maxpool2x2_flat(v_flat, H, W):
    B, _, Cp = v_flat.shape
    v = v_flat.reshape(B, H // 2, 2, W // 2, 2, Cp)
    v = v.max(axis=(2, 4))
    return v.reshape(B, (H // 2) * (W // 2), Cp)


def reference_forward(x_nchw, params):
    B, C, H, W = x_nchw.shape
    xf = jnp.transpose(x_nchw, (0, 2, 3, 1)).reshape(B, H * W, C)
    theta = xf @ params["w_theta"] + params["b_theta"]
    phi = _maxpool2x2_flat(xf @ params["w_phi"] + params["b_phi"], H, W)
    g = _maxpool2x2_flat(xf @ params["w_g"] + params["b_g"], H, W)
    f = jnp.einsum("bnc,bmc->bnm", theta, phi)
    p = jax.nn.softmax(f, axis=-1)
    y = jnp.einsum("bnm,bmc->bnc", p, g)
    eps = 1e-5
    wy = y @ params["w_W"] + params["b_W"]
    wy = wy * (params["bn_gamma"].reshape(1, 1, C) / jnp.sqrt(1.0 + eps)) + \
        params["bn_beta"].reshape(1, 1, C)
    z = wy + xf
    return jnp.transpose(z.reshape(B, H, W, C), (0, 3, 1, 2))


# ---------------------------------------------------------------------------
# Deterministic synthetic parameters (NOT a checkpoint load).
# NB: the real module zero-inits the final BN gamma/beta (so z == x at init);
#     small non-zero values are used so the kernel path is actually exercised.
# ---------------------------------------------------------------------------
def init_params(key, C):
    Cp = max(C // 2, 1)
    ks = jax.random.split(key, 10)

    def w(k, cin, cout):
        return jax.random.normal(k, (cin, cout), jnp.float32) * 0.1

    def b(k, cout):
        return jax.random.normal(k, (1, cout), jnp.float32) * 0.1

    return dict(
        w_theta=w(ks[0], C, Cp), b_theta=b(ks[1], Cp),
        w_phi=w(ks[2], C, Cp), b_phi=b(ks[3], Cp),
        w_g=w(ks[4], C, Cp), b_g=b(ks[5], Cp),
        w_W=w(ks[6], Cp, C), b_W=b(ks[7], C),
        bn_gamma=jax.random.normal(ks[8], (C,), jnp.float32) * 0.1,
        bn_beta=jax.random.normal(ks[9], (C,), jnp.float32) * 0.1,
    )


if __name__ == "__main__":
    key = jax.random.PRNGKey(0)
    kx, kp = jax.random.split(key)

    B, C, H, W = 2, 4, 16, 16            # in_dim = 4 -> inter_channels = 2
    x = jax.random.normal(kx, (B, C, H, W), jnp.float32)
    params = init_params(kp, C)

    fwd = jax.jit(non_local_block_forward)
    out = jax.block_until_ready(fwd(x, params))

    ref = reference_forward(x, params)
    assert out.shape == (B, C, H, W)
    # tolerance accounts for bf16 MXU operands and the approximate (EUP) reciprocal
    assert jnp.allclose(out, ref, atol=2e-2, rtol=2e-2), "mismatch vs reference"

    print("KERNEL_OK")
</pallas_src>

<mosaic_0001>
module attributes {stable_mosaic.version = 11 : i64} {
  func.func @kernel(%arg0: i32, %arg1: i32, %arg2: i32, %arg3: memref<1x256x4xf32, #tpu.memory_space<vmem>>, %arg4: memref<1x64x2xbf16, #tpu.memory_space<vmem>>, %arg5: memref<1x64x2xbf16, #tpu.memory_space<vmem>>, %arg6: memref<4x2xbf16, #tpu.memory_space<vmem>>, %arg7: memref<1x2xf32, #tpu.memory_space<vmem>>, %arg8: memref<2x4xbf16, #tpu.memory_space<vmem>>, %arg9: memref<1x4xf32, #tpu.memory_space<vmem>>, %arg10: memref<1x256x4xf32, #tpu.memory_space<vmem>>, %arg11: memref<256x2xbf16, #tpu.memory_space<vmem>>, %arg12: memref<256x1xf32, #tpu.memory_space<vmem>>, %arg13: memref<256x1xf32, #tpu.memory_space<vmem>>, %arg14: memref<256x2xf32, #tpu.memory_space<vmem>>) attributes {dimension_semantics = [#tpu.dimension_semantics<parallel>, #tpu.dimension_semantics<parallel>, #tpu.dimension_semantics<arbitrary>], iteration_bounds = array<i64: 2, 1, 1>, scalar_prefetch = 0 : i64, scratch_operands = 4 : i64, tpu.core_type = #tpu.core_type<tc>, window_params = [{transform_indices = @transform_0, window_bounds = array<i64: 1, 256, 4>}, {transform_indices = @transform_1, window_bounds = array<i64: 1, 64, 2>}, {transform_indices = @transform_2, window_bounds = array<i64: 1, 64, 2>}, {pipeline_mode = #tpu.pipeline_mode<synchronous>, transform_indices = @transform_3, window_bounds = array<i64: 4, 2>}, {pipeline_mode = #tpu.pipeline_mode<synchronous>, transform_indices = @transform_4, window_bounds = array<i64: 1, 2>}, {pipeline_mode = #tpu.pipeline_mode<synchronous>, transform_indices = @transform_5, window_bounds = array<i64: 2, 4>}, {pipeline_mode = #tpu.pipeline_mode<synchronous>, transform_indices = @transform_6, window_bounds = array<i64: 1, 4>}, {transform_indices = @transform_7, window_bounds = array<i64: 1, 256, 4>}]} {
    %c0_i32 = arith.constant 0 : i32
    %0 = arith.cmpi eq, %arg2, %c0_i32 : i32
    %1 = arith.extui %0 : i1 to i32
    %c0_i32_0 = arith.constant 0 : i32
    %2 = arith.cmpi ne, %1, %c0_i32_0 : i32
    scf.if %2 {
      %cst_27 = arith.constant 0xFF800000 : f32
      %36 = vector.broadcast %cst_27 : f32 to vector<256x1xf32>
      %c0_28 = arith.constant 0 : index
      %c0_29 = arith.constant 0 : index
      %37 = vector.load %arg12[%c0_28, %c0_29] : memref<256x1xf32, #tpu.memory_space<vmem>>, vector<256x1xf32>
      tpu.vector_store %arg12[%c0_28, %c0_29], %36 {strides = array<i32>} : memref<256x1xf32, #tpu.memory_space<vmem>>, vector<256x1xf32>,
      %cst_30 = arith.constant 0.000000e+00 : f32
      %38 = vector.broadcast %cst_30 : f32 to vector<256x1xf32>
      %c0_31 = arith.constant 0 : index
      %c0_32 = arith.constant 0 : index
      %39 = vector.load %arg13[%c0_31, %c0_32] : memref<256x1xf32, #tpu.memory_space<vmem>>, vector<256x1xf32>
      tpu.vector_store %arg13[%c0_31, %c0_32], %38 {strides = array<i32>} : memref<256x1xf32, #tpu.memory_space<vmem>>, vector<256x1xf32>,
      %cst_33 = arith.constant 0.000000e+00 : f32
      %40 = vector.broadcast %cst_33 : f32 to vector<256x2xf32>
      %c0_34 = arith.constant 0 : index
      %c0_35 = arith.constant 0 : index
      %41 = vector.load %arg14[%c0_34, %c0_35] : memref<256x2xf32, #tpu.memory_space<vmem>>, vector<256x2xf32>
      tpu.vector_store %arg14[%c0_34, %c0_35], %40 {strides = array<i32>} : memref<256x2xf32, #tpu.memory_space<vmem>>, vector<256x2xf32>,
      %c0_36 = arith.constant 0 : index
      %c0_37 = arith.constant 0 : index
      %c0_38 = arith.constant 0 : index
      %42 = vector.load %arg3[%c0_36, %c0_37, %c0_38] : memref<1x256x4xf32, #tpu.memory_space<vmem>>, vector<1x256x4xf32>
      %43 = vector.shape_cast %42 : vector<1x256x4xf32> to vector<256x4xf32>
      %44 = arith.truncf %43 : vector<256x4xf32> to vector<256x4xbf16>
      %c0_39 = arith.constant 0 : index
      %c0_40 = arith.constant 0 : index
      %45 = vector.load %arg6[%c0_39, %c0_40] : memref<4x2xbf16, #tpu.memory_space<vmem>>, vector<4x2xbf16>
      %cst_41 = arith.constant dense<0.000000e+00> : vector<256x2xf32>
      %46 = tpu.matmul %44, %45, %cst_41 {dimension_numbers = #tpu.dot_dimension_numbers<[1], [0], [0], [1], [0, 0, 1, 1], [], []>} : vector<256x4xbf16>, vector<4x2xbf16>, vector<256x2xf32> -> vector<256x2xf32>
      %c0_42 = arith.constant 0 : index
      %c0_43 = arith.constant 0 : index
      %47 = vector.load %arg7[%c0_42, %c0_43] : memref<1x2xf32, #tpu.memory_space<vmem>>, vector<1x2xf32>
      %48 = vector.broadcast %47 : vector<1x2xf32> to vector<256x2xf32>
      %49 = arith.addf %46, %48 : vector<256x2xf32>
      %50 = arith.truncf %49 : vector<256x2xf32> to vector<256x2xbf16>
      %c0_44 = arith.constant 0 : index
      %c0_45 = arith.constant 0 : index
      %51 = vector.load %arg11[%c0_44, %c0_45] : memref<256x2xbf16, #tpu.memory_space<vmem>>, vector<256x2xbf16>
      tpu.vector_store %arg11[%c0_44, %c0_45], %50 {strides = array<i32>} : memref<256x2xbf16, #tpu.memory_space<vmem>>, vector<256x2xbf16>,
    } else {
    }
    %c0 = arith.constant 0 : index
    %c0_1 = arith.constant 0 : index
    %3 = vector.load %arg11[%c0, %c0_1] : memref<256x2xbf16, #tpu.memory_space<vmem>>, vector<256x2xbf16>
    %c0_2 = arith.constant 0 : index
    %c0_3 = arith.constant 0 : index
    %c0_4 = arith.constant 0 : index
    %4 = vector.load %arg4[%c0_2, %c0_3, %c0_4] : memref<1x64x2xbf16, #tpu.memory_space<vmem>>, vector<1x64x2xbf16>
    %5 = vector.shape_cast %4 : vector<1x64x2xbf16> to vector<64x2xbf16>
    %cst = arith.constant dense<0.000000e+00> : vector<256x64xf32>
    %6 = tpu.matmul %3, %5, %cst {dimension_numbers = #tpu.dot_dimension_numbers<[1], [1], [0], [0], [0, 0, 1, 0], [], []>} : vector<256x2xbf16>, vector<64x2xbf16>, vector<256x64xf32> -> vector<256x64xf32>
    %c0_5 = arith.constant 0 : index
    %c0_6 = arith.constant 0 : index
    %7 = vector.load %arg12[%c0_5, %c0_6] : memref<256x1xf32, #tpu.memory_space<vmem>>, vector<256x1xf32>
    %cst_7 = arith.constant dense<0xFF800000> : vector<256xf32>
    %8 = vector.multi_reduction <maximumf>, %6, %cst_7 [1] : vector<256x64xf32> to vector<256xf32>
    %9 = vector.shape_cast %8 : vector<256xf32> to vector<256x1xf32>
    %10 = arith.maximumf %7, %9 : vector<256x1xf32>
    %c0_8 = arith.constant 0 : index
    %c0_9 = arith.constant 0 : index
    %11 = vector.load %arg12[%c0_8, %c0_9] : memref<256x1xf32, #tpu.memory_space<vmem>>, vector<256x1xf32>
    %12 = arith.subf %11, %10 : vector<256x1xf32>
    %13 = math.exp %12 : vector<256x1xf32>
    %14 = vector.broadcast %10 : vector<256x1xf32> to vector<256x64xf32>
    %15 = arith.subf %6, %14 : vector<256x64xf32>
    %16 = math.exp %15 : vector<256x64xf32>
    %c0_10 = arith.constant 0 : index
    %c0_11 = arith.constant 0 : index
    %17 = vector.load %arg13[%c0_10, %c0_11] : memref<256x1xf32, #tpu.memory_space<vmem>>, vector<256x1xf32>
    %18 = arith.mulf %13, %17 : vector<256x1xf32>
    %cst_12 = arith.constant dense<0.000000e+00> : vector<256xf32>
    %19 = vector.multi_reduction <add>, %16, %cst_12 [1] : vector<256x64xf32> to vector<256xf32>
    %20 = vector.shape_cast %19 : vector<256xf32> to vector<256x1xf32>
    %21 = arith.addf %18, %20 : vector<256x1xf32>
    %c0_13 = arith.constant 0 : index
    %c0_14 = arith.constant 0 : index
    %22 = vector.load %arg13[%c0_13, %c0_14] : memref<256x1xf32, #tpu.memory_space<vmem>>, vector<256x1xf32>
    tpu.vector_store %arg13[%c0_13, %c0_14], %21 {strides = array<i32>} : memref<256x1xf32, #tpu.memory_space<vmem>>, vector<256x1xf32>,
    %c0_15 = arith.constant 0 : index
    %c0_16 = arith.constant 0 : index
    %23 = vector.load %arg14[%c0_15, %c0_16] : memref<256x2xf32, #tpu.memory_space<vmem>>, vector<256x2xf32>
    %24 = vector.broadcast %13 : vector<256x1xf32> to vector<256x2xf32>
    %25 = arith.mulf %24, %23 : vector<256x2xf32>
    %26 = arith.truncf %16 : vector<256x64xf32> to vector<256x64xbf16>
    %c0_17 = arith.constant 0 : index
    %c0_18 = arith.constant 0 : index
    %c0_19 = arith.constant 0 : index
    %27 = vector.load %arg5[%c0_17, %c0_18, %c0_19] : memref<1x64x2xbf16, #tpu.memory_space<vmem>>, vector<1x64x2xbf16>
    %28 = vector.shape_cast %27 : vector<1x64x2xbf16> to vector<64x2xbf16>
    %cst_20 = arith.constant dense<0.000000e+00> : vector<256x2xf32>
    %29 = tpu.matmul %26, %28, %cst_20 {dimension_numbers = #tpu.dot_dimension_numbers<[1], [0], [0], [1], [0, 0, 1, 1], [], []>} : vector<256x64xbf16>, vector<64x2xbf16>, vector<256x2xf32> -> vector<256x2xf32>
    %30 = arith.addf %25, %29 : vector<256x2xf32>
    %c0_21 = arith.constant 0 : index
    %c0_22 = arith.constant 0 : index
    %31 = vector.load %arg14[%c0_21, %c0_22] : memref<256x2xf32, #tpu.memory_space<vmem>>, vector<256x2xf32>
    tpu.vector_store %arg14[%c0_21, %c0_22], %30 {strides = array<i32>} : memref<256x2xf32, #tpu.memory_space<vmem>>, vector<256x2xf32>,
    %c0_23 = arith.constant 0 : index
    %c0_24 = arith.constant 0 : index
    %32 = vector.load %arg12[%c0_23, %c0_24] : memref<256x1xf32, #tpu.memory_space<vmem>>, vector<256x1xf32>
    tpu.vector_store %arg12[%c0_23, %c0_24], %10 {strides = array<i32>} : memref<256x1xf32, #tpu.memory_space<vmem>>, vector<256x1xf32>,
    %c0_i32_25 = arith.constant 0 : i32
    %33 = arith.cmpi eq, %arg2, %c0_i32_25 : i32
    %34 = arith.extui %33 : i1 to i32
    %c0_i32_26 = arith.constant 0 : i32
    %35 = arith.cmpi ne, %34, %c0_i32_26 : i32
    scf.if %35 {
      %c0_27 = arith.constant 0 : index
      %c0_28 = arith.constant 0 : index
      %36 = vector.load %arg14[%c0_27, %c0_28] : memref<256x2xf32, #tpu.memory_space<vmem>>, vector<256x2xf32>
      %c0_29 = arith.constant 0 : index
      %c0_30 = arith.constant 0 : index
      %37 = vector.load %arg13[%c0_29, %c0_30] : memref<256x1xf32, #tpu.memory_space<vmem>>, vector<256x1xf32>
      %38 = tpu.reciprocal %37 {approx = true} : vector<256x1xf32> -> vector<256x1xf32>
      %39 = vector.broadcast %38 : vector<256x1xf32> to vector<256x2xf32>
      %40 = arith.mulf %36, %39 : vector<256x2xf32>
      %41 = arith.truncf %40 : vector<256x2xf32> to vector<256x2xbf16>
      %c0_31 = arith.constant 0 : index
      %c0_32 = arith.constant 0 : index
      %42 = vector.load %arg8[%c0_31, %c0_32] : memref<2x4xbf16, #tpu.memory_space<vmem>>, vector<2x4xbf16>
      %cst_33 = arith.constant dense<0.000000e+00> : vector<256x4xf32>
      %43 = tpu.matmul %41, %42, %cst_33 {dimension_numbers = #tpu.dot_dimension_numbers<[1], [0], [0], [1], [0, 0, 1, 1], [], []>} : vector<256x2xbf16>, vector<2x4xbf16>, vector<256x4xf32> -> vector<256x4xf32>
      %c0_34 = arith.constant 0 : index
      %c0_35 = arith.constant 0 : index
      %44 = vector.load %arg9[%c0_34, %c0_35] : memref<1x4xf32, #tpu.memory_space<vmem>>, vector<1x4xf32>
      %45 = vector.broadcast %44 : vector<1x4xf32> to vector<256x4xf32>
      %46 = arith.addf %43, %45 : vector<256x4xf32>
      %c0_36 = arith.constant 0 : index
      %c0_37 = arith.constant 0 : index
      %c0_38 = arith.constant 0 : index
      %47 = vector.load %arg3[%c0_36, %c0_37, %c0_38] : memref<1x256x4xf32, #tpu.memory_space<vmem>>, vector<1x256x4xf32>
      %48 = vector.shape_cast %47 : vector<1x256x4xf32> to vector<256x4xf32>
      %49 = arith.addf %46, %48 : vector<256x4xf32>
      %c0_39 = arith.constant 0 : index
      %c0_40 = arith.constant 0 : index
      %c0_41 = arith.constant 0 : index
      %50 = vector.load %arg10[%c0_39, %c0_40, %c0_41] : memref<1x256x4xf32, #tpu.memory_space<vmem>>, vector<1x256x4xf32>
      %51 = vector.shape_cast %50 : vector<1x256x4xf32> to vector<256x4xf32>
      %52 = vector.shape_cast %49 : vector<256x4xf32> to vector<1x256x4xf32>
      tpu.vector_store %arg10[%c0_39, %c0_40, %c0_41], %52 {strides = array<i32>} : memref<1x256x4xf32, #tpu.memory_space<vmem>>, vector<1x256x4xf32>,
    } else {
    }
    return
  }
  func.func @transform_0(%arg0: i32, %arg1: i32, %arg2: i32) -> (i32, i32, i32) {
    %c0_i32 = arith.constant 0 : i32
    %c0_i32_0 = arith.constant 0 : i32
    return %arg0, %arg1, %c0_i32 : i32, i32, i32
  }
  func.func @transform_1(%arg0: i32, %arg1: i32, %arg2: i32) -> (i32, i32, i32) {
    %c0_i32 = arith.constant 0 : i32
    %c0_i32_0 = arith.constant 0 : i32
    return %arg0, %arg2, %c0_i32 : i32, i32, i32
  }
  func.func @transform_2(%arg0: i32, %arg1: i32, %arg2: i32) -> (i32, i32, i32) {
    %c0_i32 = arith.constant 0 : i32
    %c0_i32_0 = arith.constant 0 : i32
    return %arg0, %arg2, %c0_i32 : i32, i32, i32
  }
  func.func @transform_3(%arg0: i32, %arg1: i32, %arg2: i32) -> (i32, i32) {
    %c0_i32 = arith.constant 0 : i32
    %c0_i32_0 = arith.constant 0 : i32
    %c0_i32_1 = arith.constant 0 : i32
    return %c0_i32, %c0_i32_0 : i32, i32
  }
  func.func @transform_4(%arg0: i32, %arg1: i32, %arg2: i32) -> (i32, i32) {
    %c0_i32 = arith.constant 0 : i32
    %c0_i32_0 = arith.constant 0 : i32
    %c0_i32_1 = arith.constant 0 : i32
    return %c0_i32, %c0_i32_0 : i32, i32
  }
  func.func @transform_5(%arg0: i32, %arg1: i32, %arg2: i32) -> (i32, i32) {
    %c0_i32 = arith.constant 0 : i32
    %c0_i32_0 = arith.constant 0 : i32
    %c0_i32_1 = arith.constant 0 : i32
    return %c0_i32, %c0_i32_0 : i32, i32
  }
  func.func @transform_6(%arg0: i32, %arg1: i32, %arg2: i32) -> (i32, i32) {
    %c0_i32 = arith.constant 0 : i32
    %c0_i32_0 = arith.constant 0 : i32
    %c0_i32_1 = arith.constant 0 : i32
    return %c0_i32, %c0_i32_0 : i32, i32
  }
  func.func @transform_7(%arg0: i32, %arg1: i32, %arg2: i32) -> (i32, i32, i32) {
    %c0_i32 = arith.constant 0 : i32
    %c0_i32_0 = arith.constant 0 : i32
    return %arg0, %arg1, %c0_i32 : i32, i32, i32
  }
}

module attributes {stable_mosaic.version = 11 : i64} {
  func.func @_kv_build_kernel(%arg0: i32, %arg1: memref<1x256x4xbf16, #tpu.memory_space<vmem>>, %arg2: memref<4x2xbf16, #tpu.memory_space<vmem>>, %arg3: memref<1x2xf32, #tpu.memory_space<vmem>>, %arg4: memref<4x2xbf16, #tpu.memory_space<vmem>>, %arg5: memref<1x2xf32, #tpu.memory_space<vmem>>, %arg6: memref<1x64x2xbf16, #tpu.memory_space<vmem>>, %arg7: memref<1x64x2xbf16, #tpu.memory_space<vmem>>) attributes {dimension_semantics = [#tpu.dimension_semantics<parallel>], iteration_bounds = array<i64: 2>, scalar_prefetch = 0 : i64, scratch_operands = 0 : i64, tpu.core_type = #tpu.core_type<tc>, window_params = [{transform_indices = @transform_0, window_bounds = array<i64: 1, 256, 4>}, {pipeline_mode = #tpu.pipeline_mode<synchronous>, transform_indices = @transform_1, window_bounds = array<i64: 4, 2>}, {pipeline_mode = #tpu.pipeline_mode<synchronous>, transform_indices = @transform_2, window_bounds = array<i64: 1, 2>}, {pipeline_mode = #tpu.pipeline_mode<synchronous>, transform_indices = @transform_3, window_bounds = array<i64: 4, 2>}, {pipeline_mode = #tpu.pipeline_mode<synchronous>, transform_indices = @transform_4, window_bounds = array<i64: 1, 2>}, {transform_indices = @transform_5, window_bounds = array<i64: 1, 64, 2>}, {transform_indices = @transform_6, window_bounds = array<i64: 1, 64, 2>}]} {
    %c0 = arith.constant 0 : index
    %c0_0 = arith.constant 0 : index
    %c0_1 = arith.constant 0 : index
    %0 = vector.load %arg1[%c0, %c0_0, %c0_1] : memref<1x256x4xbf16, #tpu.memory_space<vmem>>, vector<1x256x4xbf16>
    %1 = vector.shape_cast %0 : vector<1x256x4xbf16> to vector<256x4xbf16>
    %c0_2 = arith.constant 0 : index
    %c0_3 = arith.constant 0 : index
    %2 = vector.load %arg2[%c0_2, %c0_3] : memref<4x2xbf16, #tpu.memory_space<vmem>>, vector<4x2xbf16>
    %cst = arith.constant dense<0.000000e+00> : vector<256x2xf32>
    %3 = tpu.matmul %1, %2, %cst {dimension_numbers = #tpu.dot_dimension_numbers<[1], [0], [0], [1], [0, 0, 1, 1], [], []>} : vector<256x4xbf16>, vector<4x2xbf16>, vector<256x2xf32> -> vector<256x2xf32>
    %4 = vector.shape_cast %3 : vector<256x2xf32> to vector<4x64x2xf32>
    %cst_4 = arith.constant dense<0xFF800000> : vector<64x2xf32>
    %5 = vector.multi_reduction <maximumf>, %4, %cst_4 [0] : vector<4x64x2xf32> to vector<64x2xf32>
    %c0_5 = arith.constant 0 : index
    %c0_6 = arith.constant 0 : index
    %6 = vector.load %arg3[%c0_5, %c0_6] : memref<1x2xf32, #tpu.memory_space<vmem>>, vector<1x2xf32>
    %7 = vector.broadcast %6 : vector<1x2xf32> to vector<64x2xf32>
    %8 = arith.addf %5, %7 : vector<64x2xf32>
    %9 = arith.truncf %8 : vector<64x2xf32> to vector<64x2xbf16>
    %c0_7 = arith.constant 0 : index
    %c0_8 = arith.constant 0 : index
    %c0_9 = arith.constant 0 : index
    %10 = vector.load %arg6[%c0_7, %c0_8, %c0_9] : memref<1x64x2xbf16, #tpu.memory_space<vmem>>, vector<1x64x2xbf16>
    %11 = vector.shape_cast %10 : vector<1x64x2xbf16> to vector<64x2xbf16>
    %12 = vector.shape_cast %9 : vector<64x2xbf16> to vector<1x64x2xbf16>
    tpu.vector_store %arg6[%c0_7, %c0_8, %c0_9], %12 {strides = array<i32>} : memref<1x64x2xbf16, #tpu.memory_space<vmem>>, vector<1x64x2xbf16>,
    %c0_10 = arith.constant 0 : index
    %c0_11 = arith.constant 0 : index
    %13 = vector.load %arg4[%c0_10, %c0_11] : memref<4x2xbf16, #tpu.memory_space<vmem>>, vector<4x2xbf16>
    %cst_12 = arith.constant dense<0.000000e+00> : vector<256x2xf32>
    %14 = tpu.matmul %1, %13, %cst_12 {dimension_numbers = #tpu.dot_dimension_numbers<[1], [0], [0], [1], [0, 0, 1, 1], [], []>} : vector<256x4xbf16>, vector<4x2xbf16>, vector<256x2xf32> -> vector<256x2xf32>
    %15 = vector.shape_cast %14 : vector<256x2xf32> to vector<4x64x2xf32>
    %cst_13 = arith.constant dense<0xFF800000> : vector<64x2xf32>
    %16 = vector.multi_reduction <maximumf>, %15, %cst_13 [0] : vector<4x64x2xf32> to vector<64x2xf32>
    %c0_14 = arith.constant 0 : index
    %c0_15 = arith.constant 0 : index
    %17 = vector.load %arg5[%c0_14, %c0_15] : memref<1x2xf32, #tpu.memory_space<vmem>>, vector<1x2xf32>
    %18 = vector.broadcast %17 : vector<1x2xf32> to vector<64x2xf32>
    %19 = arith.addf %16, %18 : vector<64x2xf32>
    %20 = arith.truncf %19 : vector<64x2xf32> to vector<64x2xbf16>
    %c0_16 = arith.constant 0 : index
    %c0_17 = arith.constant 0 : index
    %c0_18 = arith.constant 0 : index
    %21 = vector.load %arg7[%c0_16, %c0_17, %c0_18] : memref<1x64x2xbf16, #tpu.memory_space<vmem>>, vector<1x64x2xbf16>
    %22 = vector.shape_cast %21 : vector<1x64x2xbf16> to vector<64x2xbf16>
    %23 = vector.shape_cast %20 : vector<64x2xbf16> to vector<1x64x2xbf16>
    tpu.vector_store %arg7[%c0_16, %c0_17, %c0_18], %23 {strides = array<i32>} : memref<1x64x2xbf16, #tpu.memory_space<vmem>>, vector<1x64x2xbf16>,
    return
  }
  func.func @transform_0(%arg0: i32) -> (i32, i32, i32) {
    %c0_i32 = arith.constant 0 : i32
    %c0_i32_0 = arith.constant 0 : i32
    %c0_i32_1 = arith.constant 0 : i32
    return %arg0, %c0_i32, %c0_i32_0 : i32, i32, i32
  }
  func.func @transform_1(%arg0: i32) -> (i32, i32) {
    %c0_i32 = arith.constant 0 : i32
    %c0_i32_0 = arith.constant 0 : i32
    %c0_i32_1 = arith.constant 0 : i32
    return %c0_i32, %c0_i32_0 : i32, i32
  }
  func.func @transform_2(%arg0: i32) -> (i32, i32) {
    %c0_i32 = arith.constant 0 : i32
    %c0_i32_0 = arith.constant 0 : i32
    %c0_i32_1 = arith.constant 0 : i32
    return %c0_i32, %c0_i32_0 : i32, i32
  }
  func.func @transform_3(%arg0: i32) -> (i32, i32) {
    %c0_i32 = arith.constant 0 : i32
    %c0_i32_0 = arith.constant 0 : i32
    %c0_i32_1 = arith.constant 0 : i32
    return %c0_i32, %c0_i32_0 : i32, i32
  }
  func.func @transform_4(%arg0: i32) -> (i32, i32) {
    %c0_i32 = arith.constant 0 : i32
    %c0_i32_0 = arith.constant 0 : i32
    %c0_i32_1 = arith.constant 0 : i32
    return %c0_i32, %c0_i32_0 : i32, i32
  }
  func.func @transform_5(%arg0: i32) -> (i32, i32, i32) {
    %c0_i32 = arith.constant 0 : i32
    %c0_i32_0 = arith.constant 0 : i32
    %c0_i32_1 = arith.constant 0 : i32
    return %arg0, %c0_i32, %c0_i32_0 : i32, i32, i32
  }
  func.func @transform_6(%arg0: i32) -> (i32, i32, i32) {
    %c0_i32 = arith.constant 0 : i32
    %c0_i32_0 = arith.constant 0 : i32
    %c0_i32_1 = arith.constant 0 : i32
    return %arg0, %c0_i32, %c0_i32_0 : i32, i32, i32
  }
}

</mosaic_0001>

<llo_original>
// kernel: non_local_block_forward.2
$region0: #{non_local_block_forward.2}
  #allocation0 [shape = 'u32[]', space=smem, size = 0x4, offset = 0x4, fixed_abs, tag = 'smem constant byte address 0x4 - core index']
  #allocation1 [shape = 'u32[144,128]{1,0:T(1,128)}', space=vmem, size = 0x12000, scoped, tag = 'internal scratch']
  %s0 = inlined_call_operand.vmem [shape: bf16[2,256,4], index: 0, kind: input, shape index: {}]
  %s1 = inlined_call_operand.vmem [shape: bf16[4,2], index: 1, kind: input, shape index: {}]
  %s2 = inlined_call_operand.vmem [shape: f32[1,2], index: 2, kind: input, shape index: {}]
  %s3 = inlined_call_operand.vmem [shape: bf16[4,2], index: 3, kind: input, shape index: {}]
  %s4 = inlined_call_operand.vmem [shape: f32[1,2], index: 4, kind: input, shape index: {}]
  %s5 = inlined_call_operand.vmem [shape: bf16[2,64,2], index: 5, kind: output, shape index: {0}]
  %s6 = inlined_call_operand.vmem [shape: bf16[2,64,2], index: 6, kind: output, shape index: {1}]
  %7 = xla_tuple %s5, %s6
  %s8 = sld [smem:[#allocation0]]
  $region61: #{non_local_block_forward.2} parent=0
    _
  %s10 = ssub.s32 1, %s8
  %s11 = scalar_select 0, %s10, %s8
  loop: start=0, step=1, limit=4
  $region2: #{non_local_block_forward.2} parent=0 // loop_pre_header
    _
  $region3: #{non_local_block_forward.2} parent=0 // loop_header
    %s13 = sphi 0, %s17
    %p14 = scmp.ge.s32.totalorder %s13, 4
    %s23 = sphi 0, %s25
    %s26 = sphi 0, %s23
    %s27 = sphi 0, %s26
    %s43 = sphi 0, %s27
    %s47 = sphi 0, %s47
    %s49 = sphi 0, %s47
    %s50 = sphi 0, %s49
    %s64 = sphi 0, %s50
    %s68 = sphi 0, %s68
    %s70 = sphi 0, %s68
    %s71 = sphi 0, %s70
    %s85 = sphi 0, %s71
    %s89 = sphi 0, %s89
    %s91 = sphi 0, %s89
    %s92 = sphi 0, %s91
    %s106 = sphi 0, %s92
    %s110 = sphi 0, %s110
    %s112 = sphi 0, %s110
    %s113 = sphi 0, %s112
    %s127 = sphi 0, %s113
    %s133 = sphi 0, %s135
    %s136 = sphi 0, %s133
    %s137 = sphi 0, %s136
    %s153 = sphi 0, %s137
    %s159 = sphi 0, %s161
    %s162 = sphi 0, %s159
    %s163 = sphi 0, %s162
    %s179 = sphi 0, %s163
  $region4: #{non_local_block_forward.2} parent=0 // loop_header_branch
    %16 = sbr.rel (%p14) target = $region8
  $region5: #{non_local_block_forward.2} parent=0 // loop_body
    %s18 = ssub.s32 %s13, 1
    %s19 = ssub.s32 %s13, 2
    %s20 = sadd.s32 %s13, 1
    %s21 = ssub.s32 %s13, %s20
    %p22 = scmp.eq.s32.totalorder %s21, 0
    %s24 = sadd.s32 %s23, 1
    %s25 = scalar_select %p22, %s23, %s24
    %p28 = pneg %p22
    %p29 = scmp.eq.s32.totalorder %s13, 1
    %p30 = por %p28, %p29
    %p31 = scmp.ne.s32.totalorder %s23, %s26
    %p32 = scmp.eq.s32.totalorder %s13, 0
    %p33 = por %p31, %p32
    %p34 = scmp.ne.s32.totalorder %s23, %s26
    %p35 = scmp.eq.s32.totalorder %s18, 1
    %p36 = por %p34, %p35
    %p37 = scmp.ne.s32.totalorder %s26, %s27
    %p38 = scmp.eq.s32.totalorder %s18, 0
    %p39 = por %p37, %p38
    %p40 = scmp.ne.s32.totalorder %s26, %s27
    %p41 = scmp.eq.s32.totalorder %s19, 1
    %p42 = por %p40, %p41
    %p44 = scmp.ne.s32.totalorder %s27, %s43
    %p45 = scmp.eq.s32.totalorder %s19, 0
    %p46 = por %p44, %p45
    %s48 = sadd.s32 %s47, 1
    %p51 = scmp.eq.s32.totalorder %s13, 1
    %p52 = scmp.ne.s32.totalorder %s47, %s49
    %p53 = scmp.eq.s32.totalorder %s13, 0
    %p54 = por %p52, %p53
    %p55 = scmp.ne.s32.totalorder %s47, %s49
    %p56 = scmp.eq.s32.totalorder %s18, 1
    %p57 = por %p55, %p56
    %p58 = scmp.ne.s32.totalorder %s49, %s50
    %p59 = scmp.eq.s32.totalorder %s18, 0
    %p60 = por %p58, %p59
    %p61 = scmp.ne.s32.totalorder %s49, %s50
    %p62 = scmp.eq.s32.totalorder %s19, 1
    %p63 = por %p61, %p62
    %p65 = scmp.ne.s32.totalorder %s50, %s64
    %p66 = scmp.eq.s32.totalorder %s19, 0
    %p67 = por %p65, %p66
    %s69 = sadd.s32 %s68, 1
    %p72 = scmp.eq.s32.totalorder %s13, 1
    %p73 = scmp.ne.s32.totalorder %s68, %s70
    %p74 = scmp.eq.s32.totalorder %s13, 0
    %p75 = por %p73, %p74
    %p76 = scmp.ne.s32.totalorder %s68, %s70
    %p77 = scmp.eq.s32.totalorder %s18, 1
    %p78 = por %p76, %p77
    %p79 = scmp.ne.s32.totalorder %s70, %s71
    %p80 = scmp.eq.s32.totalorder %s18, 0
    %p81 = por %p79, %p80
    %p82 = scmp.ne.s32.totalorder %s70, %s71
    %p83 = scmp.eq.s32.totalorder %s19, 1
    %p84 = por %p82, %p83
    %p86 = scmp.ne.s32.totalorder %s71, %s85
    %p87 = scmp.eq.s32.totalorder %s19, 0
    %p88 = por %p86, %p87
    %s90 = sadd.s32 %s89, 1
    %p93 = scmp.eq.s32.totalorder %s13, 1
    %p94 = scmp.ne.s32.totalorder %s89, %s91
    %p95 = scmp.eq.s32.totalorder %s13, 0
    %p96 = por %p94, %p95
    %p97 = scmp.ne.s32.totalorder %s89, %s91
    %p98 = scmp.eq.s32.totalorder %s18, 1
    %p99 = por %p97, %p98
    %p100 = scmp.ne.s32.totalorder %s91, %s92
    %p101 = scmp.eq.s32.totalorder %s18, 0
    %p102 = por %p100, %p101
    %p103 = scmp.ne.s32.totalorder %s91, %s92
    %p104 = scmp.eq.s32.totalorder %s19, 1
    %p105 = por %p103, %p104
    %p107 = scmp.ne.s32.totalorder %s92, %s106
    %p108 = scmp.eq.s32.totalorder %s19, 0
    %p109 = por %p107, %p108
    %s111 = sadd.s32 %s110, 1
    %p114 = scmp.eq.s32.totalorder %s13, 1
    %p115 = scmp.ne.s32.totalorder %s110, %s112
    %p116 = scmp.eq.s32.totalorder %s13, 0
    %p117 = por %p115, %p116
    %p118 = scmp.ne.s32.totalorder %s110, %s112
    %p119 = scmp.eq.s32.totalorder %s18, 1
    %p120 = por %p118, %p119
    %p121 = scmp.ne.s32.totalorder %s112, %s113
    %p122 = scmp.eq.s32.totalorder %s18, 0
    %p123 = por %p121, %p122
    %p124 = scmp.ne.s32.totalorder %s112, %s113
    %p125 = scmp.eq.s32.totalorder %s19, 1
    %p126 = por %p124, %p125
    %p128 = scmp.ne.s32.totalorder %s113, %s127
    %p129 = scmp.eq.s32.totalorder %s19, 0
    %p130 = por %p128, %p129
    %s131 = ssub.s32 %s13, %s20
    %p132 = scmp.eq.s32.totalorder %s131, 0
    %s134 = sadd.s32 %s133, 1
    %s135 = scalar_select %p132, %s133, %s134
    %p138 = pneg %p132
    %p139 = scmp.eq.s32.totalorder %s13, 1
    %p140 = por %p138, %p139
    %p141 = scmp.ne.s32.totalorder %s133, %s136
    %p142 = scmp.eq.s32.totalorder %s13, 0
    %p143 = por %p141, %p142
    %p144 = scmp.ne.s32.totalorder %s133, %s136
    %p145 = scmp.eq.s32.totalorder %s18, 1
    %p146 = por %p144, %p145
    %p147 = scmp.ne.s32.totalorder %s136, %s137
    %p148 = scmp.eq.s32.totalorder %s18, 0
    %p149 = por %p147, %p148
    %p150 = scmp.ne.s32.totalorder %s136, %s137
    %p151 = scmp.eq.s32.totalorder %s19, 1
    %p152 = por %p150, %p151
    %p154 = scmp.ne.s32.totalorder %s137, %s153
    %p155 = scmp.eq.s32.totalorder %s19, 0
    %p156 = por %p154, %p155
    %s157 = ssub.s32 %s13, %s20
    %p158 = scmp.eq.s32.totalorder %s157, 0
    %s160 = sadd.s32 %s159, 1
    %s161 = scalar_select %p158, %s159, %s160
    %p164 = pneg %p158
    %p165 = scmp.eq.s32.totalorder %s13, 1
    %p166 = por %p164, %p165
    %p167 = scmp.ne.s32.totalorder %s159, %s162
    %p168 = scmp.eq.s32.totalorder %s13, 0
    %p169 = por %p167, %p168
    %p170 = scmp.ne.s32.totalorder %s159, %s162
    %p171 = scmp.eq.s32.totalorder %s18, 1
    %p172 = por %p170, %p171
    %p173 = scmp.ne.s32.totalorder %s162, %s163
    %p174 = scmp.eq.s32.totalorder %s18, 0
    %p175 = por %p173, %p174
    %p176 = scmp.ne.s32.totalorder %s162, %s163
    %p177 = scmp.eq.s32.totalorder %s19, 1
    %p178 = por %p176, %p177
    %p180 = scmp.ne.s32.totalorder %s163, %s179
    %p181 = scmp.eq.s32.totalorder %s19, 0
    %p182 = por %p180, %p181
    %p183 = scmp.le.s32.totalorder 1, %s13
    %p184 = scmp.lt.s32.totalorder %s13, 3
    %p185 = pnand %p183, %p184
    %p186 = pneg %p185
    // Predicated region
    $region9: #{non_local_block_forward.2} parent=5 // pred_check
      _
    $region10: #{non_local_block_forward.2} parent=5 // pred_check_branch
      %188 = sbr.rel (%p185) target = $region12
    $region11: #{non_local_block_forward.2} parent=5 // pred_region
      %s189 = ssub.s32 %s13, 1
      // Predicated region
      $region13: #{non_local_block_forward.2} parent=11 // pred_check
        %p190 = pneg %p60
      $region14: #{non_local_block_forward.2} parent=11 // pred_check_branch
        %192 = sbr.rel (%p190) target = $region16
      $region15: #{non_local_block_forward.2} parent=11 // pred_region
        _
      $region16: #{non_local_block_forward.2} parent=11 // pred_fallthru
        _
      // Predicated region
      $region17: #{non_local_block_forward.2} parent=11 // pred_check
        %p193 = pneg %p81
      $region18: #{non_local_block_forward.2} parent=11 // pred_check_branch
        %195 = sbr.rel (%p193) target = $region20
      $region19: #{non_local_block_forward.2} parent=11 // pred_region
        _
      $region20: #{non_local_block_forward.2} parent=11 // pred_fallthru
        _
      // Predicated region
      $region21: #{non_local_block_forward.2} parent=11 // pred_check
        %p196 = pneg %p102
      $region22: #{non_local_block_forward.2} parent=11 // pred_check_branch
        %198 = sbr.rel (%p196) target = $region24
      $region23: #{non_local_block_forward.2} parent=11 // pred_region
        _
      $region24: #{non_local_block_forward.2} parent=11 // pred_fallthru
        _
      // Predicated region
      $region25: #{non_local_block_forward.2} parent=11 // pred_check
        %p199 = pneg %p123
      $region26: #{non_local_block_forward.2} parent=11 // pred_check_branch
        %201 = sbr.rel (%p199) target = $region28
      $region27: #{non_local_block_forward.2} parent=11 // pred_region
        _
      $region28: #{non_local_block_forward.2} parent=11 // pred_fallthru
        _
    $region12: #{non_local_block_forward.2} parent=5 // pred_fallthru
      _
    %p202 = scmp.lt.s32.totalorder %s13, 2
    // Predicated region
    $region29: #{non_local_block_forward.2} parent=5 // pred_check
      %p203 = pneg %p202
    $region30: #{non_local_block_forward.2} parent=5 // pred_check_branch
      %205 = sbr.rel (%p203) target = $region32
    $region31: #{non_local_block_forward.2} parent=5 // pred_region
      // Predicated region
      $region33: #{non_local_block_forward.2} parent=31 // pred_check
        %p206 = pneg %p33
      $region34: #{non_local_block_forward.2} parent=31 // pred_check_branch
        %208 = sbr.rel (%p206) target = $region36
      $region35: #{non_local_block_forward.2} parent=31 // pred_region
        %p209 = scmp.lt.s32.totalorder %s13, 1
        %s210 = scalar_select %p209, %s13, 1
        %s211 = smul.addr %s210, 32
        %s212 = smul.addr %s211, 4
        %s213 = scalar_lea.vmem %s0, %s212
      $region36: #{non_local_block_forward.2} parent=31 // pred_fallthru
        _
    $region32: #{non_local_block_forward.2} parent=5 // pred_fallthru
      _
    %p214 = scmp.le.s32.totalorder 1, %s13
    %p215 = scmp.lt.s32.totalorder %s13, 3
    %p216 = pnand %p214, %p215
    %p217 = pneg %p216
    // Predicated region
    $region37: #{non_local_block_forward.2} parent=5 // pred_check
      _
    $region38: #{non_local_block_forward.2} parent=5 // pred_check_branch
      %219 = sbr.rel (%p216) target = $region40
    $region39: #{non_local_block_forward.2} parent=5 // pred_region
      %s220 = ssub.s32 %s13, 1
      %p221 = scmp.lt.s32.totalorder %s18, 1
      %s222 = scalar_select %p221, %s18, 1
      %s223 = smul.addr %s222, 32
      %s224 = smul.addr %s223, 4
      %s225 = scalar_lea.vmem %s0, %s224
      %p226 = pneg %p39
      %p227 = pneg %p36
      %p228 = pneg %p60
      %p229 = pneg %p57
      %p230 = pneg %p81
      %p231 = pneg %p78
      %p232 = pneg %p102
      %p233 = pneg %p99
      %p234 = pneg %p123
      %p235 = pneg %p120
      %p236 = pneg %p149
      %p237 = pneg %p146
      %p238 = scmp.lt.s32.totalorder %s18, 1
      %s239 = scalar_select %p238, %s18, 1
      %s240 = smul.addr %s239, 8
      %s241 = smul.addr %s240, 4
      %s242 = scalar_lea.vmem %s5, %s241
      %p243 = pneg %p175
      %p244 = pneg %p172
      %p245 = scmp.lt.s32.totalorder %s18, 1
      %s246 = scalar_select %p245, %s18, 1
      %s247 = smul.addr %s246, 8
      %s248 = smul.addr %s247, 4
      %s249 = scalar_lea.vmem %s6, %s248
      %p250 = scmp.lt.s32.totalorder %s18, 1
      %s251 = scalar_select %p250, %s18, 1
      %s252 = smul.addr %s251, 32
      %s253 = smul.addr %s252, 4
      %s254 = scalar_lea.vmem %s0, %s253
      %p255 = scmp.lt.s32.totalorder %s18, 1
      %s256 = scalar_select %p255, %s18, 1
      %s257 = smul.addr %s256, 8
      %s258 = smul.addr %s257, 4
      %s259 = scalar_lea.vmem %s5, %s258
      %p260 = scmp.lt.s32.totalorder %s18, 1
      %s261 = scalar_select %p260, %s18, 1
      %s262 = smul.addr %s261, 8
      %s263 = smul.addr %s262, 4
      %s264 = scalar_lea.vmem %s6, %s263
      %v266 = vld [vmem:[%s254] sm:$0xf]
      %v267 = vld [vmem:[%s254 + $0x4] sm:$0xf]
      %v268 = vld [vmem:[%s254 + $0x8] sm:$0xf]
      %v269 = vld [vmem:[%s254 + $0xc] sm:$0xf]
      %v270 = vld [vmem:[%s254 + $0x10] sm:$0xf]
      %v271 = vld [vmem:[%s254 + $0x14] sm:$0xf]
      %v272 = vld [vmem:[%s254 + $0x18] sm:$0xf]
      %v273 = vld [vmem:[%s254 + $0x1c] sm:$0xf]
      %v274 = vld [vmem:[%s254 + $0x20] sm:$0xf]
      %v275 = vld [vmem:[%s254 + $0x24] sm:$0xf]
      %v276 = vld [vmem:[%s254 + $0x28] sm:$0xf]
      %v277 = vld [vmem:[%s254 + $0x2c] sm:$0xf]
      %v278 = vld [vmem:[%s254 + $0x30] sm:$0xf]
      %v279 = vld [vmem:[%s254 + $0x34] sm:$0xf]
      %v280 = vld [vmem:[%s254 + $0x38] sm:$0xf]
      %v281 = vld [vmem:[%s254 + $0x3c] sm:$0xf]
      %v282 = vld [vmem:[%s254 + $0x40] sm:$0xf]
      %v283 = vld [vmem:[%s254 + $0x44] sm:$0xf]
      %v284 = vld [vmem:[%s254 + $0x48] sm:$0xf]
      %v285 = vld [vmem:[%s254 + $0x4c] sm:$0xf]
      %v286 = vld [vmem:[%s254 + $0x50] sm:$0xf]
      %v287 = vld [vmem:[%s254 + $0x54] sm:$0xf]
      %v288 = vld [vmem:[%s254 + $0x58] sm:$0xf]
      %v289 = vld [vmem:[%s254 + $0x5c] sm:$0xf]
      %v290 = vld [vmem:[%s254 + $0x60] sm:$0xf]
      %v291 = vld [vmem:[%s254 + $0x64] sm:$0xf]
      %v292 = vld [vmem:[%s254 + $0x68] sm:$0xf]
      %v293 = vld [vmem:[%s254 + $0x6c] sm:$0xf]
      %v294 = vld [vmem:[%s254 + $0x70] sm:$0xf]
      %v295 = vld [vmem:[%s254 + $0x74] sm:$0xf]
      %v296 = vld [vmem:[%s254 + $0x78] sm:$0xf]
      %v297 = vld [vmem:[%s254 + $0x7c] sm:$0xf]
      %v298 = vld [vmem:[%s1] sm:$0x3]
      %v331 = vunpack.c.l.b16 %v266
      %v332 = vunpack.c.l.b16 %v267
      %v333 = vunpack.c.l.b16 %v268
      %v334 = vunpack.c.l.b16 %v269
      %v335 = vunpack.c.l.b16 %v270
      %v336 = vunpack.c.l.b16 %v271
      %v337 = vunpack.c.l.b16 %v272
      %v338 = vunpack.c.l.b16 %v273
      %v339 = vunpack.c.l.b16 %v274
      %v340 = vunpack.c.l.b16 %v275
      %v341 = vunpack.c.l.b16 %v276
      %v342 = vunpack.c.l.b16 %v277
      %v343 = vunpack.c.l.b16 %v278
      %v344 = vunpack.c.l.b16 %v279
      %v345 = vunpack.c.l.b16 %v280
      %v346 = vunpack.c.l.b16 %v281
      %v347 = vunpack.c.l.b16 %v282
      %v348 = vunpack.c.l.b16 %v283
      %v349 = vunpack.c.l.b16 %v284
      %v350 = vunpack.c.l.b16 %v285
      %v351 = vunpack.c.l.b16 %v286
      %v352 = vunpack.c.l.b16 %v287
      %v353 = vunpack.c.l.b16 %v288
      %v354 = vunpack.c.l.b16 %v289
      %v355 = vunpack.c.l.b16 %v290
      %v356 = vunpack.c.l.b16 %v291
      %v357 = vunpack.c.l.b16 %v292
      %v358 = vunpack.c.l.b16 %v293
      %v359 = vunpack.c.l.b16 %v294
      %v360 = vunpack.c.l.b16 %v295
      %v361 = vunpack.c.l.b16 %v296
      %v362 = vunpack.c.l.b16 %v297
      %v363 = vpack.c.b16 %v332, %v331
      %v364 = vpack.c.b16 %v334, %v333
      %v365 = vpack.c.b16 %v336, %v335
      %v366 = vpack.c.b16 %v338, %v337
      %v367 = vpack.c.b16 %v340, %v339
      %v368 = vpack.c.b16 %v342, %v341
      %v369 = vpack.c.b16 %v344, %v343
      %v370 = vpack.c.b16 %v346, %v345
      %v371 = vpack.c.b16 %v348, %v347
      %v372 = vpack.c.b16 %v350, %v349
      %v373 = vpack.c.b16 %v352, %v351
      %v374 = vpack.c.b16 %v354, %v353
      %v375 = vpack.c.b16 %v356, %v355
      %v376 = vpack.c.b16 %v358, %v357
      %v377 = vpack.c.b16 %v360, %v359
      %v378 = vpack.c.b16 %v362, %v361
      %vm379 = vcmask 31744
      %v381 = vsel %vm379, %v363, 0
      %v384 = vsel %vm379, %v364, 0
      %v387 = vsel %vm379, %v365, 0
      %v390 = vsel %vm379, %v366, 0
      %v393 = vsel %vm379, %v367, 0
      %v396 = vsel %vm379, %v368, 0
      %v399 = vsel %vm379, %v369, 0
      %v402 = vsel %vm379, %v370, 0
      %v405 = vsel %vm379, %v371, 0
      %v408 = vsel %vm379, %v372, 0
      %v411 = vsel %vm379, %v373, 0
      %v414 = vsel %vm379, %v374, 0
      %v417 = vsel %vm379, %v375, 0
      %v420 = vsel %vm379, %v376, 0
      %v423 = vsel %vm379, %v377, 0
      %v426 = vsel %vm379, %v378, 0
      %vm428 = vcmask 1041408
      %v430 = vsel %vm428, %v298, 0
      %432 = vmatprep.subr.bf16.mxu0 0
      %433 = vmatpush1.bf16.msra.mxu0 %v430
      %434 = vmatprep.subr.bf16.mxu0 0
      %435 = vmatpush1.bf16.msra.mxu0 0
      %436 = vmatprep.subr.bf16.mxu0 0
      %437 = vmatpush1.bf16.msra.mxu0 0
      %438 = vmatprep.subr.bf16.mxu0 0
      %439 = vmatpush1.bf16.msra.mxu0 0
      %440 = vmatprep.subr.bf16.mxu0 0
      %441 = vmatpush1.bf16.msra.mxu0 0
      %442 = vmatprep.subr.bf16.mxu0 0
      %443 = vmatpush1.bf16.msra.mxu0 0
      %444 = vmatprep.subr.bf16.mxu0 0
      %445 = vmatpush1.bf16.msra.mxu0 0
      %446 = vmatprep.subr.bf16.mxu0 0
      %447 = vmatpush1.bf16.msra.mxu0 0
      %448 = vmatprep.subr.bf16.mxu0 0
      %449 = vmatpush1.bf16.msra.mxu0 0
      %450 = vmatprep.subr.bf16.mxu0 0
      %451 = vmatpush1.bf16.msra.mxu0 0
      %452 = vmatprep.subr.bf16.mxu0 0
      %453 = vmatpush1.bf16.msra.mxu0 0
      %454 = vmatprep.subr.bf16.mxu0 0
      %455 = vmatpush1.bf16.msra.mxu0 0
      %456 = vmatprep.subr.bf16.mxu0 0
      %457 = vmatpush1.bf16.msra.mxu0 0
      %458 = vmatprep.subr.bf16.mxu0 0
      %459 = vmatpush1.bf16.msra.mxu0 0
      %460 = vmatprep.subr.bf16.mxu0 0
      %461 = vmatpush1.bf16.msra.mxu0 0
      %462 = vmatprep.subr.bf16.mxu0 0
      %463 = vmatpush1.bf16.msra.mxu0 0
      %464 = vmatprep.mubr.bf16.mxu0 0
      %465 = vmatmul.mubr.bf16.gmra.mrb[0].mxu0 %v381
      %v466 = vpop.f32.mrb[0].mxu0
      %v467 = vadd.f32 0.0, %v466
      %v468 = vpop.f32.mrb[0].mxu0
      %v469 = vpop.f32.mrb[0].mxu0
      %v470 = vadd.f32 0.0, %v469
      %v471 = vpop.f32.mrb[0].mxu0
      %472 = vmatprep.mubr.bf16.mxu0 0
      %473 = vmatmul.mubr.bf16.gmra.mrb[0].mxu0 %v384
      %v474 = vpop.f32.mrb[0].mxu0
      %v475 = vadd.f32 0.0, %v474
      %v476 = vpop.f32.mrb[0].mxu0
      %v477 = vpop.f32.mrb[0].mxu0
      %v478 = vadd.f32 0.0, %v477
      %v479 = vpop.f32.mrb[0].mxu0
      %480 = vmatprep.mubr.bf16.mxu0 0
      %481 = vmatmul.mubr.bf16.gmra.mrb[0].mxu0 %v387
      %v482 = vpop.f32.mrb[0].mxu0
      %v483 = vadd.f32 0.0, %v482
      %v484 = vpop.f32.mrb[0].mxu0
      %v485 = vpop.f32.mrb[0].mxu0
      %v486 = vadd.f32 0.0, %v485
      %v487 = vpop.f32.mrb[0].mxu0
      %488 = vmatprep.mubr.bf16.mxu0 0
      %489 = vmatmul.mubr.bf16.gmra.mrb[0].mxu0 %v390
      %v490 = vpop.f32.mrb[0].mxu0
      %v491 = vadd.f32 0.0, %v490
      %v492 = vpop.f32.mrb[0].mxu0
      %v493 = vpop.f32.mrb[0].mxu0
      %v494 = vadd.f32 0.0, %v493
      %v495 = vpop.f32.mrb[0].mxu0
      %496 = vmatprep.mubr.bf16.mxu0 0
      %497 = vmatmul.mubr.bf16.gmra.mrb[0].mxu0 %v393
      %v498 = vpop.f32.mrb[0].mxu0
      %v499 = vadd.f32 0.0, %v498
      %v500 = vpop.f32.mrb[0].mxu0
      %v501 = vpop.f32.mrb[0].mxu0
      %v502 = vadd.f32 0.0, %v501
      %v503 = vpop.f32.mrb[0].mxu0
      %504 = vmatprep.mubr.bf16.mxu0 0
      %505 = vmatmul.mubr.bf16.gmra.mrb[0].mxu0 %v396
      %v506 = vpop.f32.mrb[0].mxu0
      %v507 = vadd.f32 0.0, %v506
      %v508 = vpop.f32.mrb[0].mxu0
      %v509 = vpop.f32.mrb[0].mxu0
      %v510 = vadd.f32 0.0, %v509
      %v511 = vpop.f32.mrb[0].mxu0
      %512 = vmatprep.mubr.bf16.mxu0 0
      %513 = vmatmul.mubr.bf16.gmra.mrb[0].mxu0 %v399
      %v514 = vpop.f32.mrb[0].mxu0
      %v515 = vadd.f32 0.0, %v514
      %v516 = vpop.f32.mrb[0].mxu0
      %v517 = vpop.f32.mrb[0].mxu0
      %v518 = vadd.f32 0.0, %v517
      %v519 = vpop.f32.mrb[0].mxu0
      %520 = vmatprep.mubr.bf16.mxu0 0
      %521 = vmatmul.mubr.bf16.gmra.mrb[0].mxu0 %v402
      %v522 = vpop.f32.mrb[0].mxu0
      %v523 = vadd.f32 0.0, %v522
      %v524 = vpop.f32.mrb[0].mxu0
      %v525 = vpop.f32.mrb[0].mxu0
      %v526 = vadd.f32 0.0, %v525
      %v527 = vpop.f32.mrb[0].mxu0
      %528 = vmatprep.mubr.bf16.mxu0 0
      %529 = vmatmul.mubr.bf16.gmra.mrb[0].mxu0 %v405
      %v530 = vpop.f32.mrb[0].mxu0
      %v531 = vadd.f32 0.0, %v530
      %v532 = vpop.f32.mrb[0].mxu0
      %v533 = vpop.f32.mrb[0].mxu0
      %v534 = vadd.f32 0.0, %v533
      %v535 = vpop.f32.mrb[0].mxu0
      %536 = vmatprep.mubr.bf16.mxu0 0
      %537 = vmatmul.mubr.bf16.gmra.mrb[0].mxu0 %v408
      %v538 = vpop.f32.mrb[0].mxu0
      %v539 = vadd.f32 0.0, %v538
      %v540 = vpop.f32.mrb[0].mxu0
      %v541 = vpop.f32.mrb[0].mxu0
      %v542 = vadd.f32 0.0, %v541
      %v543 = vpop.f32.mrb[0].mxu0
      %544 = vmatprep.mubr.bf16.mxu0 0
      %545 = vmatmul.mubr.bf16.gmra.mrb[0].mxu0 %v411
      %v546 = vpop.f32.mrb[0].mxu0
      %v547 = vadd.f32 0.0, %v546
      %v548 = vpop.f32.mrb[0].mxu0
      %v549 = vpop.f32.mrb[0].mxu0
      %v550 = vadd.f32 0.0, %v549
      %v551 = vpop.f32.mrb[0].mxu0
      %552 = vmatprep.mubr.bf16.mxu0 0
      %553 = vmatmul.mubr.bf16.gmra.mrb[0].mxu0 %v414
      %v554 = vpop.f32.mrb[0].mxu0
      %v555 = vadd.f32 0.0, %v554
      %v556 = vpop.f32.mrb[0].mxu0
      %v557 = vpop.f32.mrb[0].mxu0
      %v558 = vadd.f32 0.0, %v557
      %v559 = vpop.f32.mrb[0].mxu0
      %560 = vmatprep.mubr.bf16.mxu0 0
      %561 = vmatmul.mubr.bf16.gmra.mrb[0].mxu0 %v417
      %v562 = vpop.f32.mrb[0].mxu0
      %v563 = vadd.f32 0.0, %v562
      %v564 = vpop.f32.mrb[0].mxu0
      %v565 = vpop.f32.mrb[0].mxu0
      %v566 = vadd.f32 0.0, %v565
      %v567 = vpop.f32.mrb[0].mxu0
      %568 = vmatprep.mubr.bf16.mxu0 0
      %569 = vmatmul.mubr.bf16.gmra.mrb[0].mxu0 %v420
      %v570 = vpop.f32.mrb[0].mxu0
      %v571 = vadd.f32 0.0, %v570
      %v572 = vpop.f32.mrb[0].mxu0
      %v573 = vpop.f32.mrb[0].mxu0
      %v574 = vadd.f32 0.0, %v573
      %v575 = vpop.f32.mrb[0].mxu0
      %576 = vmatprep.mubr.bf16.mxu0 0
      %577 = vmatmul.mubr.bf16.gmra.mrb[0].mxu0 %v423
      %v578 = vpop.f32.mrb[0].mxu0
      %v579 = vadd.f32 0.0, %v578
      %v580 = vpop.f32.mrb[0].mxu0
      %v581 = vpop.f32.mrb[0].mxu0
      %v582 = vadd.f32 0.0, %v581
      %v583 = vpop.f32.mrb[0].mxu0
      %584 = vmatprep.mubr.bf16.mxu0 0
      %585 = vmatmul.mubr.bf16.gmra.mrb[0].mxu0 %v426
      %v586 = vpop.f32.mrb[0].mxu0
      %v587 = vadd.f32 0.0, %v586
      %v588 = vpop.f32.mrb[0].mxu0
      %v589 = vpop.f32.mrb[0].mxu0
      %v590 = vadd.f32 0.0, %v589
      %v591 = vpop.f32.mrb[0].mxu0
      %592 = vdwg.mxu0
      %vm593 = vcmask 15360
      %v594 = vsel %vm593, %v467, -inf
      %v595 = vsel %vm593, %v499, -inf
      %v596 = vmax.f32 %v594, %v595
      %v597 = vsel %vm593, %v531, -inf
      %v598 = vmax.f32 %v596, %v597
      %v599 = vsel %vm593, %v563, -inf
      %v600 = vmax.f32 %v598, %v599
      %v601 = vsel %vm593, %v470, -inf
      %v602 = vsel %vm593, %v502, -inf
      %v603 = vmax.f32 %v601, %v602
      %v604 = vsel %vm593, %v534, -inf
      %v605 = vmax.f32 %v603, %v604
      %v606 = vsel %vm593, %v566, -inf
      %v607 = vmax.f32 %v605, %v606
      %v608 = vsel %vm593, %v475, -inf
      %v609 = vsel %vm593, %v507, -inf
      %v610 = vmax.f32 %v608, %v609
      %v611 = vsel %vm593, %v539, -inf
      %v612 = vmax.f32 %v610, %v611
      %v613 = vsel %vm593, %v571, -inf
      %v614 = vmax.f32 %v612, %v613
      %v615 = vsel %vm593, %v478, -inf
      %v616 = vsel %vm593, %v510, -inf
      %v617 = vmax.f32 %v615, %v616
      %v618 = vsel %vm593, %v542, -inf
      %v619 = vmax.f32 %v617, %v618
      %v620 = vsel %vm593, %v574, -inf
      %v621 = vmax.f32 %v619, %v620
      %v622 = vsel %vm593, %v483, -inf
      %v623 = vsel %vm593, %v515, -inf
      %v624 = vmax.f32 %v622, %v623
      %v625 = vsel %vm593, %v547, -inf
      %v626 = vmax.f32 %v624, %v625
      %v627 = vsel %vm593, %v579, -inf
      %v628 = vmax.f32 %v626, %v627
      %v629 = vsel %vm593, %v486, -inf
      %v630 = vsel %vm593, %v518, -inf
      %v631 = vmax.f32 %v629, %v630
      %v632 = vsel %vm593, %v550, -inf
      %v633 = vmax.f32 %v631, %v632
      %v634 = vsel %vm593, %v582, -inf
      %v635 = vmax.f32 %v633, %v634
      %v636 = vsel %vm593, %v491, -inf
      %v637 = vsel %vm593, %v523, -inf
      %v638 = vmax.f32 %v636, %v637
      %v639 = vsel %vm593, %v555, -inf
      %v640 = vmax.f32 %v638, %v639
      %v641 = vsel %vm593, %v587, -inf
      %v642 = vmax.f32 %v640, %v641
      %v643 = vsel %vm593, %v494, -inf
      %v644 = vsel %vm593, %v526, -inf
      %v645 = vmax.f32 %v643, %v644
      %v646 = vsel %vm593, %v558, -inf
      %v647 = vmax.f32 %v645, %v646
      %v648 = vsel %vm593, %v590, -inf
      %v649 = vmax.f32 %v647, %v648
      %v650 = vld [vmem:[%s2] sm:$0x1]
      %v652 = vlaneseq
      %v653 = vshrl.u32 %v652, 7
      %v654 = vsub.s32 0, %v653
      %v655 = vrot.slane %v650, %v654
      %v657 = vadd.f32 %v600, %v655
      %v658 = vadd.f32 %v607, %v655
      %v659 = vadd.f32 %v614, %v655
      %v660 = vadd.f32 %v621, %v655
      %v661 = vadd.f32 %v628, %v655
      %v662 = vadd.f32 %v635, %v655
      %v663 = vadd.f32 %v642, %v655
      %v664 = vadd.f32 %v649, %v655
      %v665 = vpack.c.bf16 %v658, %v657
      %v666 = vpack.c.bf16 %v660, %v659
      %v667 = vpack.c.bf16 %v662, %v661
      %v668 = vpack.c.bf16 %v664, %v663
      %v673 = vunpack.c.l.b16 %v665
      %v674 = vunpack.c.h.b16 %v665
      %v675 = vunpack.c.l.b16 %v666
      %v676 = vunpack.c.h.b16 %v666
      %v677 = vunpack.c.l.b16 %v667
      %v678 = vunpack.c.h.b16 %v667
      %v679 = vunpack.c.l.b16 %v668
      %v680 = vunpack.c.h.b16 %v668
      %v681 = vpack.c.b16 %v673, %v673
      %v682 = vpack.c.b16 %v674, %v674
      %v683 = vpack.c.b16 %v675, %v675
      %v684 = vpack.c.b16 %v676, %v676
      %v685 = vpack.c.b16 %v677, %v677
      %v686 = vpack.c.b16 %v678, %v678
      %v687 = vpack.c.b16 %v679, %v679
      %v688 = vpack.c.b16 %v680, %v680
      %vm697 = vcmask 11264
      %698 = vst.msk [vmem:[%s259] sm:$0xf] %vm697, %v681
      %699 = vst.msk [vmem:[%s259 + $0x4] sm:$0xf] %vm697, %v682
      %700 = vst.msk [vmem:[%s259 + $0x8] sm:$0xf] %vm697, %v683
      %701 = vst.msk [vmem:[%s259 + $0xc] sm:$0xf] %vm697, %v684
      %702 = vst.msk [vmem:[%s259 + $0x10] sm:$0xf] %vm697, %v685
      %703 = vst.msk [vmem:[%s259 + $0x14] sm:$0xf] %vm697, %v686
      %704 = vst.msk [vmem:[%s259 + $0x18] sm:$0xf] %vm697, %v687
      %705 = vst.msk [vmem:[%s259 + $0x1c] sm:$0xf] %vm697, %v688
      %v706 = vld [vmem:[%s3] sm:$0x3]
      %v708 = vsel %vm428, %v706, 0
      %710 = vmatprep.subr.bf16.mxu0 0
      %711 = vmatpush1.bf16.msra.mxu0 %v708
      %712 = vmatprep.subr.bf16.mxu0 0
      %713 = vmatpush1.bf16.msra.mxu0 0
      %714 = vmatprep.subr.bf16.mxu0 0
      %715 = vmatpush1.bf16.msra.mxu0 0
      %716 = vmatprep.subr.bf16.mxu0 0
      %717 = vmatpush1.bf16.msra.mxu0 0
      %718 = vmatprep.subr.bf16.mxu0 0
      %719 = vmatpush1.bf16.msra.mxu0 0
      %720 = vmatprep.subr.bf16.mxu0 0
      %721 = vmatpush1.bf16.msra.mxu0 0
      %722 = vmatprep.subr.bf16.mxu0 0
      %723 = vmatpush1.bf16.msra.mxu0 0
      %724 = vmatprep.subr.bf16.mxu0 0
      %725 = vmatpush1.bf16.msra.mxu0 0
      %726 = vmatprep.subr.bf16.mxu0 0
      %727 = vmatpush1.bf16.msra.mxu0 0
      %728 = vmatprep.subr.bf16.mxu0 0
      %729 = vmatpush1.bf16.msra.mxu0 0
      %730 = vmatprep.subr.bf16.mxu0 0
      %731 = vmatpush1.bf16.msra.mxu0 0
      %732 = vmatprep.subr.bf16.mxu0 0
      %733 = vmatpush1.bf16.msra.mxu0 0
      %734 = vmatprep.subr.bf16.mxu0 0
      %735 = vmatpush1.bf16.msra.mxu0 0
      %736 = vmatprep.subr.bf16.mxu0 0
      %737 = vmatpush1.bf16.msra.mxu0 0
      %738 = vmatprep.subr.bf16.mxu0 0
      %739 = vmatpush1.bf16.msra.mxu0 0
      %740 = vmatprep.subr.bf16.mxu0 0
      %741 = vmatpush1.bf16.msra.mxu0 0
      %742 = vmatprep.mubr.bf16.mxu0 0
      %743 = vmatmul.mubr.bf16.gmra.mrb[0].mxu0 %v381
      %v744 = vpop.f32.mrb[0].mxu0
      %v745 = vadd.f32 0.0, %v744
      %v746 = vpop.f32.mrb[0].mxu0
      %v747 = vpop.f32.mrb[0].mxu0
      %v748 = vadd.f32 0.0, %v747
      %v749 = vpop.f32.mrb[0].mxu0
      %750 = vmatprep.mubr.bf16.mxu0 0
      %751 = vmatmul.mubr.bf16.gmra.mrb[0].mxu0 %v384
      %v752 = vpop.f32.mrb[0].mxu0
      %v753 = vadd.f32 0.0, %v752
      %v754 = vpop.f32.mrb[0].mxu0
      %v755 = vpop.f32.mrb[0].mxu0
      %v756 = vadd.f32 0.0, %v755
      %v757 = vpop.f32.mrb[0].mxu0
      %758 = vmatprep.mubr.bf16.mxu0 0
      %759 = vmatmul.mubr.bf16.gmra.mrb[0].mxu0 %v387
      %v760 = vpop.f32.mrb[0].mxu0
      %v761 = vadd.f32 0.0, %v760
      %v762 = vpop.f32.mrb[0].mxu0
      %v763 = vpop.f32.mrb[0].mxu0
      %v764 = vadd.f32 0.0, %v763
      %v765 = vpop.f32.mrb[0].mxu0
      %766 = vmatprep.mubr.bf16.mxu0 0
      %767 = vmatmul.mubr.bf16.gmra.mrb[0].mxu0 %v390
      %v768 = vpop.f32.mrb[0].mxu0
      %v769 = vadd.f32 0.0, %v768
      %v770 = vpop.f32.mrb[0].mxu0
      %v771 = vpop.f32.mrb[0].mxu0
      %v772 = vadd.f32 0.0, %v771
      %v773 = vpop.f32.mrb[0].mxu0
      %774 = vmatprep.mubr.bf16.mxu0 0
      %775 = vmatmul.mubr.bf16.gmra.mrb[0].mxu0 %v393
      %v776 = vpop.f32.mrb[0].mxu0
      %v777 = vadd.f32 0.0, %v776
      %v778 = vpop.f32.mrb[0].mxu0
      %v779 = vpop.f32.mrb[0].mxu0
      %v780 = vadd.f32 0.0, %v779
      %v781 = vpop.f32.mrb[0].mxu0
      %782 = vmatprep.mubr.bf16.mxu0 0
      %783 = vmatmul.mubr.bf16.gmra.mrb[0].mxu0 %v396
      %v784 = vpop.f32.mrb[0].mxu0
      %v785 = vadd.f32 0.0, %v784
      %v786 = vpop.f32.mrb[0].mxu0
      %v787 = vpop.f32.mrb[0].mxu0
      %v788 = vadd.f32 0.0, %v787
      %v789 = vpop.f32.mrb[0].mxu0
      %790 = vmatprep.mubr.bf16.mxu0 0
      %791 = vmatmul.mubr.bf16.gmra.mrb[0].mxu0 %v399
      %v792 = vpop.f32.mrb[0].mxu0
      %v793 = vadd.f32 0.0, %v792
      %v794 = vpop.f32.mrb[0].mxu0
      %v795 = vpop.f32.mrb[0].mxu0
      %v796 = vadd.f32 0.0, %v795
      %v797 = vpop.f32.mrb[0].mxu0
      %798 = vmatprep.mubr.bf16.mxu0 0
      %799 = vmatmul.mubr.bf16.gmra.mrb[0].mxu0 %v402
      %v800 = vpop.f32.mrb[0].mxu0
      %v801 = vadd.f32 0.0, %v800
      %v802 = vpop.f32.mrb[0].mxu0
      %v803 = vpop.f32.mrb[0].mxu0
      %v804 = vadd.f32 0.0, %v803
      %v805 = vpop.f32.mrb[0].mxu0
      %806 = vmatprep.mubr.bf16.mxu0 0
      %807 = vmatmul.mubr.bf16.gmra.mrb[0].mxu0 %v405
      %v808 = vpop.f32.mrb[0].mxu0
      %v809 = vadd.f32 0.0, %v808
      %v810 = vpop.f32.mrb[0].mxu0
      %v811 = vpop.f32.mrb[0].mxu0
      %v812 = vadd.f32 0.0, %v811
      %v813 = vpop.f32.mrb[0].mxu0
      %814 = vmatprep.mubr.bf16.mxu0 0
      %815 = vmatmul.mubr.bf16.gmra.mrb[0].mxu0 %v408
      %v816 = vpop.f32.mrb[0].mxu0
      %v817 = vadd.f32 0.0, %v816
      %v818 = vpop.f32.mrb[0].mxu0
      %v819 = vpop.f32.mrb[0].mxu0
      %v820 = vadd.f32 0.0, %v819
      %v821 = vpop.f32.mrb[0].mxu0
      %822 = vmatprep.mubr.bf16.mxu0 0
      %823 = vmatmul.mubr.bf16.gmra.mrb[0].mxu0 %v411
      %v824 = vpop.f32.mrb[0].mxu0
      %v825 = vadd.f32 0.0, %v824
      %v826 = vpop.f32.mrb[0].mxu0
      %v827 = vpop.f32.mrb[0].mxu0
      %v828 = vadd.f32 0.0, %v827
      %v829 = vpop.f32.mrb[0].mxu0
      %830 = vmatprep.mubr.bf16.mxu0 0
      %831 = vmatmul.mubr.bf16.gmra.mrb[0].mxu0 %v414
      %v832 = vpop.f32.mrb[0].mxu0
      %v833 = vadd.f32 0.0, %v832
      %v834 = vpop.f32.mrb[0].mxu0
      %v835 = vpop.f32.mrb[0].mxu0
      %v836 = vadd.f32 0.0, %v835
      %v837 = vpop.f32.mrb[0].mxu0
      %838 = vmatprep.mubr.bf16.mxu0 0
      %839 = vmatmul.mubr.bf16.gmra.mrb[0].mxu0 %v417
      %v840 = vpop.f32.mrb[0].mxu0
      %v841 = vadd.f32 0.0, %v840
      %v842 = vpop.f32.mrb[0].mxu0
      %v843 = vpop.f32.mrb[0].mxu0
      %v844 = vadd.f32 0.0, %v843
      %v845 = vpop.f32.mrb[0].mxu0
      %846 = vmatprep.mubr.bf16.mxu0 0
      %847 = vmatmul.mubr.bf16.gmra.mrb[0].mxu0 %v420
      %v848 = vpop.f32.mrb[0].mxu0
      %v849 = vadd.f32 0.0, %v848
      %v850 = vpop.f32.mrb[0].mxu0
      %v851 = vpop.f32.mrb[0].mxu0
      %v852 = vadd.f32 0.0, %v851
      %v853 = vpop.f32.mrb[0].mxu0
      %854 = vmatprep.mubr.bf16.mxu0 0
      %855 = vmatmul.mubr.bf16.gmra.mrb[0].mxu0 %v423
      %v856 = vpop.f32.mrb[0].mxu0
      %v857 = vadd.f32 0.0, %v856
      %v858 = vpop.f32.mrb[0].mxu0
      %v859 = vpop.f32.mrb[0].mxu0
      %v860 = vadd.f32 0.0, %v859
      %v861 = vpop.f32.mrb[0].mxu0
      %862 = vmatprep.mubr.bf16.mxu0 0
      %863 = vmatmul.mubr.bf16.gmra.mrb[0].mxu0 %v426
      %v864 = vpop.f32.mrb[0].mxu0
      %v865 = vadd.f32 0.0, %v864
      %v866 = vpop.f32.mrb[0].mxu0
      %v867 = vpop.f32.mrb[0].mxu0
      %v868 = vadd.f32 0.0, %v867
      %v869 = vpop.f32.mrb[0].mxu0
      %870 = vdwg.mxu0
      %v871 = vsel %vm593, %v745, -inf
      %v872 = vsel %vm593, %v777, -inf
      %v873 = vmax.f32 %v871, %v872
      %v874 = vsel %vm593, %v809, -inf
      %v875 = vmax.f32 %v873, %v874
      %v876 = vsel %vm593, %v841, -inf
      %v877 = vmax.f32 %v875, %v876
      %v878 = vsel %vm593, %v748, -inf
      %v879 = vsel %vm593, %v780, -inf
      %v880 = vmax.f32 %v878, %v879
      %v881 = vsel %vm593, %v812, -inf
      %v882 = vmax.f32 %v880, %v881
      %v883 = vsel %vm593, %v844, -inf
      %v884 = vmax.f32 %v882, %v883
      %v885 = vsel %vm593, %v753, -inf
      %v886 = vsel %vm593, %v785, -inf
      %v887 = vmax.f32 %v885, %v886
      %v888 = vsel %vm593, %v817, -inf
      %v889 = vmax.f32 %v887, %v888
      %v890 = vsel %vm593, %v849, -inf
      %v891 = vmax.f32 %v889, %v890
      %v892 = vsel %vm593, %v756, -inf
      %v893 = vsel %vm593, %v788, -inf
      %v894 = vmax.f32 %v892, %v893
      %v895 = vsel %vm593, %v820, -inf
      %v896 = vmax.f32 %v894, %v895
      %v897 = vsel %vm593, %v852, -inf
      %v898 = vmax.f32 %v896, %v897
      %v899 = vsel %vm593, %v761, -inf
      %v900 = vsel %vm593, %v793, -inf
      %v901 = vmax.f32 %v899, %v900
      %v902 = vsel %vm593, %v825, -inf
      %v903 = vmax.f32 %v901, %v902
      %v904 = vsel %vm593, %v857, -inf
      %v905 = vmax.f32 %v903, %v904
      %v906 = vsel %vm593, %v764, -inf
      %v907 = vsel %vm593, %v796, -inf
      %v908 = vmax.f32 %v906, %v907
      %v909 = vsel %vm593, %v828, -inf
      %v910 = vmax.f32 %v908, %v909
      %v911 = vsel %vm593, %v860, -inf
      %v912 = vmax.f32 %v910, %v911
      %v913 = vsel %vm593, %v769, -inf
      %v914 = vsel %vm593, %v801, -inf
      %v915 = vmax.f32 %v913, %v914
      %v916 = vsel %vm593, %v833, -inf
      %v917 = vmax.f32 %v915, %v916
      %v918 = vsel %vm593, %v865, -inf
      %v919 = vmax.f32 %v917, %v918
      %v920 = vsel %vm593, %v772, -inf
      %v921 = vsel %vm593, %v804, -inf
      %v922 = vmax.f32 %v920, %v921
      %v923 = vsel %vm593, %v836, -inf
      %v924 = vmax.f32 %v922, %v923
      %v925 = vsel %vm593, %v868, -inf
      %v926 = vmax.f32 %v924, %v925
      %v927 = vld [vmem:[%s4] sm:$0x1]
      %v929 = vlaneseq
      %v930 = vshrl.u32 %v929, 7
      %v931 = vsub.s32 0, %v930
      %v932 = vrot.slane %v927, %v931
      %v934 = vadd.f32 %v877, %v932
      %v935 = vadd.f32 %v884, %v932
      %v936 = vadd.f32 %v891, %v932
      %v937 = vadd.f32 %v898, %v932
      %v938 = vadd.f32 %v905, %v932
      %v939 = vadd.f32 %v912, %v932
      %v940 = vadd.f32 %v919, %v932
      %v941 = vadd.f32 %v926, %v932
      %v942 = vpack.c.bf16 %v935, %v934
      %v943 = vpack.c.bf16 %v937, %v936
      %v944 = vpack.c.bf16 %v939, %v938
      %v945 = vpack.c.bf16 %v941, %v940
      %v950 = vunpack.c.l.b16 %v942
      %v951 = vunpack.c.h.b16 %v942
      %v952 = vunpack.c.l.b16 %v943
      %v953 = vunpack.c.h.b16 %v943
      %v954 = vunpack.c.l.b16 %v944
      %v955 = vunpack.c.h.b16 %v944
      %v956 = vunpack.c.l.b16 %v945
      %v957 = vunpack.c.h.b16 %v945
      %v958 = vpack.c.b16 %v950, %v950
      %v959 = vpack.c.b16 %v951, %v951
      %v960 = vpack.c.b16 %v952, %v952
      %v961 = vpack.c.b16 %v953, %v953
      %v962 = vpack.c.b16 %v954, %v954
      %v963 = vpack.c.b16 %v955, %v955
      %v964 = vpack.c.b16 %v956, %v956
      %v965 = vpack.c.b16 %v957, %v957
      %974 = vst.msk [vmem:[%s264] sm:$0xf] %vm697, %v958
      %975 = vst.msk [vmem:[%s264 + $0x4] sm:$0xf] %vm697, %v959
      %976 = vst.msk [vmem:[%s264 + $0x8] sm:$0xf] %vm697, %v960
      %977 = vst.msk [vmem:[%s264 + $0xc] sm:$0xf] %vm697, %v961
      %978 = vst.msk [vmem:[%s264 + $0x10] sm:$0xf] %vm697, %v962
      %979 = vst.msk [vmem:[%s264 + $0x14] sm:$0xf] %vm697, %v963
      %980 = vst.msk [vmem:[%s264 + $0x18] sm:$0xf] %vm697, %v964
      %981 = vst.msk [vmem:[%s264 + $0x1c] sm:$0xf] %vm697, %v965
      %p982 = scmp.lt.s32.totalorder %s18, 1
      %s983 = scalar_select %p982, %s18, 1
      %s984 = smul.addr %s983, 8
      %s985 = smul.addr %s984, 4
      %s986 = scalar_lea.vmem %s5, %s985
      %p987 = scmp.lt.s32.totalorder %s18, 1
      %s988 = scalar_select %p987, %s18, 1
      %s989 = smul.addr %s988, 8
      %s990 = smul.addr %s989, 4
      %s991 = scalar_lea.vmem %s6, %s990
      // Predicated region
      $region41: #{non_local_block_forward.2} parent=39 // pred_check
        %p992 = pneg %p146
      $region42: #{non_local_block_forward.2} parent=39 // pred_check_branch
        %994 = sbr.rel (%p992) target = $region44
      $region43: #{non_local_block_forward.2} parent=39 // pred_region
        _
      $region44: #{non_local_block_forward.2} parent=39 // pred_fallthru
        _
      // Predicated region
      $region45: #{non_local_block_forward.2} parent=39 // pred_check
        %p995 = pneg %p172
      $region46: #{non_local_block_forward.2} parent=39 // pred_check_branch
        %997 = sbr.rel (%p995) target = $region48
      $region47: #{non_local_block_forward.2} parent=39 // pred_region
        _
      $region48: #{non_local_block_forward.2} parent=39 // pred_fallthru
        _
    $region40: #{non_local_block_forward.2} parent=5 // pred_fallthru
      _
    %p998 = scmp.le.s32.totalorder 2, %s13
    // Predicated region
    $region49: #{non_local_block_forward.2} parent=5 // pred_check
      %p999 = pneg %p998
    $region50: #{non_local_block_forward.2} parent=5 // pred_check_branch
      %1001 = sbr.rel (%p999) target = $region52
    $region51: #{non_local_block_forward.2} parent=5 // pred_region
      %s1002 = ssub.s32 %s13, 2
      // Predicated region
      $region53: #{non_local_block_forward.2} parent=51 // pred_check
        %p1003 = pneg %p152
      $region54: #{non_local_block_forward.2} parent=51 // pred_check_branch
        %1005 = sbr.rel (%p1003) target = $region56
      $region55: #{non_local_block_forward.2} parent=51 // pred_region
        %p1006 = scmp.lt.s32.totalorder %s19, 1
        %s1007 = scalar_select %p1006, %s19, 1
        %s1008 = smul.addr %s1007, 8
        %s1009 = smul.addr %s1008, 4
        %s1010 = scalar_lea.vmem %s5, %s1009
      $region56: #{non_local_block_forward.2} parent=51 // pred_fallthru
        _
      // Predicated region
      $region57: #{non_local_block_forward.2} parent=51 // pred_check
        %p1011 = pneg %p178
      $region58: #{non_local_block_forward.2} parent=51 // pred_check_branch
        %1013 = sbr.rel (%p1011) target = $region60
      $region59: #{non_local_block_forward.2} parent=51 // pred_region
        %p1014 = scmp.lt.s32.totalorder %s19, 1
        %s1015 = scalar_select %p1014, %s19, 1
        %s1016 = smul.addr %s1015, 8
        %s1017 = smul.addr %s1016, 4
        %s1018 = scalar_lea.vmem %s6, %s1017
      $region60: #{non_local_block_forward.2} parent=51 // pred_fallthru
        _
    $region52: #{non_local_block_forward.2} parent=5 // pred_fallthru
      _
  $region6: #{non_local_block_forward.2} parent=0 // loop_footer
    %s17 = sadd.s32 1, %s13
  $region7: #{non_local_block_forward.2} parent=0 // loop_footer_branch
    %12 = sbr.rel target = $region3
  $region8: #{non_local_block_forward.2} parent=0 // loop_exit
    _

// kernel: non_local_block_forward.3
$region0: #{non_local_block_forward.3}
  #allocation0 [shape = 'u32[]', space=smem, size = 0x4, offset = 0x4, fixed_abs, tag = 'smem constant byte address 0x4 - core index']
  #allocation1 [shape = 'u32[144,128]{1,0:T(1,128)}', space=vmem, size = 0x12000, scoped, tag = 'internal scratch']
  #allocation2 [shape = 'bf16[256,2]{1,0:T(16,128)(2,1)}', space=vmem, size = 0x10000, scoped, tag = 'scratch operand']
  #allocation3 [shape = 'f32[256,1]{1,0:T(8,128)}', space=vmem, size = 0x20000, scoped, tag = 'scratch operand']
  #allocation4 [shape = 'f32[256,1]{1,0:T(8,128)}', space=vmem, size = 0x20000, scoped, tag = 'scratch operand']
  #allocation5 [shape = 'f32[256,2]{1,0:T(8,128)}', space=vmem, size = 0x20000, scoped, tag = 'scratch operand']
  %s0 = inlined_call_operand.vmem [shape: f32[2,256,4], index: 0, kind: input, shape index: {}]
  %s1 = inlined_call_operand.vmem [shape: bf16[2,64,2], index: 1, kind: input, shape index: {}]
  %s2 = inlined_call_operand.vmem [shape: bf16[2,64,2], index: 2, kind: input, shape index: {}]
  %s3 = inlined_call_operand.vmem [shape: bf16[4,2], index: 3, kind: input, shape index: {}]
  %s4 = inlined_call_operand.vmem [shape: f32[1,2], index: 4, kind: input, shape index: {}]
  %s5 = inlined_call_operand.vmem [shape: bf16[2,4], index: 5, kind: input, shape index: {}]
  %s6 = inlined_call_operand.vmem [shape: f32[1,4], index: 6, kind: input, shape index: {}]
  %s7 = inlined_call_operand.vmem [shape: f32[2,256,4], index: 7, kind: output, shape index: {}]
  %s8 = sld [smem:[#allocation0]]
  $region69: #{non_local_block_forward.3} parent=0
    _
  %s10 = ssub.s32 1, %s8
  %s11 = scalar_select 0, %s10, %s8
  loop: start=0, step=1, limit=4
  $region2: #{non_local_block_forward.3} parent=0 // loop_pre_header
    _
  $region3: #{non_local_block_forward.3} parent=0 // loop_header
    %s13 = sphi 0, %s17
    %p14 = scmp.ge.s32.totalorder %s13, 4
    %s20 = sphi 0, %s39
    %s21 = sphi 0, %s35
    %s22 = sphi 0, %s31
    %s23 = sphi 0, %s20
    %s24 = sphi 0, %s21
    %s25 = sphi 0, %s22
    %s26 = sphi 0, %s23
    %s27 = sphi 0, %s24
    %s28 = sphi 0, %s25
    %s44 = sphi 0, %s46
    %s47 = sphi 0, %s44
    %s48 = sphi 0, %s47
    %s64 = sphi 0, %s48
    %s72 = sphi 0, %s74
    %s75 = sphi 0, %s72
    %s76 = sphi 0, %s75
    %s92 = sphi 0, %s76
    %s100 = sphi 0, %s102
    %s103 = sphi 0, %s100
    %s104 = sphi 0, %s103
    %s120 = sphi 0, %s104
    %s124 = sphi 0, %s124
    %s126 = sphi 0, %s124
    %s127 = sphi 0, %s126
    %s141 = sphi 0, %s127
    %s145 = sphi 0, %s145
    %s147 = sphi 0, %s145
    %s148 = sphi 0, %s147
    %s162 = sphi 0, %s148
    %s166 = sphi 0, %s166
    %s168 = sphi 0, %s166
    %s169 = sphi 0, %s168
    %s183 = sphi 0, %s169
    %s187 = sphi 0, %s187
    %s189 = sphi 0, %s187
    %s190 = sphi 0, %s189
    %s204 = sphi 0, %s190
    %s212 = sphi 0, %s214
    %s215 = sphi 0, %s212
    %s216 = sphi 0, %s215
    %s232 = sphi 0, %s216
  $region4: #{non_local_block_forward.3} parent=0 // loop_header_branch
    %16 = sbr.rel (%p14) target = $region8
  $region5: #{non_local_block_forward.3} parent=0 // loop_body
    %s18 = ssub.s32 %s13, 1
    %s19 = ssub.s32 %s13, 2
    %s29 = sadd.s32 1, %s22
    %p30 = scmp.ge.s32.totalorder %s29, 1
    %s31 = scalar_select %p30, 0, %s29
    %s32 = sadd.s32 1, %s21
    %s33 = scalar_select %p30, %s32, %s21
    %p34 = scmp.ge.s32.totalorder %s33, 1
    %s35 = scalar_select %p34, 0, %s33
    %s36 = sadd.s32 1, %s20
    %s37 = scalar_select %p34, %s36, %s20
    %p38 = scmp.ge.s32.totalorder %s37, 2
    %s39 = scalar_select %p38, 0, %s37
    %s40 = ssub.s32 %s20, %s39
    %s41 = ssub.s32 %s21, %s35
    %s42 = sor.u32 %s40, %s41
    %p43 = scmp.eq.s32.totalorder %s42, 0
    %s45 = sadd.s32 %s44, 1
    %s46 = scalar_select %p43, %s44, %s45
    %p49 = pneg %p43
    %p50 = scmp.eq.s32.totalorder %s13, 1
    %p51 = por %p49, %p50
    %p52 = scmp.ne.s32.totalorder %s44, %s47
    %p53 = scmp.eq.s32.totalorder %s13, 0
    %p54 = por %p52, %p53
    %p55 = scmp.ne.s32.totalorder %s44, %s47
    %p56 = scmp.eq.s32.totalorder %s18, 1
    %p57 = por %p55, %p56
    %p58 = scmp.ne.s32.totalorder %s47, %s48
    %p59 = scmp.eq.s32.totalorder %s18, 0
    %p60 = por %p58, %p59
    %p61 = scmp.ne.s32.totalorder %s47, %s48
    %p62 = scmp.eq.s32.totalorder %s19, 1
    %p63 = por %p61, %p62
    %p65 = scmp.ne.s32.totalorder %s48, %s64
    %p66 = scmp.eq.s32.totalorder %s19, 0
    %p67 = por %p65, %p66
    %s68 = ssub.s32 %s20, %s39
    %s69 = ssub.s32 %s22, %s31
    %s70 = sor.u32 %s68, %s69
    %p71 = scmp.eq.s32.totalorder %s70, 0
    %s73 = sadd.s32 %s72, 1
    %s74 = scalar_select %p71, %s72, %s73
    %p77 = pneg %p71
    %p78 = scmp.eq.s32.totalorder %s13, 1
    %p79 = por %p77, %p78
    %p80 = scmp.ne.s32.totalorder %s72, %s75
    %p81 = scmp.eq.s32.totalorder %s13, 0
    %p82 = por %p80, %p81
    %p83 = scmp.ne.s32.totalorder %s72, %s75
    %p84 = scmp.eq.s32.totalorder %s18, 1
    %p85 = por %p83, %p84
    %p86 = scmp.ne.s32.totalorder %s75, %s76
    %p87 = scmp.eq.s32.totalorder %s18, 0
    %p88 = por %p86, %p87
    %p89 = scmp.ne.s32.totalorder %s75, %s76
    %p90 = scmp.eq.s32.totalorder %s19, 1
    %p91 = por %p89, %p90
    %p93 = scmp.ne.s32.totalorder %s76, %s92
    %p94 = scmp.eq.s32.totalorder %s19, 0
    %p95 = por %p93, %p94
    %s96 = ssub.s32 %s20, %s39
    %s97 = ssub.s32 %s22, %s31
    %s98 = sor.u32 %s96, %s97
    %p99 = scmp.eq.s32.totalorder %s98, 0
    %s101 = sadd.s32 %s100, 1
    %s102 = scalar_select %p99, %s100, %s101
    %p105 = pneg %p99
    %p106 = scmp.eq.s32.totalorder %s13, 1
    %p107 = por %p105, %p106
    %p108 = scmp.ne.s32.totalorder %s100, %s103
    %p109 = scmp.eq.s32.totalorder %s13, 0
    %p110 = por %p108, %p109
    %p111 = scmp.ne.s32.totalorder %s100, %s103
    %p112 = scmp.eq.s32.totalorder %s18, 1
    %p113 = por %p111, %p112
    %p114 = scmp.ne.s32.totalorder %s103, %s104
    %p115 = scmp.eq.s32.totalorder %s18, 0
    %p116 = por %p114, %p115
    %p117 = scmp.ne.s32.totalorder %s103, %s104
    %p118 = scmp.eq.s32.totalorder %s19, 1
    %p119 = por %p117, %p118
    %p121 = scmp.ne.s32.totalorder %s104, %s120
    %p122 = scmp.eq.s32.totalorder %s19, 0
    %p123 = por %p121, %p122
    %s125 = sadd.s32 %s124, 1
    %p128 = scmp.eq.s32.totalorder %s13, 1
    %p129 = scmp.ne.s32.totalorder %s124, %s126
    %p130 = scmp.eq.s32.totalorder %s13, 0
    %p131 = por %p129, %p130
    %p132 = scmp.ne.s32.totalorder %s124, %s126
    %p133 = scmp.eq.s32.totalorder %s18, 1
    %p134 = por %p132, %p133
    %p135 = scmp.ne.s32.totalorder %s126, %s127
    %p136 = scmp.eq.s32.totalorder %s18, 0
    %p137 = por %p135, %p136
    %p138 = scmp.ne.s32.totalorder %s126, %s127
    %p139 = scmp.eq.s32.totalorder %s19, 1
    %p140 = por %p138, %p139
    %p142 = scmp.ne.s32.totalorder %s127, %s141
    %p143 = scmp.eq.s32.totalorder %s19, 0
    %p144 = por %p142, %p143
    %s146 = sadd.s32 %s145, 1
    %p149 = scmp.eq.s32.totalorder %s13, 1
    %p150 = scmp.ne.s32.totalorder %s145, %s147
    %p151 = scmp.eq.s32.totalorder %s13, 0
    %p152 = por %p150, %p151
    %p153 = scmp.ne.s32.totalorder %s145, %s147
    %p154 = scmp.eq.s32.totalorder %s18, 1
    %p155 = por %p153, %p154
    %p156 = scmp.ne.s32.totalorder %s147, %s148
    %p157 = scmp.eq.s32.totalorder %s18, 0
    %p158 = por %p156, %p157
    %p159 = scmp.ne.s32.totalorder %s147, %s148
    %p160 = scmp.eq.s32.totalorder %s19, 1
    %p161 = por %p159, %p160
    %p163 = scmp.ne.s32.totalorder %s148, %s162
    %p164 = scmp.eq.s32.totalorder %s19, 0
    %p165 = por %p163, %p164
    %s167 = sadd.s32 %s166, 1
    %p170 = scmp.eq.s32.totalorder %s13, 1
    %p171 = scmp.ne.s32.totalorder %s166, %s168
    %p172 = scmp.eq.s32.totalorder %s13, 0
    %p173 = por %p171, %p172
    %p174 = scmp.ne.s32.totalorder %s166, %s168
    %p175 = scmp.eq.s32.totalorder %s18, 1
    %p176 = por %p174, %p175
    %p177 = scmp.ne.s32.totalorder %s168, %s169
    %p178 = scmp.eq.s32.totalorder %s18, 0
    %p179 = por %p177, %p178
    %p180 = scmp.ne.s32.totalorder %s168, %s169
    %p181 = scmp.eq.s32.totalorder %s19, 1
    %p182 = por %p180, %p181
    %p184 = scmp.ne.s32.totalorder %s169, %s183
    %p185 = scmp.eq.s32.totalorder %s19, 0
    %p186 = por %p184, %p185
    %s188 = sadd.s32 %s187, 1
    %p191 = scmp.eq.s32.totalorder %s13, 1
    %p192 = scmp.ne.s32.totalorder %s187, %s189
    %p193 = scmp.eq.s32.totalorder %s13, 0
    %p194 = por %p192, %p193
    %p195 = scmp.ne.s32.totalorder %s187, %s189
    %p196 = scmp.eq.s32.totalorder %s18, 1
    %p197 = por %p195, %p196
    %p198 = scmp.ne.s32.totalorder %s189, %s190
    %p199 = scmp.eq.s32.totalorder %s18, 0
    %p200 = por %p198, %p199
    %p201 = scmp.ne.s32.totalorder %s189, %s190
    %p202 = scmp.eq.s32.totalorder %s19, 1
    %p203 = por %p201, %p202
    %p205 = scmp.ne.s32.totalorder %s190, %s204
    %p206 = scmp.eq.s32.totalorder %s19, 0
    %p207 = por %p205, %p206
    %s208 = ssub.s32 %s20, %s39
    %s209 = ssub.s32 %s21, %s35
    %s210 = sor.u32 %s208, %s209
    %p211 = scmp.eq.s32.totalorder %s210, 0
    %s213 = sadd.s32 %s212, 1
    %s214 = scalar_select %p211, %s212, %s213
    %p217 = pneg %p211
    %p218 = scmp.eq.s32.totalorder %s13, 1
    %p219 = por %p217, %p218
    %p220 = scmp.ne.s32.totalorder %s212, %s215
    %p221 = scmp.eq.s32.totalorder %s13, 0
    %p222 = por %p220, %p221
    %p223 = scmp.ne.s32.totalorder %s212, %s215
    %p224 = scmp.eq.s32.totalorder %s18, 1
    %p225 = por %p223, %p224
    %p226 = scmp.ne.s32.totalorder %s215, %s216
    %p227 = scmp.eq.s32.totalorder %s18, 0
    %p228 = por %p226, %p227
    %p229 = scmp.ne.s32.totalorder %s215, %s216
    %p230 = scmp.eq.s32.totalorder %s19, 1
    %p231 = por %p229, %p230
    %p233 = scmp.ne.s32.totalorder %s216, %s232
    %p234 = scmp.eq.s32.totalorder %s19, 0
    %p235 = por %p233, %p234
    %p236 = scmp.le.s32.totalorder 1, %s13
    %p237 = scmp.lt.s32.totalorder %s13, 3
    %p238 = pnand %p236, %p237
    %p239 = pneg %p238
    // Predicated region
    $region9: #{non_local_block_forward.3} parent=5 // pred_check
      _
    $region10: #{non_local_block_forward.3} parent=5 // pred_check_branch
      %241 = sbr.rel (%p238) target = $region12
    $region11: #{non_local_block_forward.3} parent=5 // pred_region
      %s242 = ssub.s32 %s13, 1
      // Predicated region
      $region13: #{non_local_block_forward.3} parent=11 // pred_check
        %p243 = pneg %p137
      $region14: #{non_local_block_forward.3} parent=11 // pred_check_branch
        %245 = sbr.rel (%p243) target = $region16
      $region15: #{non_local_block_forward.3} parent=11 // pred_region
        _
      $region16: #{non_local_block_forward.3} parent=11 // pred_fallthru
        _
      // Predicated region
      $region17: #{non_local_block_forward.3} parent=11 // pred_check
        %p246 = pneg %p158
      $region18: #{non_local_block_forward.3} parent=11 // pred_check_branch
        %248 = sbr.rel (%p246) target = $region20
      $region19: #{non_local_block_forward.3} parent=11 // pred_region
        _
      $region20: #{non_local_block_forward.3} parent=11 // pred_fallthru
        _
      // Predicated region
      $region21: #{non_local_block_forward.3} parent=11 // pred_check
        %p249 = pneg %p179
      $region22: #{non_local_block_forward.3} parent=11 // pred_check_branch
        %251 = sbr.rel (%p249) target = $region24
      $region23: #{non_local_block_forward.3} parent=11 // pred_region
        _
      $region24: #{non_local_block_forward.3} parent=11 // pred_fallthru
        _
      // Predicated region
      $region25: #{non_local_block_forward.3} parent=11 // pred_check
        %p252 = pneg %p200
      $region26: #{non_local_block_forward.3} parent=11 // pred_check_branch
        %254 = sbr.rel (%p252) target = $region28
      $region27: #{non_local_block_forward.3} parent=11 // pred_region
        _
      $region28: #{non_local_block_forward.3} parent=11 // pred_fallthru
        _
    $region12: #{non_local_block_forward.3} parent=5 // pred_fallthru
      _
    %p255 = scmp.lt.s32.totalorder %s13, 2
    // Predicated region
    $region29: #{non_local_block_forward.3} parent=5 // pred_check
      %p256 = pneg %p255
    $region30: #{non_local_block_forward.3} parent=5 // pred_check_branch
      %258 = sbr.rel (%p256) target = $region32
    $region31: #{non_local_block_forward.3} parent=5 // pred_region
      // Predicated region
      $region33: #{non_local_block_forward.3} parent=31 // pred_check
        %p259 = pneg %p54
      $region34: #{non_local_block_forward.3} parent=31 // pred_check_branch
        %261 = sbr.rel (%p259) target = $region36
      $region35: #{non_local_block_forward.3} parent=31 // pred_region
        %s262 = smul.u32 32, %s21
        %p263 = scmp.lt.s32.totalorder %s20, 1
        %s264 = scalar_select %p263, %s20, 1
        %p265 = scmp.lt.s32.totalorder %s262, 31
        %s266 = scalar_select %p265, %s262, 31
        %s267 = smul.addr %s264, 32
        %s268 = sadd.s32 %s266, %s267
        %s269 = smul.addr %s268, 8
        %s270 = scalar_lea.vmem %s0, %s269
        %s271 = smul.u32 32, %s21
      $region36: #{non_local_block_forward.3} parent=31 // pred_fallthru
        _
      // Predicated region
      $region37: #{non_local_block_forward.3} parent=31 // pred_check
        %p272 = pneg %p82
      $region38: #{non_local_block_forward.3} parent=31 // pred_check_branch
        %274 = sbr.rel (%p272) target = $region40
      $region39: #{non_local_block_forward.3} parent=31 // pred_region
        %s275 = smul.u32 8, %s22
        %p276 = scmp.lt.s32.totalorder %s20, 1
        %s277 = scalar_select %p276, %s20, 1
        %p278 = scmp.lt.s32.totalorder %s275, 7
        %s279 = scalar_select %p278, %s275, 7
        %s280 = smul.addr %s277, 8
        %s281 = sadd.s32 %s279, %s280
        %s282 = smul.addr %s281, 4
        %s283 = scalar_lea.vmem %s1, %s282
        %s284 = smul.u32 8, %s22
      $region40: #{non_local_block_forward.3} parent=31 // pred_fallthru
        _
      // Predicated region
      $region41: #{non_local_block_forward.3} parent=31 // pred_check
        %p285 = pneg %p110
      $region42: #{non_local_block_forward.3} parent=31 // pred_check_branch
        %287 = sbr.rel (%p285) target = $region44
      $region43: #{non_local_block_forward.3} parent=31 // pred_region
        %s288 = smul.u32 8, %s22
        %p289 = scmp.lt.s32.totalorder %s20, 1
        %s290 = scalar_select %p289, %s20, 1
        %p291 = scmp.lt.s32.totalorder %s288, 7
        %s292 = scalar_select %p291, %s288, 7
        %s293 = smul.addr %s290, 8
        %s294 = sadd.s32 %s292, %s293
        %s295 = smul.addr %s294, 4
        %s296 = scalar_lea.vmem %s2, %s295
        %s297 = smul.u32 8, %s22
      $region44: #{non_local_block_forward.3} parent=31 // pred_fallthru
        _
    $region32: #{non_local_block_forward.3} parent=5 // pred_fallthru
      _
    %p298 = scmp.le.s32.totalorder 1, %s13
    %p299 = scmp.lt.s32.totalorder %s13, 3
    %p300 = pnand %p298, %p299
    %p301 = pneg %p300
    // Predicated region
    $region45: #{non_local_block_forward.3} parent=5 // pred_check
      _
    $region46: #{non_local_block_forward.3} parent=5 // pred_check_branch
      %303 = sbr.rel (%p300) target = $region48
    $region47: #{non_local_block_forward.3} parent=5 // pred_region
      %s304 = ssub.s32 %s13, 1
      %s305 = smul.u32 32, %s24
      %p306 = scmp.lt.s32.totalorder %s23, 1
      %s307 = scalar_select %p306, %s23, 1
      %p308 = scmp.lt.s32.totalorder %s305, 31
      %s309 = scalar_select %p308, %s305, 31
      %s310 = smul.addr %s307, 32
      %s311 = sadd.s32 %s309, %s310
      %s312 = smul.addr %s311, 8
      %s313 = scalar_lea.vmem %s0, %s312
      %p314 = pneg %p60
      %p315 = pneg %p57
      %s316 = smul.u32 8, %s25
      %p317 = scmp.lt.s32.totalorder %s23, 1
      %s318 = scalar_select %p317, %s23, 1
      %p319 = scmp.lt.s32.totalorder %s316, 7
      %s320 = scalar_select %p319, %s316, 7
      %s321 = smul.addr %s318, 8
      %s322 = sadd.s32 %s320, %s321
      %s323 = smul.addr %s322, 4
      %s324 = scalar_lea.vmem %s1, %s323
      %p325 = pneg %p88
      %p326 = pneg %p85
      %s327 = smul.u32 8, %s25
      %p328 = scmp.lt.s32.totalorder %s23, 1
      %s329 = scalar_select %p328, %s23, 1
      %p330 = scmp.lt.s32.totalorder %s327, 7
      %s331 = scalar_select %p330, %s327, 7
      %s332 = smul.addr %s329, 8
      %s333 = sadd.s32 %s331, %s332
      %s334 = smul.addr %s333, 4
      %s335 = scalar_lea.vmem %s2, %s334
      %p336 = pneg %p116
      %p337 = pneg %p113
      %p338 = pneg %p137
      %p339 = pneg %p134
      %p340 = pneg %p158
      %p341 = pneg %p155
      %p342 = pneg %p179
      %p343 = pneg %p176
      %p344 = pneg %p200
      %p345 = pneg %p197
      %p346 = pneg %p228
      %p347 = pneg %p225
      %s348 = smul.u32 32, %s24
      %p349 = scmp.lt.s32.totalorder %s23, 1
      %s350 = scalar_select %p349, %s23, 1
      %p351 = scmp.lt.s32.totalorder %s348, 31
      %s352 = scalar_select %p351, %s348, 31
      %s353 = smul.addr %s350, 32
      %s354 = sadd.s32 %s352, %s353
      %s355 = smul.addr %s354, 8
      %s356 = scalar_lea.vmem %s7, %s355
      %s357 = smul.u32 32, %s24
      %p358 = scmp.lt.s32.totalorder %s23, 1
      %s359 = scalar_select %p358, %s23, 1
      %p360 = scmp.lt.s32.totalorder %s357, 31
      %s361 = scalar_select %p360, %s357, 31
      %s362 = smul.addr %s359, 32
      %s363 = sadd.s32 %s361, %s362
      %s364 = smul.addr %s363, 8
      %s365 = scalar_lea.vmem %s0, %s364
      %s366 = smul.u32 32, %s24
      %s367 = smul.u32 8, %s25
      %p368 = scmp.lt.s32.totalorder %s23, 1
      %s369 = scalar_select %p368, %s23, 1
      %p370 = scmp.lt.s32.totalorder %s367, 7
      %s371 = scalar_select %p370, %s367, 7
      %s372 = smul.addr %s369, 8
      %s373 = sadd.s32 %s371, %s372
      %s374 = smul.addr %s373, 4
      %s375 = scalar_lea.vmem %s1, %s374
      %s376 = smul.u32 8, %s25
      %s377 = smul.u32 8, %s25
      %p378 = scmp.lt.s32.totalorder %s23, 1
      %s379 = scalar_select %p378, %s23, 1
      %p380 = scmp.lt.s32.totalorder %s377, 7
      %s381 = scalar_select %p380, %s377, 7
      %s382 = smul.addr %s379, 8
      %s383 = sadd.s32 %s381, %s382
      %s384 = smul.addr %s383, 4
      %s385 = scalar_lea.vmem %s2, %s384
      %s386 = smul.u32 8, %s25
      %s387 = smul.u32 32, %s24
      %p388 = scmp.lt.s32.totalorder %s23, 1
      %s389 = scalar_select %p388, %s23, 1
      %p390 = scmp.lt.s32.totalorder %s387, 31
      %s391 = scalar_select %p390, %s387, 31
      %s392 = smul.addr %s389, 32
      %s393 = sadd.s32 %s391, %s392
      %s394 = smul.addr %s393, 8
      %s395 = scalar_lea.vmem %s7, %s394
      %s396 = smul.u32 32, %s24
      %p398 = scmp.eq.s32.totalorder %s25, 0
      // Predicated region
      $region49: #{non_local_block_forward.3} parent=47 // pred_check
        %p399 = pneg %p398
      $region50: #{non_local_block_forward.3} parent=47 // pred_check_branch
        %401 = sbr.rel (%p399) target = $region52
      $region51: #{non_local_block_forward.3} parent=47 // pred_region
        %vm402 = vcmask 7168
        %403 = vst.msk [vmem:[#allocation3] sm:$0xff] %vm402, -inf
        %404 = vst.msk [vmem:[#allocation3 + $0x8] sm:$0xff] %vm402, -inf
        %405 = vst.msk [vmem:[#allocation3 + $0x10] sm:$0xff] %vm402, -inf
        %406 = vst.msk [vmem:[#allocation3 + $0x18] sm:$0xff] %vm402, -inf
        %407 = vst.msk [vmem:[#allocation3 + $0x20] sm:$0xff] %vm402, -inf
        %408 = vst.msk [vmem:[#allocation3 + $0x28] sm:$0xff] %vm402, -inf
        %409 = vst.msk [vmem:[#allocation3 + $0x30] sm:$0xff] %vm402, -inf
        %410 = vst.msk [vmem:[#allocation3 + $0x38] sm:$0xff] %vm402, -inf
        %411 = vst.msk [vmem:[#allocation3 + $0x40] sm:$0xff] %vm402, -inf
        %412 = vst.msk [vmem:[#allocation3 + $0x48] sm:$0xff] %vm402, -inf
        %413 = vst.msk [vmem:[#allocation3 + $0x50] sm:$0xff] %vm402, -inf
        %414 = vst.msk [vmem:[#allocation3 + $0x58] sm:$0xff] %vm402, -inf
        %415 = vst.msk [vmem:[#allocation3 + $0x60] sm:$0xff] %vm402, -inf
        %416 = vst.msk [vmem:[#allocation3 + $0x68] sm:$0xff] %vm402, -inf
        %417 = vst.msk [vmem:[#allocation3 + $0x70] sm:$0xff] %vm402, -inf
        %418 = vst.msk [vmem:[#allocation3 + $0x78] sm:$0xff] %vm402, -inf
        %419 = vst.msk [vmem:[#allocation3 + $0x80] sm:$0xff] %vm402, -inf
        %420 = vst.msk [vmem:[#allocation3 + $0x88] sm:$0xff] %vm402, -inf
        %421 = vst.msk [vmem:[#allocation3 + $0x90] sm:$0xff] %vm402, -inf
        %422 = vst.msk [vmem:[#allocation3 + $0x98] sm:$0xff] %vm402, -inf
        %423 = vst.msk [vmem:[#allocation3 + $0xa0] sm:$0xff] %vm402, -inf
        %424 = vst.msk [vmem:[#allocation3 + $0xa8] sm:$0xff] %vm402, -inf
        %425 = vst.msk [vmem:[#allocation3 + $0xb0] sm:$0xff] %vm402, -inf
        %426 = vst.msk [vmem:[#allocation3 + $0xb8] sm:$0xff] %vm402, -inf
        %427 = vst.msk [vmem:[#allocation3 + $0xc0] sm:$0xff] %vm402, -inf
        %428 = vst.msk [vmem:[#allocation3 + $0xc8] sm:$0xff] %vm402, -inf
        %429 = vst.msk [vmem:[#allocation3 + $0xd0] sm:$0xff] %vm402, -inf
        %430 = vst.msk [vmem:[#allocation3 + $0xd8] sm:$0xff] %vm402, -inf
        %431 = vst.msk [vmem:[#allocation3 + $0xe0] sm:$0xff] %vm402, -inf
        %432 = vst.msk [vmem:[#allocation3 + $0xe8] sm:$0xff] %vm402, -inf
        %433 = vst.msk [vmem:[#allocation3 + $0xf0] sm:$0xff] %vm402, -inf
        %434 = vst.msk [vmem:[#allocation3 + $0xf8] sm:$0xff] %vm402, -inf
        %435 = vst.msk [vmem:[#allocation4] sm:$0xff] %vm402, 0.0
        %436 = vst.msk [vmem:[#allocation4 + $0x8] sm:$0xff] %vm402, 0.0
        %437 = vst.msk [vmem:[#allocation4 + $0x10] sm:$0xff] %vm402, 0.0
        %438 = vst.msk [vmem:[#allocation4 + $0x18] sm:$0xff] %vm402, 0.0
        %439 = vst.msk [vmem:[#allocation4 + $0x20] sm:$0xff] %vm402, 0.0
        %440 = vst.msk [vmem:[#allocation4 + $0x28] sm:$0xff] %vm402, 0.0
        %441 = vst.msk [vmem:[#allocation4 + $0x30] sm:$0xff] %vm402, 0.0
        %442 = vst.msk [vmem:[#allocation4 + $0x38] sm:$0xff] %vm402, 0.0
        %443 = vst.msk [vmem:[#allocation4 + $0x40] sm:$0xff] %vm402, 0.0
        %444 = vst.msk [vmem:[#allocation4 + $0x48] sm:$0xff] %vm402, 0.0
        %445 = vst.msk [vmem:[#allocation4 + $0x50] sm:$0xff] %vm402, 0.0
        %446 = vst.msk [vmem:[#allocation4 + $0x58] sm:$0xff] %vm402, 0.0
        %447 = vst.msk [vmem:[#allocation4 + $0x60] sm:$0xff] %vm402, 0.0
        %448 = vst.msk [vmem:[#allocation4 + $0x68] sm:$0xff] %vm402, 0.0
        %449 = vst.msk [vmem:[#allocation4 + $0x70] sm:$0xff] %vm402, 0.0
        %450 = vst.msk [vmem:[#allocation4 + $0x78] sm:$0xff] %vm402, 0.0
        %451 = vst.msk [vmem:[#allocation4 + $0x80] sm:$0xff] %vm402, 0.0
        %452 = vst.msk [vmem:[#allocation4 + $0x88] sm:$0xff] %vm402, 0.0
        %453 = vst.msk [vmem:[#allocation4 + $0x90] sm:$0xff] %vm402, 0.0
        %454 = vst.msk [vmem:[#allocation4 + $0x98] sm:$0xff] %vm402, 0.0
        %455 = vst.msk [vmem:[#allocation4 + $0xa0] sm:$0xff] %vm402, 0.0
        %456 = vst.msk [vmem:[#allocation4 + $0xa8] sm:$0xff] %vm402, 0.0
        %457 = vst.msk [vmem:[#allocation4 + $0xb0] sm:$0xff] %vm402, 0.0
        %458 = vst.msk [vmem:[#allocation4 + $0xb8] sm:$0xff] %vm402, 0.0
        %459 = vst.msk [vmem:[#allocation4 + $0xc0] sm:$0xff] %vm402, 0.0
        %460 = vst.msk [vmem:[#allocation4 + $0xc8] sm:$0xff] %vm402, 0.0
        %461 = vst.msk [vmem:[#allocation4 + $0xd0] sm:$0xff] %vm402, 0.0
        %462 = vst.msk [vmem:[#allocation4 + $0xd8] sm:$0xff] %vm402, 0.0
        %463 = vst.msk [vmem:[#allocation4 + $0xe0] sm:$0xff] %vm402, 0.0
        %464 = vst.msk [vmem:[#allocation4 + $0xe8] sm:$0xff] %vm402, 0.0
        %465 = vst.msk [vmem:[#allocation4 + $0xf0] sm:$0xff] %vm402, 0.0
        %466 = vst.msk [vmem:[#allocation4 + $0xf8] sm:$0xff] %vm402, 0.0
        %vm467 = vcmask 15360
        %468 = vst.msk [vmem:[#allocation5] sm:$0xff] %vm467, 0.0
        %469 = vst.msk [vmem:[#allocation5 + $0x8] sm:$0xff] %vm467, 0.0
        %470 = vst.msk [vmem:[#allocation5 + $0x10] sm:$0xff] %vm467, 0.0
        %471 = vst.msk [vmem:[#allocation5 + $0x18] sm:$0xff] %vm467, 0.0
        %472 = vst.msk [vmem:[#allocation5 + $0x20] sm:$0xff] %vm467, 0.0
        %473 = vst.msk [vmem:[#allocation5 + $0x28] sm:$0xff] %vm467, 0.0
        %474 = vst.msk [vmem:[#allocation5 + $0x30] sm:$0xff] %vm467, 0.0
        %475 = vst.msk [vmem:[#allocation5 + $0x38] sm:$0xff] %vm467, 0.0
        %476 = vst.msk [vmem:[#allocation5 + $0x40] sm:$0xff] %vm467, 0.0
        %477 = vst.msk [vmem:[#allocation5 + $0x48] sm:$0xff] %vm467, 0.0
        %478 = vst.msk [vmem:[#allocation5 + $0x50] sm:$0xff] %vm467, 0.0
        %479 = vst.msk [vmem:[#allocation5 + $0x58] sm:$0xff] %vm467, 0.0
        %480 = vst.msk [vmem:[#allocation5 + $0x60] sm:$0xff] %vm467, 0.0
        %481 = vst.msk [vmem:[#allocation5 + $0x68] sm:$0xff] %vm467, 0.0
        %482 = vst.msk [vmem:[#allocation5 + $0x70] sm:$0xff] %vm467, 0.0
        %483 = vst.msk [vmem:[#allocation5 + $0x78] sm:$0xff] %vm467, 0.0
        %484 = vst.msk [vmem:[#allocation5 + $0x80] sm:$0xff] %vm467, 0.0
        %485 = vst.msk [vmem:[#allocation5 + $0x88] sm:$0xff] %vm467, 0.0
        %486 = vst.msk [vmem:[#allocation5 + $0x90] sm:$0xff] %vm467, 0.0
        %487 = vst.msk [vmem:[#allocation5 + $0x98] sm:$0xff] %vm467, 0.0
        %488 = vst.msk [vmem:[#allocation5 + $0xa0] sm:$0xff] %vm467, 0.0
        %489 = vst.msk [vmem:[#allocation5 + $0xa8] sm:$0xff] %vm467, 0.0
        %490 = vst.msk [vmem:[#allocation5 + $0xb0] sm:$0xff] %vm467, 0.0
        %491 = vst.msk [vmem:[#allocation5 + $0xb8] sm:$0xff] %vm467, 0.0
        %492 = vst.msk [vmem:[#allocation5 + $0xc0] sm:$0xff] %vm467, 0.0
        %493 = vst.msk [vmem:[#allocation5 + $0xc8] sm:$0xff] %vm467, 0.0
        %494 = vst.msk [vmem:[#allocation5 + $0xd0] sm:$0xff] %vm467, 0.0
        %495 = vst.msk [vmem:[#allocation5 + $0xd8] sm:$0xff] %vm467, 0.0
        %496 = vst.msk [vmem:[#allocation5 + $0xe0] sm:$0xff] %vm467, 0.0
        %497 = vst.msk [vmem:[#allocation5 + $0xe8] sm:$0xff] %vm467, 0.0
        %498 = vst.msk [vmem:[#allocation5 + $0xf0] sm:$0xff] %vm467, 0.0
        %499 = vst.msk [vmem:[#allocation5 + $0xf8] sm:$0xff] %vm467, 0.0
        %v500 = vld [vmem:[%s365] sm:$0xff]
        %v501 = vld [vmem:[%s365 + $0x8] sm:$0xff]
        %v502 = vld [vmem:[%s365 + $0x10] sm:$0xff]
        %v503 = vld [vmem:[%s365 + $0x18] sm:$0xff]
        %v504 = vld [vmem:[%s365 + $0x20] sm:$0xff]
        %v505 = vld [vmem:[%s365 + $0x28] sm:$0xff]
        %v506 = vld [vmem:[%s365 + $0x30] sm:$0xff]
        %v507 = vld [vmem:[%s365 + $0x38] sm:$0xff]
        %v508 = vld [vmem:[%s365 + $0x40] sm:$0xff]
        %v509 = vld [vmem:[%s365 + $0x48] sm:$0xff]
        %v510 = vld [vmem:[%s365 + $0x50] sm:$0xff]
        %v511 = vld [vmem:[%s365 + $0x58] sm:$0xff]
        %v512 = vld [vmem:[%s365 + $0x60] sm:$0xff]
        %v513 = vld [vmem:[%s365 + $0x68] sm:$0xff]
        %v514 = vld [vmem:[%s365 + $0x70] sm:$0xff]
        %v515 = vld [vmem:[%s365 + $0x78] sm:$0xff]
        %v516 = vld [vmem:[%s365 + $0x80] sm:$0xff]
        %v517 = vld [vmem:[%s365 + $0x88] sm:$0xff]
        %v518 = vld [vmem:[%s365 + $0x90] sm:$0xff]
        %v519 = vld [vmem:[%s365 + $0x98] sm:$0xff]
        %v520 = vld [vmem:[%s365 + $0xa0] sm:$0xff]
        %v521 = vld [vmem:[%s365 + $0xa8] sm:$0xff]
        %v522 = vld [vmem:[%s365 + $0xb0] sm:$0xff]
        %v523 = vld [vmem:[%s365 + $0xb8] sm:$0xff]
        %v524 = vld [vmem:[%s365 + $0xc0] sm:$0xff]
        %v525 = vld [vmem:[%s365 + $0xc8] sm:$0xff]
        %v526 = vld [vmem:[%s365 + $0xd0] sm:$0xff]
        %v527 = vld [vmem:[%s365 + $0xd8] sm:$0xff]
        %v528 = vld [vmem:[%s365 + $0xe0] sm:$0xff]
        %v529 = vld [vmem:[%s365 + $0xe8] sm:$0xff]
        %v530 = vld [vmem:[%s365 + $0xf0] sm:$0xff]
        %v531 = vld [vmem:[%s365 + $0xf8] sm:$0xff]
        %v532 = vpack.c.bf16 %v501, %v500
        %v533 = vpack.c.bf16 %v503, %v502
        %v534 = vpack.c.bf16 %v505, %v504
        %v535 = vpack.c.bf16 %v507, %v506
        %v536 = vpack.c.bf16 %v509, %v508
        %v537 = vpack.c.bf16 %v511, %v510
        %v538 = vpack.c.bf16 %v513, %v512
        %v539 = vpack.c.bf16 %v515, %v514
        %v540 = vpack.c.bf16 %v517, %v516
        %v541 = vpack.c.bf16 %v519, %v518
        %v542 = vpack.c.bf16 %v521, %v520
        %v543 = vpack.c.bf16 %v523, %v522
        %v544 = vpack.c.bf16 %v525, %v524
        %v545 = vpack.c.bf16 %v527, %v526
        %v546 = vpack.c.bf16 %v529, %v528
        %v547 = vpack.c.bf16 %v531, %v530
        %v548 = vld [vmem:[%s3] sm:$0x3]
        %v549 = vld [vmem:[%s4] sm:$0x1]
        %v551 = vlaneseq
        %v552 = vshrl.u32 %v551, 7
        %v553 = vsub.s32 0, %v552
        %v554 = vrot.slane %v549, %v553
        %vm556 = vcmask 31744
        %v558 = vsel %vm556, %v532, 0
        %v561 = vsel %vm556, %v533, 0
        %v564 = vsel %vm556, %v534, 0
        %v567 = vsel %vm556, %v535, 0
        %v570 = vsel %vm556, %v536, 0
        %v573 = vsel %vm556, %v537, 0
        %v576 = vsel %vm556, %v538, 0
        %v579 = vsel %vm556, %v539, 0
        %v582 = vsel %vm556, %v540, 0
        %v585 = vsel %vm556, %v541, 0
        %v588 = vsel %vm556, %v542, 0
        %v591 = vsel %vm556, %v543, 0
        %v594 = vsel %vm556, %v544, 0
        %v597 = vsel %vm556, %v545, 0
        %v600 = vsel %vm556, %v546, 0
        %v603 = vsel %vm556, %v547, 0
        %vm605 = vcmask 1041408
        %v607 = vsel %vm605, %v548, 0
        %609 = vmatprep.subr.bf16.mxu0 0
        %610 = vmatpush1.bf16.msra.mxu0 %v607
        %611 = vmatprep.subr.bf16.mxu0 0
        %612 = vmatpush1.bf16.msra.mxu0 0
        %613 = vmatprep.subr.bf16.mxu0 0
        %614 = vmatpush1.bf16.msra.mxu0 0
        %615 = vmatprep.subr.bf16.mxu0 0
        %616 = vmatpush1.bf16.msra.mxu0 0
        %617 = vmatprep.subr.bf16.mxu0 0
        %618 = vmatpush1.bf16.msra.mxu0 0
        %619 = vmatprep.subr.bf16.mxu0 0
        %620 = vmatpush1.bf16.msra.mxu0 0
        %621 = vmatprep.subr.bf16.mxu0 0
        %622 = vmatpush1.bf16.msra.mxu0 0
        %623 = vmatprep.subr.bf16.mxu0 0
        %624 = vmatpush1.bf16.msra.mxu0 0
        %625 = vmatprep.subr.bf16.mxu0 0
        %626 = vmatpush1.bf16.msra.mxu0 0
        %627 = vmatprep.subr.bf16.mxu0 0
        %628 = vmatpush1.bf16.msra.mxu0 0
        %629 = vmatprep.subr.bf16.mxu0 0
        %630 = vmatpush1.bf16.msra.mxu0 0
        %631 = vmatprep.subr.bf16.mxu0 0
        %632 = vmatpush1.bf16.msra.mxu0 0
        %633 = vmatprep.subr.bf16.mxu0 0
        %634 = vmatpush1.bf16.msra.mxu0 0
        %635 = vmatprep.subr.bf16.mxu0 0
        %636 = vmatpush1.bf16.msra.mxu0 0
        %637 = vmatprep.subr.bf16.mxu0 0
        %638 = vmatpush1.bf16.msra.mxu0 0
        %639 = vmatprep.subr.bf16.mxu0 0
        %640 = vmatpush1.bf16.msra.mxu0 0
        %641 = vmatprep.mubr.bf16.mxu0 0
        %642 = vmatmul.mubr.bf16.gmra.mrb[0].mxu0 %v558
        %v643 = vpop.f32.mrb[0].mxu0
        %v644 = vadd.f32 %v554, %v643
        %v645 = vpop.f32.mrb[0].mxu0
        %v646 = vpop.f32.mrb[0].mxu0
        %v647 = vadd.f32 %v554, %v646
        %v648 = vpop.f32.mrb[0].mxu0
        %649 = vmatprep.mubr.bf16.mxu0 0
        %650 = vmatmul.mubr.bf16.gmra.mrb[0].mxu0 %v561
        %v651 = vpop.f32.mrb[0].mxu0
        %v652 = vadd.f32 %v554, %v651
        %v653 = vpop.f32.mrb[0].mxu0
        %v654 = vpop.f32.mrb[0].mxu0
        %v655 = vadd.f32 %v554, %v654
        %v656 = vpop.f32.mrb[0].mxu0
        %657 = vmatprep.mubr.bf16.mxu0 0
        %658 = vmatmul.mubr.bf16.gmra.mrb[0].mxu0 %v564
        %v659 = vpop.f32.mrb[0].mxu0
        %v660 = vadd.f32 %v554, %v659
        %v661 = vpop.f32.mrb[0].mxu0
        %v662 = vpop.f32.mrb[0].mxu0
        %v663 = vadd.f32 %v554, %v662
        %v664 = vpop.f32.mrb[0].mxu0
        %665 = vmatprep.mubr.bf16.mxu0 0
        %666 = vmatmul.mubr.bf16.gmra.mrb[0].mxu0 %v567
        %v667 = vpop.f32.mrb[0].mxu0
        %v668 = vadd.f32 %v554, %v667
        %v669 = vpop.f32.mrb[0].mxu0
        %v670 = vpop.f32.mrb[0].mxu0
        %v671 = vadd.f32 %v554, %v670
        %v672 = vpop.f32.mrb[0].mxu0
        %673 = vmatprep.mubr.bf16.mxu0 0
        %674 = vmatmul.mubr.bf16.gmra.mrb[0].mxu0 %v570
        %v675 = vpop.f32.mrb[0].mxu0
        %v676 = vadd.f32 %v554, %v675
        %v677 = vpop.f32.mrb[0].mxu0
        %v678 = vpop.f32.mrb[0].mxu0
        %v679 = vadd.f32 %v554, %v678
        %v680 = vpop.f32.mrb[0].mxu0
        %681 = vmatprep.mubr.bf16.mxu0 0
        %682 = vmatmul.mubr.bf16.gmra.mrb[0].mxu0 %v573
        %v683 = vpop.f32.mrb[0].mxu0
        %v684 = vadd.f32 %v554, %v683
        %v685 = vpop.f32.mrb[0].mxu0
        %v686 = vpop.f32.mrb[0].mxu0
        %v687 = vadd.f32 %v554, %v686
        %v688 = vpop.f32.mrb[0].mxu0
        %689 = vmatprep.mubr.bf16.mxu0 0
        %690 = vmatmul.mubr.bf16.gmra.mrb[0].mxu0 %v576
        %v691 = vpop.f32.mrb[0].mxu0
        %v692 = vadd.f32 %v554, %v691
        %v693 = vpop.f32.mrb[0].mxu0
        %v694 = vpop.f32.mrb[0].mxu0
        %v695 = vadd.f32 %v554, %v694
        %v696 = vpop.f32.mrb[0].mxu0
        %697 = vmatprep.mubr.bf16.mxu0 0
        %698 = vmatmul.mubr.bf16.gmra.mrb[0].mxu0 %v579
        %v699 = vpop.f32.mrb[0].mxu0
        %v700 = vadd.f32 %v554, %v699
        %v701 = vpop.f32.mrb[0].mxu0
        %v702 = vpop.f32.mrb[0].mxu0
        %v703 = vadd.f32 %v554, %v702
        %v704 = vpop.f32.mrb[0].mxu0
        %705 = vmatprep.mubr.bf16.mxu0 0
        %706 = vmatmul.mubr.bf16.gmra.mrb[0].mxu0 %v582
        %v707 = vpop.f32.mrb[0].mxu0
        %v708 = vadd.f32 %v554, %v707
        %v709 = vpop.f32.mrb[0].mxu0
        %v710 = vpop.f32.mrb[0].mxu0
        %v711 = vadd.f32 %v554, %v710
        %v712 = vpop.f32.mrb[0].mxu0
        %713 = vmatprep.mubr.bf16.mxu0 0
        %714 = vmatmul.mubr.bf16.gmra.mrb[0].mxu0 %v585
        %v715 = vpop.f32.mrb[0].mxu0
        %v716 = vadd.f32 %v554, %v715
        %v717 = vpop.f32.mrb[0].mxu0
        %v718 = vpop.f32.mrb[0].mxu0
        %v719 = vadd.f32 %v554, %v718
        %v720 = vpop.f32.mrb[0].mxu0
        %721 = vmatprep.mubr.bf16.mxu0 0
        %722 = vmatmul.mubr.bf16.gmra.mrb[0].mxu0 %v588
        %v723 = vpop.f32.mrb[0].mxu0
        %v724 = vadd.f32 %v554, %v723
        %v725 = vpop.f32.mrb[0].mxu0
        %v726 = vpop.f32.mrb[0].mxu0
        %v727 = vadd.f32 %v554, %v726
        %v728 = vpop.f32.mrb[0].mxu0
        %729 = vmatprep.mubr.bf16.mxu0 0
        %730 = vmatmul.mubr.bf16.gmra.mrb[0].mxu0 %v591
        %v731 = vpop.f32.mrb[0].mxu0
        %v732 = vadd.f32 %v554, %v731
        %v733 = vpop.f32.mrb[0].mxu0
        %v734 = vpop.f32.mrb[0].mxu0
        %v735 = vadd.f32 %v554, %v734
        %v736 = vpop.f32.mrb[0].mxu0
        %737 = vmatprep.mubr.bf16.mxu0 0
        %738 = vmatmul.mubr.bf16.gmra.mrb[0].mxu0 %v594
        %v739 = vpop.f32.mrb[0].mxu0
        %v740 = vadd.f32 %v554, %v739
        %v741 = vpop.f32.mrb[0].mxu0
        %v742 = vpop.f32.mrb[0].mxu0
        %v743 = vadd.f32 %v554, %v742
        %v744 = vpop.f32.mrb[0].mxu0
        %745 = vmatprep.mubr.bf16.mxu0 0
        %746 = vmatmul.mubr.bf16.gmra.mrb[0].mxu0 %v597
        %v747 = vpop.f32.mrb[0].mxu0
        %v748 = vadd.f32 %v554, %v747
        %v749 = vpop.f32.mrb[0].mxu0
        %v750 = vpop.f32.mrb[0].mxu0
        %v751 = vadd.f32 %v554, %v750
        %v752 = vpop.f32.mrb[0].mxu0
        %753 = vmatprep.mubr.bf16.mxu0 0
        %754 = vmatmul.mubr.bf16.gmra.mrb[0].mxu0 %v600
        %v755 = vpop.f32.mrb[0].mxu0
        %v756 = vadd.f32 %v554, %v755
        %v757 = vpop.f32.mrb[0].mxu0
        %v758 = vpop.f32.mrb[0].mxu0
        %v759 = vadd.f32 %v554, %v758
        %v760 = vpop.f32.mrb[0].mxu0
        %761 = vmatprep.mubr.bf16.mxu0 0
        %762 = vmatmul.mubr.bf16.gmra.mrb[0].mxu0 %v603
        %v763 = vpop.f32.mrb[0].mxu0
        %v764 = vadd.f32 %v554, %v763
        %v765 = vpop.f32.mrb[0].mxu0
        %v766 = vpop.f32.mrb[0].mxu0
        %v767 = vadd.f32 %v554, %v766
        %v768 = vpop.f32.mrb[0].mxu0
        %769 = vdwg.mxu0
        %v770 = vpack.c.bf16 %v647, %v644
        %v771 = vpack.c.bf16 %v655, %v652
        %v772 = vpack.c.bf16 %v663, %v660
        %v773 = vpack.c.bf16 %v671, %v668
        %v774 = vpack.c.bf16 %v679, %v676
        %v775 = vpack.c.bf16 %v687, %v684
        %v776 = vpack.c.bf16 %v695, %v692
        %v777 = vpack.c.bf16 %v703, %v700
        %v778 = vpack.c.bf16 %v711, %v708
        %v779 = vpack.c.bf16 %v719, %v716
        %v780 = vpack.c.bf16 %v727, %v724
        %v781 = vpack.c.bf16 %v735, %v732
        %v782 = vpack.c.bf16 %v743, %v740
        %v783 = vpack.c.bf16 %v751, %v748
        %v784 = vpack.c.bf16 %v759, %v756
        %v785 = vpack.c.bf16 %v767, %v764
        %786 = vst.msk [vmem:[#allocation2] sm:$0xff] %vm467, %v770
        %787 = vst.msk [vmem:[#allocation2 + $0x8] sm:$0xff] %vm467, %v771
        %788 = vst.msk [vmem:[#allocation2 + $0x10] sm:$0xff] %vm467, %v772
        %789 = vst.msk [vmem:[#allocation2 + $0x18] sm:$0xff] %vm467, %v773
        %790 = vst.msk [vmem:[#allocation2 + $0x20] sm:$0xff] %vm467, %v774
        %791 = vst.msk [vmem:[#allocation2 + $0x28] sm:$0xff] %vm467, %v775
        %792 = vst.msk [vmem:[#allocation2 + $0x30] sm:$0xff] %vm467, %v776
        %793 = vst.msk [vmem:[#allocation2 + $0x38] sm:$0xff] %vm467, %v777
        %794 = vst.msk [vmem:[#allocation2 + $0x40] sm:$0xff] %vm467, %v778
        %795 = vst.msk [vmem:[#allocation2 + $0x48] sm:$0xff] %vm467, %v779
        %796 = vst.msk [vmem:[#allocation2 + $0x50] sm:$0xff] %vm467, %v780
        %797 = vst.msk [vmem:[#allocation2 + $0x58] sm:$0xff] %vm467, %v781
        %798 = vst.msk [vmem:[#allocation2 + $0x60] sm:$0xff] %vm467, %v782
        %799 = vst.msk [vmem:[#allocation2 + $0x68] sm:$0xff] %vm467, %v783
        %800 = vst.msk [vmem:[#allocation2 + $0x70] sm:$0xff] %vm467, %v784
        %801 = vst.msk [vmem:[#allocation2 + $0x78] sm:$0xff] %vm467, %v785
      $region52: #{non_local_block_forward.3} parent=47 // pred_fallthru
        _
      %v802 = vld [vmem:[#allocation2] sm:$0xff]
      %v803 = vld [vmem:[#allocation2 + $0x8] sm:$0xff]
      %v804 = vld [vmem:[#allocation2 + $0x10] sm:$0xff]
      %v805 = vld [vmem:[#allocation2 + $0x18] sm:$0xff]
      %v806 = vld [vmem:[#allocation2 + $0x20] sm:$0xff]
      %v807 = vld [vmem:[#allocation2 + $0x28] sm:$0xff]
      %v808 = vld [vmem:[#allocation2 + $0x30] sm:$0xff]
      %v809 = vld [vmem:[#allocation2 + $0x38] sm:$0xff]
      %v810 = vld [vmem:[#allocation2 + $0x40] sm:$0xff]
      %v811 = vld [vmem:[#allocation2 + $0x48] sm:$0xff]
      %v812 = vld [vmem:[#allocation2 + $0x50] sm:$0xff]
      %v813 = vld [vmem:[#allocation2 + $0x58] sm:$0xff]
      %v814 = vld [vmem:[#allocation2 + $0x60] sm:$0xff]
      %v815 = vld [vmem:[#allocation2 + $0x68] sm:$0xff]
      %v816 = vld [vmem:[#allocation2 + $0x70] sm:$0xff]
      %v817 = vld [vmem:[#allocation2 + $0x78] sm:$0xff]
      %v818 = vld [vmem:[%s375] sm:$0xf]
      %v819 = vld [vmem:[%s375 + $0x4] sm:$0xf]
      %v820 = vld [vmem:[%s375 + $0x8] sm:$0xf]
      %v821 = vld [vmem:[%s375 + $0xc] sm:$0xf]
      %v822 = vld [vmem:[%s375 + $0x10] sm:$0xf]
      %v823 = vld [vmem:[%s375 + $0x14] sm:$0xf]
      %v824 = vld [vmem:[%s375 + $0x18] sm:$0xf]
      %v825 = vld [vmem:[%s375 + $0x1c] sm:$0xf]
      %v834 = vunpack.c.l.b16 %v818
      %v835 = vunpack.c.l.b16 %v819
      %v836 = vunpack.c.l.b16 %v820
      %v837 = vunpack.c.l.b16 %v821
      %v838 = vunpack.c.l.b16 %v822
      %v839 = vunpack.c.l.b16 %v823
      %v840 = vunpack.c.l.b16 %v824
      %v841 = vunpack.c.l.b16 %v825
      %v842 = vpack.c.b16 %v835, %v834
      %v843 = vpack.c.b16 %v837, %v836
      %v844 = vpack.c.b16 %v839, %v838
      %v845 = vpack.c.b16 %v841, %v840
      %vm846 = vcmask 15360
      %v848 = vsel %vm846, %v802, 0
      %v851 = vsel %vm846, %v803, 0
      %v854 = vsel %vm846, %v804, 0
      %v857 = vsel %vm846, %v805, 0
      %v860 = vsel %vm846, %v806, 0
      %v863 = vsel %vm846, %v807, 0
      %v866 = vsel %vm846, %v808, 0
      %v869 = vsel %vm846, %v809, 0
      %v872 = vsel %vm846, %v810, 0
      %v875 = vsel %vm846, %v811, 0
      %v878 = vsel %vm846, %v812, 0
      %v881 = vsel %vm846, %v813, 0
      %v884 = vsel %vm846, %v814, 0
      %v887 = vsel %vm846, %v815, 0
      %v890 = vsel %vm846, %v816, 0
      %v893 = vsel %vm846, %v817, 0
      %v896 = vsel %vm846, %v842, 0
      %v899 = vsel %vm846, %v843, 0
      %v902 = vsel %vm846, %v844, 0
      %v905 = vsel %vm846, %v845, 0
      %907 = vmatprep.subr.bf16.mxu0 0
      %908 = vmatpush1.bf16.xpose.msra.mxu0 %v896
      %909 = vmatprep.subr.bf16.mxu0 0
      %910 = vmatpush1.bf16.xpose.msra.mxu0 %v899
      %911 = vmatprep.subr.bf16.mxu0 0
      %912 = vmatpush1.bf16.xpose.msra.mxu0 %v902
      %913 = vmatprep.subr.bf16.mxu0 0
      %914 = vmatpush1.bf16.xpose.msra.mxu0 %v905
      %915 = vmatprep.subr.bf16.mxu0 0
      %916 = vmatpush1.bf16.xpose.msra.mxu0 0
      %917 = vmatprep.subr.bf16.mxu0 0
      %918 = vmatpush1.bf16.xpose.msra.mxu0 0
      %919 = vmatprep.subr.bf16.mxu0 0
      %920 = vmatpush1.bf16.xpose.msra.mxu0 0
      %921 = vmatprep.subr.bf16.mxu0 0
      %922 = vmatpush1.bf16.xpose.msra.mxu0 0
      %923 = vmatprep.subr.bf16.mxu0 0
      %924 = vmatpush1.bf16.xpose.msra.mxu0 0
      %925 = vmatprep.subr.bf16.mxu0 0
      %926 = vmatpush1.bf16.xpose.msra.mxu0 0
      %927 = vmatprep.subr.bf16.mxu0 0
      %928 = vmatpush1.bf16.xpose.msra.mxu0 0
      %929 = vmatprep.subr.bf16.mxu0 0
      %930 = vmatpush1.bf16.xpose.msra.mxu0 0
      %931 = vmatprep.subr.bf16.mxu0 0
      %932 = vmatpush1.bf16.xpose.msra.mxu0 0
      %933 = vmatprep.subr.bf16.mxu0 0
      %934 = vmatpush1.bf16.xpose.msra.mxu0 0
      %935 = vmatprep.subr.bf16.mxu0 0
      %936 = vmatpush1.bf16.xpose.msra.mxu0 0
      %937 = vmatprep.subr.bf16.mxu0 0
      %938 = vmatpush1.bf16.xpose.msra.mxu0 0
      %939 = vmatprep.mubr.bf16.mxu0 0
      %940 = vmatmul.mubr.bf16.gmra.mrb[0].mxu0 %v848
      %v941 = vpop.f32.mrb[0].mxu0
      %v942 = vadd.f32 0.0, %v941
      %v943 = vpop.f32.mrb[0].mxu0
      %v944 = vpop.f32.mrb[0].mxu0
      %v945 = vadd.f32 0.0, %v944
      %v946 = vpop.f32.mrb[0].mxu0
      %947 = vmatprep.mubr.bf16.mxu0 0
      %948 = vmatmul.mubr.bf16.gmra.mrb[0].mxu0 %v851
      %v949 = vpop.f32.mrb[0].mxu0
      %v950 = vadd.f32 0.0, %v949
      %v951 = vpop.f32.mrb[0].mxu0
      %v952 = vpop.f32.mrb[0].mxu0
      %v953 = vadd.f32 0.0, %v952
      %v954 = vpop.f32.mrb[0].mxu0
      %955 = vmatprep.mubr.bf16.mxu0 0
      %956 = vmatmul.mubr.bf16.gmra.mrb[0].mxu0 %v854
      %v957 = vpop.f32.mrb[0].mxu0
      %v958 = vadd.f32 0.0, %v957
      %v959 = vpop.f32.mrb[0].mxu0
      %v960 = vpop.f32.mrb[0].mxu0
      %v961 = vadd.f32 0.0, %v960
      %v962 = vpop.f32.mrb[0].mxu0
      %963 = vmatprep.mubr.bf16.mxu0 0
      %964 = vmatmul.mubr.bf16.gmra.mrb[0].mxu0 %v857
      %v965 = vpop.f32.mrb[0].mxu0
      %v966 = vadd.f32 0.0, %v965
      %v967 = vpop.f32.mrb[0].mxu0
      %v968 = vpop.f32.mrb[0].mxu0
      %v969 = vadd.f32 0.0, %v968
      %v970 = vpop.f32.mrb[0].mxu0
      %971 = vmatprep.mubr.bf16.mxu0 0
      %972 = vmatmul.mubr.bf16.gmra.mrb[0].mxu0 %v860
      %v973 = vpop.f32.mrb[0].mxu0
      %v974 = vadd.f32 0.0, %v973
      %v975 = vpop.f32.mrb[0].mxu0
      %v976 = vpop.f32.mrb[0].mxu0
      %v977 = vadd.f32 0.0, %v976
      %v978 = vpop.f32.mrb[0].mxu0
      %979 = vmatprep.mubr.bf16.mxu0 0
      %980 = vmatmul.mubr.bf16.gmra.mrb[0].mxu0 %v863
      %v981 = vpop.f32.mrb[0].mxu0
      %v982 = vadd.f32 0.0, %v981
      %v983 = vpop.f32.mrb[0].mxu0
      %v984 = vpop.f32.mrb[0].mxu0
      %v985 = vadd.f32 0.0, %v984
      %v986 = vpop.f32.mrb[0].mxu0
      %987 = vmatprep.mubr.bf16.mxu0 0
      %988 = vmatmul.mubr.bf16.gmra.mrb[0].mxu0 %v866
      %v989 = vpop.f32.mrb[0].mxu0
      %v990 = vadd.f32 0.0, %v989
      %v991 = vpop.f32.mrb[0].mxu0
      %v992 = vpop.f32.mrb[0].mxu0
      %v993 = vadd.f32 0.0, %v992
      %v994 = vpop.f32.mrb[0].mxu0
      %995 = vmatprep.mubr.bf16.mxu0 0
      %996 = vmatmul.mubr.bf16.gmra.mrb[0].mxu0 %v869
      %v997 = vpop.f32.mrb[0].mxu0
      %v998 = vadd.f32 0.0, %v997
      %v999 = vpop.f32.mrb[0].mxu0
      %v1000 = vpop.f32.mrb[0].mxu0
      %v1001 = vadd.f32 0.0, %v1000
      %v1002 = vpop.f32.mrb[0].mxu0
      %1003 = vmatprep.mubr.bf16.mxu0 0
      %1004 = vmatmul.mubr.bf16.gmra.mrb[0].mxu0 %v872
      %v1005 = vpop.f32.mrb[0].mxu0
      %v1006 = vadd.f32 0.0, %v1005
      %v1007 = vpop.f32.mrb[0].mxu0
      %v1008 = vpop.f32.mrb[0].mxu0
      %v1009 = vadd.f32 0.0, %v1008
      %v1010 = vpop.f32.mrb[0].mxu0
      %1011 = vmatprep.mubr.bf16.mxu0 0
      %1012 = vmatmul.mubr.bf16.gmra.mrb[0].mxu0 %v875
      %v1013 = vpop.f32.mrb[0].mxu0
      %v1014 = vadd.f32 0.0, %v1013
      %v1015 = vpop.f32.mrb[0].mxu0
      %v1016 = vpop.f32.mrb[0].mxu0
      %v1017 = vadd.f32 0.0, %v1016
      %v1018 = vpop.f32.mrb[0].mxu0
      %1019 = vmatprep.mubr.bf16.mxu0 0
      %1020 = vmatmul.mubr.bf16.gmra.mrb[0].mxu0 %v878
      %v1021 = vpop.f32.mrb[0].mxu0
      %v1022 = vadd.f32 0.0, %v1021
      %v1023 = vpop.f32.mrb[0].mxu0
      %v1024 = vpop.f32.mrb[0].mxu0
      %v1025 = vadd.f32 0.0, %v1024
      %v1026 = vpop.f32.mrb[0].mxu0
      %1027 = vmatprep.mubr.bf16.mxu0 0
      %1028 = vmatmul.mubr.bf16.gmra.mrb[0].mxu0 %v881
      %v1029 = vpop.f32.mrb[0].mxu0
      %v1030 = vadd.f32 0.0, %v1029
      %v1031 = vpop.f32.mrb[0].mxu0
      %v1032 = vpop.f32.mrb[0].mxu0
      %v1033 = vadd.f32 0.0, %v1032
      %v1034 = vpop.f32.mrb[0].mxu0
      %1035 = vmatprep.mubr.bf16.mxu0 0
      %1036 = vmatmul.mubr.bf16.gmra.mrb[0].mxu0 %v884
      %v1037 = vpop.f32.mrb[0].mxu0
      %v1038 = vadd.f32 0.0, %v1037
      %v1039 = vpop.f32.mrb[0].mxu0
      %v1040 = vpop.f32.mrb[0].mxu0
      %v1041 = vadd.f32 0.0, %v1040
      %v1042 = vpop.f32.mrb[0].mxu0
      %1043 = vmatprep.mubr.bf16.mxu0 0
      %1044 = vmatmul.mubr.bf16.gmra.mrb[0].mxu0 %v887
      %v1045 = vpop.f32.mrb[0].mxu0
      %v1046 = vadd.f32 0.0, %v1045
      %v1047 = vpop.f32.mrb[0].mxu0
      %v1048 = vpop.f32.mrb[0].mxu0
      %v1049 = vadd.f32 0.0, %v1048
      %v1050 = vpop.f32.mrb[0].mxu0
      %1051 = vmatprep.mubr.bf16.mxu0 0
      %1052 = vmatmul.mubr.bf16.gmra.mrb[0].mxu0 %v890
      %v1053 = vpop.f32.mrb[0].mxu0
      %v1054 = vadd.f32 0.0, %v1053
      %v1055 = vpop.f32.mrb[0].mxu0
      %v1056 = vpop.f32.mrb[0].mxu0
      %v1057 = vadd.f32 0.0, %v1056
      %v1058 = vpop.f32.mrb[0].mxu0
      %1059 = vmatprep.mubr.bf16.mxu0 0
      %1060 = vmatmul.mubr.bf16.gmra.mrb[0].mxu0 %v893
      %v1061 = vpop.f32.mrb[0].mxu0
      %v1062 = vadd.f32 0.0, %v1061
      %v1063 = vpop.f32.mrb[0].mxu0
      %v1064 = vpop.f32.mrb[0].mxu0
      %v1065 = vadd.f32 0.0, %v1064
      %v1066 = vpop.f32.mrb[0].mxu0
      %1067 = vdwg.mxu0
      %v1068 = vld [vmem:[#allocation3] sm:$0xff]
      %v1069 = vld [vmem:[#allocation3 + $0x8] sm:$0xff]
      %v1070 = vld [vmem:[#allocation3 + $0x10] sm:$0xff]
      %v1071 = vld [vmem:[#allocation3 + $0x18] sm:$0xff]
      %v1072 = vld [vmem:[#allocation3 + $0x20] sm:$0xff]
      %v1073 = vld [vmem:[#allocation3 + $0x28] sm:$0xff]
      %v1074 = vld [vmem:[#allocation3 + $0x30] sm:$0xff]
      %v1075 = vld [vmem:[#allocation3 + $0x38] sm:$0xff]
      %v1076 = vld [vmem:[#allocation3 + $0x40] sm:$0xff]
      %v1077 = vld [vmem:[#allocation3 + $0x48] sm:$0xff]
      %v1078 = vld [vmem:[#allocation3 + $0x50] sm:$0xff]
      %v1079 = vld [vmem:[#allocation3 + $0x58] sm:$0xff]
      %v1080 = vld [vmem:[#allocation3 + $0x60] sm:$0xff]
      %v1081 = vld [vmem:[#allocation3 + $0x68] sm:$0xff]
      %v1082 = vld [vmem:[#allocation3 + $0x70] sm:$0xff]
      %v1083 = vld [vmem:[#allocation3 + $0x78] sm:$0xff]
      %v1084 = vld [vmem:[#allocation3 + $0x80] sm:$0xff]
      %v1085 = vld [vmem:[#allocation3 + $0x88] sm:$0xff]
      %v1086 = vld [vmem:[#allocation3 + $0x90] sm:$0xff]
      %v1087 = vld [vmem:[#allocation3 + $0x98] sm:$0xff]
      %v1088 = vld [vmem:[#allocation3 + $0xa0] sm:$0xff]
      %v1089 = vld [vmem:[#allocation3 + $0xa8] sm:$0xff]
      %v1090 = vld [vmem:[#allocation3 + $0xb0] sm:$0xff]
      %v1091 = vld [vmem:[#allocation3 + $0xb8] sm:$0xff]
      %v1092 = vld [vmem:[#allocation3 + $0xc0] sm:$0xff]
      %v1093 = vld [vmem:[#allocation3 + $0xc8] sm:$0xff]
      %v1094 = vld [vmem:[#allocation3 + $0xd0] sm:$0xff]
      %v1095 = vld [vmem:[#allocation3 + $0xd8] sm:$0xff]
      %v1096 = vld [vmem:[#allocation3 + $0xe0] sm:$0xff]
      %v1097 = vld [vmem:[#allocation3 + $0xe8] sm:$0xff]
      %v1098 = vld [vmem:[#allocation3 + $0xf0] sm:$0xff]
      %v1099 = vld [vmem:[#allocation3 + $0xf8] sm:$0xff]
      %vm1100 = vcmask 523264
      %v1101 = vsel %vm1100, %v942, -inf
      %1102 = vmax.xlane.f32.xlu0 %v1101
      %v1103 = vpop.xlane.xlu0 %1102
      %v1104 = vsel %vm1100, %v945, -inf
      %1105 = vmax.xlane.f32.xlu0 %v1104
      %v1106 = vpop.xlane.xlu0 %1105
      %v1107 = vsel %vm1100, %v950, -inf
      %1108 = vmax.xlane.f32.xlu0 %v1107
      %v1109 = vpop.xlane.xlu0 %1108
      %v1110 = vsel %vm1100, %v953, -inf
      %1111 = vmax.xlane.f32.xlu0 %v1110
      %v1112 = vpop.xlane.xlu0 %1111
      %v1113 = vsel %vm1100, %v958, -inf
      %1114 = vmax.xlane.f32.xlu0 %v1113
      %v1115 = vpop.xlane.xlu0 %1114
      %v1116 = vsel %vm1100, %v961, -inf
      %1117 = vmax.xlane.f32.xlu0 %v1116
      %v1118 = vpop.xlane.xlu0 %1117
      %v1119 = vsel %vm1100, %v966, -inf
      %1120 = vmax.xlane.f32.xlu0 %v1119
      %v1121 = vpop.xlane.xlu0 %1120
      %v1122 = vsel %vm1100, %v969, -inf
      %1123 = vmax.xlane.f32.xlu0 %v1122
      %v1124 = vpop.xlane.xlu0 %1123
      %v1125 = vsel %vm1100, %v974, -inf
      %1126 = vmax.xlane.f32.xlu0 %v1125
      %v1127 = vpop.xlane.xlu0 %1126
      %v1128 = vsel %vm1100, %v977, -inf
      %1129 = vmax.xlane.f32.xlu0 %v1128
      %v1130 = vpop.xlane.xlu0 %1129
      %v1131 = vsel %vm1100, %v982, -inf
      %1132 = vmax.xlane.f32.xlu0 %v1131
      %v1133 = vpop.xlane.xlu0 %1132
      %v1134 = vsel %vm1100, %v985, -inf
      %1135 = vmax.xlane.f32.xlu0 %v1134
      %v1136 = vpop.xlane.xlu0 %1135
      %v1137 = vsel %vm1100, %v990, -inf
      %1138 = vmax.xlane.f32.xlu0 %v1137
      %v1139 = vpop.xlane.xlu0 %1138
      %v1140 = vsel %vm1100, %v993, -inf
      %1141 = vmax.xlane.f32.xlu0 %v1140
      %v1142 = vpop.xlane.xlu0 %1141
      %v1143 = vsel %vm1100, %v998, -inf
      %1144 = vmax.xlane.f32.xlu0 %v1143
      %v1145 = vpop.xlane.xlu0 %1144
      %v1146 = vsel %vm1100, %v1001, -inf
      %1147 = vmax.xlane.f32.xlu0 %v1146
      %v1148 = vpop.xlane.xlu0 %1147
      %v1149 = vsel %vm1100, %v1006, -inf
      %1150 = vmax.xlane.f32.xlu0 %v1149
      %v1151 = vpop.xlane.xlu0 %1150
      %v1152 = vsel %vm1100, %v1009, -inf
      %1153 = vmax.xlane.f32.xlu0 %v1152
      %v1154 = vpop.xlane.xlu0 %1153
      %v1155 = vsel %vm1100, %v1014, -inf
      %1156 = vmax.xlane.f32.xlu0 %v1155
      %v1157 = vpop.xlane.xlu0 %1156
      %v1158 = vsel %vm1100, %v1017, -inf
      %1159 = vmax.xlane.f32.xlu0 %v1158
      %v1160 = vpop.xlane.xlu0 %1159
      %v1161 = vsel %vm1100, %v1022, -inf
      %1162 = vmax.xlane.f32.xlu0 %v1161
      %v1163 = vpop.xlane.xlu0 %1162
      %v1164 = vsel %vm1100, %v1025, -inf
      %1165 = vmax.xlane.f32.xlu0 %v1164
      %v1166 = vpop.xlane.xlu0 %1165
      %v1167 = vsel %vm1100, %v1030, -inf
      %1168 = vmax.xlane.f32.xlu0 %v1167
      %v1169 = vpop.xlane.xlu0 %1168
      %v1170 = vsel %vm1100, %v1033, -inf
      %1171 = vmax.xlane.f32.xlu0 %v1170
      %v1172 = vpop.xlane.xlu0 %1171
      %v1173 = vsel %vm1100, %v1038, -inf
      %1174 = vmax.xlane.f32.xlu0 %v1173
      %v1175 = vpop.xlane.xlu0 %1174
      %v1176 = vsel %vm1100, %v1041, -inf
      %1177 = vmax.xlane.f32.xlu0 %v1176
      %v1178 = vpop.xlane.xlu0 %1177
      %v1179 = vsel %vm1100, %v1046, -inf
      %1180 = vmax.xlane.f32.xlu0 %v1179
      %v1181 = vpop.xlane.xlu0 %1180
      %v1182 = vsel %vm1100, %v1049, -inf
      %1183 = vmax.xlane.f32.xlu0 %v1182
      %v1184 = vpop.xlane.xlu0 %1183
      %v1185 = vsel %vm1100, %v1054, -inf
      %1186 = vmax.xlane.f32.xlu0 %v1185
      %v1187 = vpop.xlane.xlu0 %1186
      %v1188 = vsel %vm1100, %v1057, -inf
      %1189 = vmax.xlane.f32.xlu0 %v1188
      %v1190 = vpop.xlane.xlu0 %1189
      %v1191 = vsel %vm1100, %v1062, -inf
      %1192 = vmax.xlane.f32.xlu0 %v1191
      %v1193 = vpop.xlane.xlu0 %1192
      %v1194 = vsel %vm1100, %v1065, -inf
      %1195 = vmax.xlane.f32.xlu0 %v1194
      %v1196 = vpop.xlane.xlu0 %1195
      %v1197 = vmax.f32 %v1068, %v1103
      %v1198 = vmax.f32 %v1069, %v1106
      %v1199 = vmax.f32 %v1070, %v1109
      %v1200 = vmax.f32 %v1071, %v1112
      %v1201 = vmax.f32 %v1072, %v1115
      %v1202 = vmax.f32 %v1073, %v1118
      %v1203 = vmax.f32 %v1074, %v1121
      %v1204 = vmax.f32 %v1075, %v1124
      %v1205 = vmax.f32 %v1076, %v1127
      %v1206 = vmax.f32 %v1077, %v1130
      %v1207 = vmax.f32 %v1078, %v1133
      %v1208 = vmax.f32 %v1079, %v1136
      %v1209 = vmax.f32 %v1080, %v1139
      %v1210 = vmax.f32 %v1081, %v1142
      %v1211 = vmax.f32 %v1082, %v1145
      %v1212 = vmax.f32 %v1083, %v1148
      %v1213 = vmax.f32 %v1084, %v1151
      %v1214 = vmax.f32 %v1085, %v1154
      %v1215 = vmax.f32 %v1086, %v1157
      %v1216 = vmax.f32 %v1087, %v1160
      %v1217 = vmax.f32 %v1088, %v1163
      %v1218 = vmax.f32 %v1089, %v1166
      %v1219 = vmax.f32 %v1090, %v1169
      %v1220 = vmax.f32 %v1091, %v1172
      %v1221 = vmax.f32 %v1092, %v1175
      %v1222 = vmax.f32 %v1093, %v1178
      %v1223 = vmax.f32 %v1094, %v1181
      %v1224 = vmax.f32 %v1095, %v1184
      %v1225 = vmax.f32 %v1096, %v1187
      %v1226 = vmax.f32 %v1097, %v1190
      %v1227 = vmax.f32 %v1098, %v1193
      %v1228 = vmax.f32 %v1099, %v1196
      %v1229 = vsub.f32 %v1068, %v1197
      %v1230 = vsub.f32 %v1069, %v1198
      %v1231 = vsub.f32 %v1070, %v1199
      %v1232 = vsub.f32 %v1071, %v1200
      %v1233 = vsub.f32 %v1072, %v1201
      %v1234 = vsub.f32 %v1073, %v1202
      %v1235 = vsub.f32 %v1074, %v1203
      %v1236 = vsub.f32 %v1075, %v1204
      %v1237 = vsub.f32 %v1076, %v1205
      %v1238 = vsub.f32 %v1077, %v1206
      %v1239 = vsub.f32 %v1078, %v1207
      %v1240 = vsub.f32 %v1079, %v1208
      %v1241 = vsub.f32 %v1080, %v1209
      %v1242 = vsub.f32 %v1081, %v1210
      %v1243 = vsub.f32 %v1082, %v1211
      %v1244 = vsub.f32 %v1083, %v1212
      %v1245 = vsub.f32 %v1084, %v1213
      %v1246 = vsub.f32 %v1085, %v1214
      %v1247 = vsub.f32 %v1086, %v1215
      %v1248 = vsub.f32 %v1087, %v1216
      %v1249 = vsub.f32 %v1088, %v1217
      %v1250 = vsub.f32 %v1089, %v1218
      %v1251 = vsub.f32 %v1090, %v1219
      %v1252 = vsub.f32 %v1091, %v1220
      %v1253 = vsub.f32 %v1092, %v1221
      %v1254 = vsub.f32 %v1093, %v1222
      %v1255 = vsub.f32 %v1094, %v1223
      %v1256 = vsub.f32 %v1095, %v1224
      %v1257 = vsub.f32 %v1096, %v1225
      %v1258 = vsub.f32 %v1097, %v1226
      %v1259 = vsub.f32 %v1098, %v1227
      %v1260 = vsub.f32 %v1099, %v1228
      %v1261 = vmul.f32 %v1229, 1.442695
      %v1262 = vpow.pop %v1261
      %v1263 = vmul.f32 %v1230, 1.442695
      %v1264 = vpow.pop %v1263
      %v1265 = vmul.f32 %v1231, 1.442695
      %v1266 = vpow.pop %v1265
      %v1267 = vmul.f32 %v1232, 1.442695
      %v1268 = vpow.pop %v1267
      %v1269 = vmul.f32 %v1233, 1.442695
      %v1270 = vpow.pop %v1269
      %v1271 = vmul.f32 %v1234, 1.442695
      %v1272 = vpow.pop %v1271
      %v1273 = vmul.f32 %v1235, 1.442695
      %v1274 = vpow.pop %v1273
      %v1275 = vmul.f32 %v1236, 1.442695
      %v1276 = vpow.pop %v1275
      %v1277 = vmul.f32 %v1237, 1.442695
      %v1278 = vpow.pop %v1277
      %v1279 = vmul.f32 %v1238, 1.442695
      %v1280 = vpow.pop %v1279
      %v1281 = vmul.f32 %v1239, 1.442695
      %v1282 = vpow.pop %v1281
      %v1283 = vmul.f32 %v1240, 1.442695
      %v1284 = vpow.pop %v1283
      %v1285 = vmul.f32 %v1241, 1.442695
      %v1286 = vpow.pop %v1285
      %v1287 = vmul.f32 %v1242, 1.442695
      %v1288 = vpow.pop %v1287
      %v1289 = vmul.f32 %v1243, 1.442695
      %v1290 = vpow.pop %v1289
      %v1291 = vmul.f32 %v1244, 1.442695
      %v1292 = vpow.pop %v1291
      %v1293 = vmul.f32 %v1245, 1.442695
      %v1294 = vpow.pop %v1293
      %v1295 = vmul.f32 %v1246, 1.442695
      %v1296 = vpow.pop %v1295
      %v1297 = vmul.f32 %v1247, 1.442695
      %v1298 = vpow.pop %v1297
      %v1299 = vmul.f32 %v1248, 1.442695
      %v1300 = vpow.pop %v1299
      %v1301 = vmul.f32 %v1249, 1.442695
      %v1302 = vpow.pop %v1301
      %v1303 = vmul.f32 %v1250, 1.442695
      %v1304 = vpow.pop %v1303
      %v1305 = vmul.f32 %v1251, 1.442695
      %v1306 = vpow.pop %v1305
      %v1307 = vmul.f32 %v1252, 1.442695
      %v1308 = vpow.pop %v1307
      %v1309 = vmul.f32 %v1253, 1.442695
      %v1310 = vpow.pop %v1309
      %v1311 = vmul.f32 %v1254, 1.442695
      %v1312 = vpow.pop %v1311
      %v1313 = vmul.f32 %v1255, 1.442695
      %v1314 = vpow.pop %v1313
      %v1315 = vmul.f32 %v1256, 1.442695
      %v1316 = vpow.pop %v1315
      %v1317 = vmul.f32 %v1257, 1.442695
      %v1318 = vpow.pop %v1317
      %v1319 = vmul.f32 %v1258, 1.442695
      %v1320 = vpow.pop %v1319
      %v1321 = vmul.f32 %v1259, 1.442695
      %v1322 = vpow.pop %v1321
      %v1323 = vmul.f32 %v1260, 1.442695
      %v1324 = vpow.pop %v1323
      %1326 = vset.pattern.permute.xlu0 0
      %1327 = vperm.xlu0 %1326, %v1197
      %v1328 = vpop.permute.xlu0 %1327
      %1331 = vset.pattern.permute.xlu0 0
      %1332 = vperm.xlu0 %1331, %v1198
      %v1333 = vpop.permute.xlu0 %1332
      %1336 = vset.pattern.permute.xlu0 0
      %1337 = vperm.xlu0 %1336, %v1199
      %v1338 = vpop.permute.xlu0 %1337
      %1341 = vset.pattern.permute.xlu0 0
      %1342 = vperm.xlu0 %1341, %v1200
      %v1343 = vpop.permute.xlu0 %1342
      %1346 = vset.pattern.permute.xlu0 0
      %1347 = vperm.xlu0 %1346, %v1201
      %v1348 = vpop.permute.xlu0 %1347
      %1351 = vset.pattern.permute.xlu0 0
      %1352 = vperm.xlu0 %1351, %v1202
      %v1353 = vpop.permute.xlu0 %1352
      %1356 = vset.pattern.permute.xlu0 0
      %1357 = vperm.xlu0 %1356, %v1203
      %v1358 = vpop.permute.xlu0 %1357
      %1361 = vset.pattern.permute.xlu0 0
      %1362 = vperm.xlu0 %1361, %v1204
      %v1363 = vpop.permute.xlu0 %1362
      %1366 = vset.pattern.permute.xlu0 0
      %1367 = vperm.xlu0 %1366, %v1205
      %v1368 = vpop.permute.xlu0 %1367
      %1371 = vset.pattern.permute.xlu0 0
      %1372 = vperm.xlu0 %1371, %v1206
      %v1373 = vpop.permute.xlu0 %1372
      %1376 = vset.pattern.permute.xlu0 0
      %1377 = vperm.xlu0 %1376, %v1207
      %v1378 = vpop.permute.xlu0 %1377
      %1381 = vset.pattern.permute.xlu0 0
      %1382 = vperm.xlu0 %1381, %v1208
      %v1383 = vpop.permute.xlu0 %1382
      %1386 = vset.pattern.permute.xlu0 0
      %1387 = vperm.xlu0 %1386, %v1209
      %v1388 = vpop.permute.xlu0 %1387
      %1391 = vset.pattern.permute.xlu0 0
      %1392 = vperm.xlu0 %1391, %v1210
      %v1393 = vpop.permute.xlu0 %1392
      %1396 = vset.pattern.permute.xlu0 0
      %1397 = vperm.xlu0 %1396, %v1211
      %v1398 = vpop.permute.xlu0 %1397
      %1401 = vset.pattern.permute.xlu0 0
      %1402 = vperm.xlu0 %1401, %v1212
      %v1403 = vpop.permute.xlu0 %1402
      %1406 = vset.pattern.permute.xlu0 0
      %1407 = vperm.xlu0 %1406, %v1213
      %v1408 = vpop.permute.xlu0 %1407
      %1411 = vset.pattern.permute.xlu0 0
      %1412 = vperm.xlu0 %1411, %v1214
      %v1413 = vpop.permute.xlu0 %1412
      %1416 = vset.pattern.permute.xlu0 0
      %1417 = vperm.xlu0 %1416, %v1215
      %v1418 = vpop.permute.xlu0 %1417
      %1421 = vset.pattern.permute.xlu0 0
      %1422 = vperm.xlu0 %1421, %v1216
      %v1423 = vpop.permute.xlu0 %1422
      %1426 = vset.pattern.permute.xlu0 0
      %1427 = vperm.xlu0 %1426, %v1217
      %v1428 = vpop.permute.xlu0 %1427
      %1431 = vset.pattern.permute.xlu0 0
      %1432 = vperm.xlu0 %1431, %v1218
      %v1433 = vpop.permute.xlu0 %1432
      %1436 = vset.pattern.permute.xlu0 0
      %1437 = vperm.xlu0 %1436, %v1219
      %v1438 = vpop.permute.xlu0 %1437
      %1441 = vset.pattern.permute.xlu0 0
      %1442 = vperm.xlu0 %1441, %v1220
      %v1443 = vpop.permute.xlu0 %1442
      %1446 = vset.pattern.permute.xlu0 0
      %1447 = vperm.xlu0 %1446, %v1221
      %v1448 = vpop.permute.xlu0 %1447
      %1451 = vset.pattern.permute.xlu0 0
      %1452 = vperm.xlu0 %1451, %v1222
      %v1453 = vpop.permute.xlu0 %1452
      %1456 = vset.pattern.permute.xlu0 0
      %1457 = vperm.xlu0 %1456, %v1223
      %v1458 = vpop.permute.xlu0 %1457
      %1461 = vset.pattern.permute.xlu0 0
      %1462 = vperm.xlu0 %1461, %v1224
      %v1463 = vpop.permute.xlu0 %1462
      %1466 = vset.pattern.permute.xlu0 0
      %1467 = vperm.xlu0 %1466, %v1225
      %v1468 = vpop.permute.xlu0 %1467
      %1471 = vset.pattern.permute.xlu0 0
      %1472 = vperm.xlu0 %1471, %v1226
      %v1473 = vpop.permute.xlu0 %1472
      %1476 = vset.pattern.permute.xlu0 0
      %1477 = vperm.xlu0 %1476, %v1227
      %v1478 = vpop.permute.xlu0 %1477
      %1481 = vset.pattern.permute.xlu0 0
      %1482 = vperm.xlu0 %1481, %v1228
      %v1483 = vpop.permute.xlu0 %1482
      %v1485 = vsub.f32 %v942, %v1328
      %v1486 = vsub.f32 %v945, %v1333
      %v1487 = vsub.f32 %v950, %v1338
      %v1488 = vsub.f32 %v953, %v1343
      %v1489 = vsub.f32 %v958, %v1348
      %v1490 = vsub.f32 %v961, %v1353
      %v1491 = vsub.f32 %v966, %v1358
      %v1492 = vsub.f32 %v969, %v1363
      %v1493 = vsub.f32 %v974, %v1368
      %v1494 = vsub.f32 %v977, %v1373
      %v1495 = vsub.f32 %v982, %v1378
      %v1496 = vsub.f32 %v985, %v1383
      %v1497 = vsub.f32 %v990, %v1388
      %v1498 = vsub.f32 %v993, %v1393
      %v1499 = vsub.f32 %v998, %v1398
      %v1500 = vsub.f32 %v1001, %v1403
      %v1501 = vsub.f32 %v1006, %v1408
      %v1502 = vsub.f32 %v1009, %v1413
      %v1503 = vsub.f32 %v1014, %v1418
      %v1504 = vsub.f32 %v1017, %v1423
      %v1505 = vsub.f32 %v1022, %v1428
      %v1506 = vsub.f32 %v1025, %v1433
      %v1507 = vsub.f32 %v1030, %v1438
      %v1508 = vsub.f32 %v1033, %v1443
      %v1509 = vsub.f32 %v1038, %v1448
      %v1510 = vsub.f32 %v1041, %v1453
      %v1511 = vsub.f32 %v1046, %v1458
      %v1512 = vsub.f32 %v1049, %v1463
      %v1513 = vsub.f32 %v1054, %v1468
      %v1514 = vsub.f32 %v1057, %v1473
      %v1515 = vsub.f32 %v1062, %v1478
      %v1516 = vsub.f32 %v1065, %v1483
      %v1517 = vmul.f32 %v1485, 1.442695
      %v1518 = vpow.pop %v1517
      %v1519 = vmul.f32 %v1486, 1.442695
      %v1520 = vpow.pop %v1519
      %v1521 = vmul.f32 %v1487, 1.442695
      %v1522 = vpow.pop %v1521
      %v1523 = vmul.f32 %v1488, 1.442695
      %v1524 = vpow.pop %v1523
      %v1525 = vmul.f32 %v1489, 1.442695
      %v1526 = vpow.pop %v1525
      %v1527 = vmul.f32 %v1490, 1.442695
      %v1528 = vpow.pop %v1527
      %v1529 = vmul.f32 %v1491, 1.442695
      %v1530 = vpow.pop %v1529
      %v1531 = vmul.f32 %v1492, 1.442695
      %v1532 = vpow.pop %v1531
      %v1533 = vmul.f32 %v1493, 1.442695
      %v1534 = vpow.pop %v1533
      %v1535 = vmul.f32 %v1494, 1.442695
      %v1536 = vpow.pop %v1535
      %v1537 = vmul.f32 %v1495, 1.442695
      %v1538 = vpow.pop %v1537
      %v1539 = vmul.f32 %v1496, 1.442695
      %v1540 = vpow.pop %v1539
      %v1541 = vmul.f32 %v1497, 1.442695
      %v1542 = vpow.pop %v1541
      %v1543 = vmul.f32 %v1498, 1.442695
      %v1544 = vpow.pop %v1543
      %v1545 = vmul.f32 %v1499, 1.442695
      %v1546 = vpow.pop %v1545
      %v1547 = vmul.f32 %v1500, 1.442695
      %v1548 = vpow.pop %v1547
      %v1549 = vmul.f32 %v1501, 1.442695
      %v1550 = vpow.pop %v1549
      %v1551 = vmul.f32 %v1502, 1.442695
      %v1552 = vpow.pop %v1551
      %v1553 = vmul.f32 %v1503, 1.442695
      %v1554 = vpow.pop %v1553
      %v1555 = vmul.f32 %v1504, 1.442695
      %v1556 = vpow.pop %v1555
      %v1557 = vmul.f32 %v1505, 1.442695
      %v1558 = vpow.pop %v1557
      %v1559 = vmul.f32 %v1506, 1.442695
      %v1560 = vpow.pop %v1559
      %v1561 = vmul.f32 %v1507, 1.442695
      %v1562 = vpow.pop %v1561
      %v1563 = vmul.f32 %v1508, 1.442695
      %v1564 = vpow.pop %v1563
      %v1565 = vmul.f32 %v1509, 1.442695
      %v1566 = vpow.pop %v1565
      %v1567 = vmul.f32 %v1510, 1.442695
      %v1568 = vpow.pop %v1567
      %v1569 = vmul.f32 %v1511, 1.442695
      %v1570 = vpow.pop %v1569
      %v1571 = vmul.f32 %v1512, 1.442695
      %v1572 = vpow.pop %v1571
      %v1573 = vmul.f32 %v1513, 1.442695
      %v1574 = vpow.pop %v1573
      %v1575 = vmul.f32 %v1514, 1.442695
      %v1576 = vpow.pop %v1575
      %v1577 = vmul.f32 %v1515, 1.442695
      %v1578 = vpow.pop %v1577
      %v1579 = vmul.f32 %v1516, 1.442695
      %v1580 = vpow.pop %v1579
      %v1581 = vld [vmem:[#allocation4] sm:$0xff]
      %v1582 = vld [vmem:[#allocation4 + $0x8] sm:$0xff]
      %v1583 = vld [vmem:[#allocation4 + $0x10] sm:$0xff]
      %v1584 = vld [vmem:[#allocation4 + $0x18] sm:$0xff]
      %v1585 = vld [vmem:[#allocation4 + $0x20] sm:$0xff]
      %v1586 = vld [vmem:[#allocation4 + $0x28] sm:$0xff]
      %v1587 = vld [vmem:[#allocation4 + $0x30] sm:$0xff]
      %v1588 = vld [vmem:[#allocation4 + $0x38] sm:$0xff]
      %v1589 = vld [vmem:[#allocation4 + $0x40] sm:$0xff]
      %v1590 = vld [vmem:[#allocation4 + $0x48] sm:$0xff]
      %v1591 = vld [vmem:[#allocation4 + $0x50] sm:$0xff]
      %v1592 = vld [vmem:[#allocation4 + $0x58] sm:$0xff]
      %v1593 = vld [vmem:[#allocation4 + $0x60] sm:$0xff]
      %v1594 = vld [vmem:[#allocation4 + $0x68] sm:$0xff]
      %v1595 = vld [vmem:[#allocation4 + $0x70] sm:$0xff]
      %v1596 = vld [vmem:[#allocation4 + $0x78] sm:$0xff]
      %v1597 = vld [vmem:[#allocation4 + $0x80] sm:$0xff]
      %v1598 = vld [vmem:[#allocation4 + $0x88] sm:$0xff]
      %v1599 = vld [vmem:[#allocation4 + $0x90] sm:$0xff]
      %v1600 = vld [vmem:[#allocation4 + $0x98] sm:$0xff]
      %v1601 = vld [vmem:[#allocation4 + $0xa0] sm:$0xff]
      %v1602 = vld [vmem:[#allocation4 + $0xa8] sm:$0xff]
      %v1603 = vld [vmem:[#allocation4 + $0xb0] sm:$0xff]
      %v1604 = vld [vmem:[#allocation4 + $0xb8] sm:$0xff]
      %v1605 = vld [vmem:[#allocation4 + $0xc0] sm:$0xff]
      %v1606 = vld [vmem:[#allocation4 + $0xc8] sm:$0xff]
      %v1607 = vld [vmem:[#allocation4 + $0xd0] sm:$0xff]
      %v1608 = vld [vmem:[#allocation4 + $0xd8] sm:$0xff]
      %v1609 = vld [vmem:[#allocation4 + $0xe0] sm:$0xff]
      %v1610 = vld [vmem:[#allocation4 + $0xe8] sm:$0xff]
      %v1611 = vld [vmem:[#allocation4 + $0xf0] sm:$0xff]
      %v1612 = vld [vmem:[#allocation4 + $0xf8] sm:$0xff]
      %v1613 = vmul.f32 %v1262, %v1581
      %v1614 = vmul.f32 %v1264, %v1582
      %v1615 = vmul.f32 %v1266, %v1583
      %v1616 = vmul.f32 %v1268, %v1584
      %v1617 = vmul.f32 %v1270, %v1585
      %v1618 = vmul.f32 %v1272, %v1586
      %v1619 = vmul.f32 %v1274, %v1587
      %v1620 = vmul.f32 %v1276, %v1588
      %v1621 = vmul.f32 %v1278, %v1589
      %v1622 = vmul.f32 %v1280, %v1590
      %v1623 = vmul.f32 %v1282, %v1591
      %v1624 = vmul.f32 %v1284, %v1592
      %v1625 = vmul.f32 %v1286, %v1593
      %v1626 = vmul.f32 %v1288, %v1594
      %v1627 = vmul.f32 %v1290, %v1595
      %v1628 = vmul.f32 %v1292, %v1596
      %v1629 = vmul.f32 %v1294, %v1597
      %v1630 = vmul.f32 %v1296, %v1598
      %v1631 = vmul.f32 %v1298, %v1599
      %v1632 = vmul.f32 %v1300, %v1600
      %v1633 = vmul.f32 %v1302, %v1601
      %v1634 = vmul.f32 %v1304, %v1602
      %v1635 = vmul.f32 %v1306, %v1603
      %v1636 = vmul.f32 %v1308, %v1604
      %v1637 = vmul.f32 %v1310, %v1605
      %v1638 = vmul.f32 %v1312, %v1606
      %v1639 = vmul.f32 %v1314, %v1607
      %v1640 = vmul.f32 %v1316, %v1608
      %v1641 = vmul.f32 %v1318, %v1609
      %v1642 = vmul.f32 %v1320, %v1610
      %v1643 = vmul.f32 %v1322, %v1611
      %v1644 = vmul.f32 %v1324, %v1612
      %v1645 = vsel %vm1100, %v1518, 0.0
      %1646 = vadd.xlane.f32.xlu0 %v1645
      %v1647 = vpop.xlane.xlu0 %1646
      %v1648 = vsel %vm1100, %v1520, 0.0
      %1649 = vadd.xlane.f32.xlu0 %v1648
      %v1650 = vpop.xlane.xlu0 %1649
      %v1651 = vsel %vm1100, %v1522, 0.0
      %1652 = vadd.xlane.f32.xlu0 %v1651
      %v1653 = vpop.xlane.xlu0 %1652
      %v1654 = vsel %vm1100, %v1524, 0.0
      %1655 = vadd.xlane.f32.xlu0 %v1654
      %v1656 = vpop.xlane.xlu0 %1655
      %v1657 = vsel %vm1100, %v1526, 0.0
      %1658 = vadd.xlane.f32.xlu0 %v1657
      %v1659 = vpop.xlane.xlu0 %1658
      %v1660 = vsel %vm1100, %v1528, 0.0
      %1661 = vadd.xlane.f32.xlu0 %v1660
      %v1662 = vpop.xlane.xlu0 %1661
      %v1663 = vsel %vm1100, %v1530, 0.0
      %1664 = vadd.xlane.f32.xlu0 %v1663
      %v1665 = vpop.xlane.xlu0 %1664
      %v1666 = vsel %vm1100, %v1532, 0.0
      %1667 = vadd.xlane.f32.xlu0 %v1666
      %v1668 = vpop.xlane.xlu0 %1667
      %v1669 = vsel %vm1100, %v1534, 0.0
      %1670 = vadd.xlane.f32.xlu0 %v1669
      %v1671 = vpop.xlane.xlu0 %1670
      %v1672 = vsel %vm1100, %v1536, 0.0
      %1673 = vadd.xlane.f32.xlu0 %v1672
      %v1674 = vpop.xlane.xlu0 %1673
      %v1675 = vsel %vm1100, %v1538, 0.0
      %1676 = vadd.xlane.f32.xlu0 %v1675
      %v1677 = vpop.xlane.xlu0 %1676
      %v1678 = vsel %vm1100, %v1540, 0.0
      %1679 = vadd.xlane.f32.xlu0 %v1678
      %v1680 = vpop.xlane.xlu0 %1679
      %v1681 = vsel %vm1100, %v1542, 0.0
      %1682 = vadd.xlane.f32.xlu0 %v1681
      %v1683 = vpop.xlane.xlu0 %1682
      %v1684 = vsel %vm1100, %v1544, 0.0
      %1685 = vadd.xlane.f32.xlu0 %v1684
      %v1686 = vpop.xlane.xlu0 %1685
      %v1687 = vsel %vm1100, %v1546, 0.0
      %1688 = vadd.xlane.f32.xlu0 %v1687
      %v1689 = vpop.xlane.xlu0 %1688
      %v1690 = vsel %vm1100, %v1548, 0.0
      %1691 = vadd.xlane.f32.xlu0 %v1690
      %v1692 = vpop.xlane.xlu0 %1691
      %v1693 = vsel %vm1100, %v1550, 0.0
      %1694 = vadd.xlane.f32.xlu0 %v1693
      %v1695 = vpop.xlane.xlu0 %1694
      %v1696 = vsel %vm1100, %v1552, 0.0
      %1697 = vadd.xlane.f32.xlu0 %v1696
      %v1698 = vpop.xlane.xlu0 %1697
      %v1699 = vsel %vm1100, %v1554, 0.0
      %1700 = vadd.xlane.f32.xlu0 %v1699
      %v1701 = vpop.xlane.xlu0 %1700
      %v1702 = vsel %vm1100, %v1556, 0.0
      %1703 = vadd.xlane.f32.xlu0 %v1702
      %v1704 = vpop.xlane.xlu0 %1703
      %v1705 = vsel %vm1100, %v1558, 0.0
      %1706 = vadd.xlane.f32.xlu0 %v1705
      %v1707 = vpop.xlane.xlu0 %1706
      %v1708 = vsel %vm1100, %v1560, 0.0
      %1709 = vadd.xlane.f32.xlu0 %v1708
      %v1710 = vpop.xlane.xlu0 %1709
      %v1711 = vsel %vm1100, %v1562, 0.0
      %1712 = vadd.xlane.f32.xlu0 %v1711
      %v1713 = vpop.xlane.xlu0 %1712
      %v1714 = vsel %vm1100, %v1564, 0.0
      %1715 = vadd.xlane.f32.xlu0 %v1714
      %v1716 = vpop.xlane.xlu0 %1715
      %v1717 = vsel %vm1100, %v1566, 0.0
      %1718 = vadd.xlane.f32.xlu0 %v1717
      %v1719 = vpop.xlane.xlu0 %1718
      %v1720 = vsel %vm1100, %v1568, 0.0
      %1721 = vadd.xlane.f32.xlu0 %v1720
      %v1722 = vpop.xlane.xlu0 %1721
      %v1723 = vsel %vm1100, %v1570, 0.0
      %1724 = vadd.xlane.f32.xlu0 %v1723
      %v1725 = vpop.xlane.xlu0 %1724
      %v1726 = vsel %vm1100, %v1572, 0.0
      %1727 = vadd.xlane.f32.xlu0 %v1726
      %v1728 = vpop.xlane.xlu0 %1727
      %v1729 = vsel %vm1100, %v1574, 0.0
      %1730 = vadd.xlane.f32.xlu0 %v1729
      %v1731 = vpop.xlane.xlu0 %1730
      %v1732 = vsel %vm1100, %v1576, 0.0
      %1733 = vadd.xlane.f32.xlu0 %v1732
      %v1734 = vpop.xlane.xlu0 %1733
      %v1735 = vsel %vm1100, %v1578, 0.0
      %1736 = vadd.xlane.f32.xlu0 %v1735
      %v1737 = vpop.xlane.xlu0 %1736
      %v1738 = vsel %vm1100, %v1580, 0.0
      %1739 = vadd.xlane.f32.xlu0 %v1738
      %v1740 = vpop.xlane.xlu0 %1739
      %v1741 = vadd.f32 %v1613, %v1647
      %v1742 = vadd.f32 %v1614, %v1650
      %v1743 = vadd.f32 %v1615, %v1653
      %v1744 = vadd.f32 %v1616, %v1656
      %v1745 = vadd.f32 %v1617, %v1659
      %v1746 = vadd.f32 %v1618, %v1662
      %v1747 = vadd.f32 %v1619, %v1665
      %v1748 = vadd.f32 %v1620, %v1668
      %v1749 = vadd.f32 %v1621, %v1671
      %v1750 = vadd.f32 %v1622, %v1674
      %v1751 = vadd.f32 %v1623, %v1677
      %v1752 = vadd.f32 %v1624, %v1680
      %v1753 = vadd.f32 %v1625, %v1683
      %v1754 = vadd.f32 %v1626, %v1686
      %v1755 = vadd.f32 %v1627, %v1689
      %v1756 = vadd.f32 %v1628, %v1692
      %v1757 = vadd.f32 %v1629, %v1695
      %v1758 = vadd.f32 %v1630, %v1698
      %v1759 = vadd.f32 %v1631, %v1701
      %v1760 = vadd.f32 %v1632, %v1704
      %v1761 = vadd.f32 %v1633, %v1707
      %v1762 = vadd.f32 %v1634, %v1710
      %v1763 = vadd.f32 %v1635, %v1713
      %v1764 = vadd.f32 %v1636, %v1716
      %v1765 = vadd.f32 %v1637, %v1719
      %v1766 = vadd.f32 %v1638, %v1722
      %v1767 = vadd.f32 %v1639, %v1725
      %v1768 = vadd.f32 %v1640, %v1728
      %v1769 = vadd.f32 %v1641, %v1731
      %v1770 = vadd.f32 %v1642, %v1734
      %v1771 = vadd.f32 %v1643, %v1737
      %v1772 = vadd.f32 %v1644, %v1740
      %vm1773 = vcmask 7168
      %1774 = vst.msk [vmem:[#allocation4] sm:$0xff] %vm1773, %v1741
      %1775 = vst.msk [vmem:[#allocation4 + $0x8] sm:$0xff] %vm1773, %v1742
      %1776 = vst.msk [vmem:[#allocation4 + $0x10] sm:$0xff] %vm1773, %v1743
      %1777 = vst.msk [vmem:[#allocation4 + $0x18] sm:$0xff] %vm1773, %v1744
      %1778 = vst.msk [vmem:[#allocation4 + $0x20] sm:$0xff] %vm1773, %v1745
      %1779 = vst.msk [vmem:[#allocation4 + $0x28] sm:$0xff] %vm1773, %v1746
      %1780 = vst.msk [vmem:[#allocation4 + $0x30] sm:$0xff] %vm1773, %v1747
      %1781 = vst.msk [vmem:[#allocation4 + $0x38] sm:$0xff] %vm1773, %v1748
      %1782 = vst.msk [vmem:[#allocation4 + $0x40] sm:$0xff] %vm1773, %v1749
      %1783 = vst.msk [vmem:[#allocation4 + $0x48] sm:$0xff] %vm1773, %v1750
      %1784 = vst.msk [vmem:[#allocation4 + $0x50] sm:$0xff] %vm1773, %v1751
      %1785 = vst.msk [vmem:[#allocation4 + $0x58] sm:$0xff] %vm1773, %v1752
      %1786 = vst.msk [vmem:[#allocation4 + $0x60] sm:$0xff] %vm1773, %v1753
      %1787 = vst.msk [vmem:[#allocation4 + $0x68] sm:$0xff] %vm1773, %v1754
      %1788 = vst.msk [vmem:[#allocation4 + $0x70] sm:$0xff] %vm1773, %v1755
      %1789 = vst.msk [vmem:[#allocation4 + $0x78] sm:$0xff] %vm1773, %v1756
      %1790 = vst.msk [vmem:[#allocation4 + $0x80] sm:$0xff] %vm1773, %v1757
      %1791 = vst.msk [vmem:[#allocation4 + $0x88] sm:$0xff] %vm1773, %v1758
      %1792 = vst.msk [vmem:[#allocation4 + $0x90] sm:$0xff] %vm1773, %v1759
      %1793 = vst.msk [vmem:[#allocation4 + $0x98] sm:$0xff] %vm1773, %v1760
      %1794 = vst.msk [vmem:[#allocation4 + $0xa0] sm:$0xff] %vm1773, %v1761
      %1795 = vst.msk [vmem:[#allocation4 + $0xa8] sm:$0xff] %vm1773, %v1762
      %1796 = vst.msk [vmem:[#allocation4 + $0xb0] sm:$0xff] %vm1773, %v1763
      %1797 = vst.msk [vmem:[#allocation4 + $0xb8] sm:$0xff] %vm1773, %v1764
      %1798 = vst.msk [vmem:[#allocation4 + $0xc0] sm:$0xff] %vm1773, %v1765
      %1799 = vst.msk [vmem:[#allocation4 + $0xc8] sm:$0xff] %vm1773, %v1766
      %1800 = vst.msk [vmem:[#allocation4 + $0xd0] sm:$0xff] %vm1773, %v1767
      %1801 = vst.msk [vmem:[#allocation4 + $0xd8] sm:$0xff] %vm1773, %v1768
      %1802 = vst.msk [vmem:[#allocation4 + $0xe0] sm:$0xff] %vm1773, %v1769
      %1803 = vst.msk [vmem:[#allocation4 + $0xe8] sm:$0xff] %vm1773, %v1770
      %1804 = vst.msk [vmem:[#allocation4 + $0xf0] sm:$0xff] %vm1773, %v1771
      %1805 = vst.msk [vmem:[#allocation4 + $0xf8] sm:$0xff] %vm1773, %v1772
      %v1806 = vld [vmem:[#allocation5] sm:$0xff]
      %v1807 = vld [vmem:[#allocation5 + $0x8] sm:$0xff]
      %v1808 = vld [vmem:[#allocation5 + $0x10] sm:$0xff]
      %v1809 = vld [vmem:[#allocation5 + $0x18] sm:$0xff]
      %v1810 = vld [vmem:[#allocation5 + $0x20] sm:$0xff]
      %v1811 = vld [vmem:[#allocation5 + $0x28] sm:$0xff]
      %v1812 = vld [vmem:[#allocation5 + $0x30] sm:$0xff]
      %v1813 = vld [vmem:[#allocation5 + $0x38] sm:$0xff]
      %v1814 = vld [vmem:[#allocation5 + $0x40] sm:$0xff]
      %v1815 = vld [vmem:[#allocation5 + $0x48] sm:$0xff]
      %v1816 = vld [vmem:[#allocation5 + $0x50] sm:$0xff]
      %v1817 = vld [vmem:[#allocation5 + $0x58] sm:$0xff]
      %v1818 = vld [vmem:[#allocation5 + $0x60] sm:$0xff]
      %v1819 = vld [vmem:[#allocation5 + $0x68] sm:$0xff]
      %v1820 = vld [vmem:[#allocation5 + $0x70] sm:$0xff]
      %v1821 = vld [vmem:[#allocation5 + $0x78] sm:$0xff]
      %v1822 = vld [vmem:[#allocation5 + $0x80] sm:$0xff]
      %v1823 = vld [vmem:[#allocation5 + $0x88] sm:$0xff]
      %v1824 = vld [vmem:[#allocation5 + $0x90] sm:$0xff]
      %v1825 = vld [vmem:[#allocation5 + $0x98] sm:$0xff]
      %v1826 = vld [vmem:[#allocation5 + $0xa0] sm:$0xff]
      %v1827 = vld [vmem:[#allocation5 + $0xa8] sm:$0xff]
      %v1828 = vld [vmem:[#allocation5 + $0xb0] sm:$0xff]
      %v1829 = vld [vmem:[#allocation5 + $0xb8] sm:$0xff]
      %v1830 = vld [vmem:[#allocation5 + $0xc0] sm:$0xff]
      %v1831 = vld [vmem:[#allocation5 + $0xc8] sm:$0xff]
      %v1832 = vld [vmem:[#allocation5 + $0xd0] sm:$0xff]
      %v1833 = vld [vmem:[#allocation5 + $0xd8] sm:$0xff]
      %v1834 = vld [vmem:[#allocation5 + $0xe0] sm:$0xff]
      %v1835 = vld [vmem:[#allocation5 + $0xe8] sm:$0xff]
      %v1836 = vld [vmem:[#allocation5 + $0xf0] sm:$0xff]
      %v1837 = vld [vmem:[#allocation5 + $0xf8] sm:$0xff]
      %1839 = vset.pattern.permute.xlu0 0
      %1840 = vperm.xlu0 %1839, %v1262
      %v1841 = vpop.permute.xlu0 %1840
      %1844 = vset.pattern.permute.xlu0 0
      %1845 = vperm.xlu0 %1844, %v1264
      %v1846 = vpop.permute.xlu0 %1845
      %1849 = vset.pattern.permute.xlu0 0
      %1850 = vperm.xlu0 %1849, %v1266
      %v1851 = vpop.permute.xlu0 %1850
      %1854 = vset.pattern.permute.xlu0 0
      %1855 = vperm.xlu0 %1854, %v1268
      %v1856 = vpop.permute.xlu0 %1855
      %1859 = vset.pattern.permute.xlu0 0
      %1860 = vperm.xlu0 %1859, %v1270
      %v1861 = vpop.permute.xlu0 %1860
      %1864 = vset.pattern.permute.xlu0 0
      %1865 = vperm.xlu0 %1864, %v1272
      %v1866 = vpop.permute.xlu0 %1865
      %1869 = vset.pattern.permute.xlu0 0
      %1870 = vperm.xlu0 %1869, %v1274
      %v1871 = vpop.permute.xlu0 %1870
      %1874 = vset.pattern.permute.xlu0 0
      %1875 = vperm.xlu0 %1874, %v1276
      %v1876 = vpop.permute.xlu0 %1875
      %1879 = vset.pattern.permute.xlu0 0
      %1880 = vperm.xlu0 %1879, %v1278
      %v1881 = vpop.permute.xlu0 %1880
      %1884 = vset.pattern.permute.xlu0 0
      %1885 = vperm.xlu0 %1884, %v1280
      %v1886 = vpop.permute.xlu0 %1885
      %1889 = vset.pattern.permute.xlu0 0
      %1890 = vperm.xlu0 %1889, %v1282
      %v1891 = vpop.permute.xlu0 %1890
      %1894 = vset.pattern.permute.xlu0 0
      %1895 = vperm.xlu0 %1894, %v1284
      %v1896 = vpop.permute.xlu0 %1895
      %1899 = vset.pattern.permute.xlu0 0
      %1900 = vperm.xlu0 %1899, %v1286
      %v1901 = vpop.permute.xlu0 %1900
      %1904 = vset.pattern.permute.xlu0 0
      %1905 = vperm.xlu0 %1904, %v1288
      %v1906 = vpop.permute.xlu0 %1905
      %1909 = vset.pattern.permute.xlu0 0
      %1910 = vperm.xlu0 %1909, %v1290
      %v1911 = vpop.permute.xlu0 %1910
      %1914 = vset.pattern.permute.xlu0 0
      %1915 = vperm.xlu0 %1914, %v1292
      %v1916 = vpop.permute.xlu0 %1915
      %1919 = vset.pattern.permute.xlu0 0
      %1920 = vperm.xlu0 %1919, %v1294
      %v1921 = vpop.permute.xlu0 %1920
      %1924 = vset.pattern.permute.xlu0 0
      %1925 = vperm.xlu0 %1924, %v1296
      %v1926 = vpop.permute.xlu0 %1925
      %1929 = vset.pattern.permute.xlu0 0
      %1930 = vperm.xlu0 %1929, %v1298
      %v1931 = vpop.permute.xlu0 %1930
      %1934 = vset.pattern.permute.xlu0 0
      %1935 = vperm.xlu0 %1934, %v1300
      %v1936 = vpop.permute.xlu0 %1935
      %1939 = vset.pattern.permute.xlu0 0
      %1940 = vperm.xlu0 %1939, %v1302
      %v1941 = vpop.permute.xlu0 %1940
      %1944 = vset.pattern.permute.xlu0 0
      %1945 = vperm.xlu0 %1944, %v1304
      %v1946 = vpop.permute.xlu0 %1945
      %1949 = vset.pattern.permute.xlu0 0
      %1950 = vperm.xlu0 %1949, %v1306
      %v1951 = vpop.permute.xlu0 %1950
      %1954 = vset.pattern.permute.xlu0 0
      %1955 = vperm.xlu0 %1954, %v1308
      %v1956 = vpop.permute.xlu0 %1955
      %1959 = vset.pattern.permute.xlu0 0
      %1960 = vperm.xlu0 %1959, %v1310
      %v1961 = vpop.permute.xlu0 %1960
      %1964 = vset.pattern.permute.xlu0 0
      %1965 = vperm.xlu0 %1964, %v1312
      %v1966 = vpop.permute.xlu0 %1965
      %1969 = vset.pattern.permute.xlu0 0
      %1970 = vperm.xlu0 %1969, %v1314
      %v1971 = vpop.permute.xlu0 %1970
      %1974 = vset.pattern.permute.xlu0 0
      %1975 = vperm.xlu0 %1974, %v1316
      %v1976 = vpop.permute.xlu0 %1975
      %1979 = vset.pattern.permute.xlu0 0
      %1980 = vperm.xlu0 %1979, %v1318
      %v1981 = vpop.permute.xlu0 %1980
      %1984 = vset.pattern.permute.xlu0 0
      %1985 = vperm.xlu0 %1984, %v1320
      %v1986 = vpop.permute.xlu0 %1985
      %1989 = vset.pattern.permute.xlu0 0
      %1990 = vperm.xlu0 %1989, %v1322
      %v1991 = vpop.permute.xlu0 %1990
      %1994 = vset.pattern.permute.xlu0 0
      %1995 = vperm.xlu0 %1994, %v1324
      %v1996 = vpop.permute.xlu0 %1995
      %v1998 = vmul.f32 %v1841, %v1806
      %v1999 = vmul.f32 %v1846, %v1807
      %v2000 = vmul.f32 %v1851, %v1808
      %v2001 = vmul.f32 %v1856, %v1809
      %v2002 = vmul.f32 %v1861, %v1810
      %v2003 = vmul.f32 %v1866, %v1811
      %v2004 = vmul.f32 %v1871, %v1812
      %v2005 = vmul.f32 %v1876, %v1813
      %v2006 = vmul.f32 %v1881, %v1814
      %v2007 = vmul.f32 %v1886, %v1815
      %v2008 = vmul.f32 %v1891, %v1816
      %v2009 = vmul.f32 %v1896, %v1817
      %v2010 = vmul.f32 %v1901, %v1818
      %v2011 = vmul.f32 %v1906, %v1819
      %v2012 = vmul.f32 %v1911, %v1820
      %v2013 = vmul.f32 %v1916, %v1821
      %v2014 = vmul.f32 %v1921, %v1822
      %v2015 = vmul.f32 %v1926, %v1823
      %v2016 = vmul.f32 %v1931, %v1824
      %v2017 = vmul.f32 %v1936, %v1825
      %v2018 = vmul.f32 %v1941, %v1826
      %v2019 = vmul.f32 %v1946, %v1827
      %v2020 = vmul.f32 %v1951, %v1828
      %v2021 = vmul.f32 %v1956, %v1829
      %v2022 = vmul.f32 %v1961, %v1830
      %v2023 = vmul.f32 %v1966, %v1831
      %v2024 = vmul.f32 %v1971, %v1832
      %v2025 = vmul.f32 %v1976, %v1833
      %v2026 = vmul.f32 %v1981, %v1834
      %v2027 = vmul.f32 %v1986, %v1835
      %v2028 = vmul.f32 %v1991, %v1836
      %v2029 = vmul.f32 %v1996, %v1837
      %v2030 = vpack.c.bf16 %v1520, %v1518
      %v2031 = vpack.c.bf16 %v1524, %v1522
      %v2032 = vpack.c.bf16 %v1528, %v1526
      %v2033 = vpack.c.bf16 %v1532, %v1530
      %v2034 = vpack.c.bf16 %v1536, %v1534
      %v2035 = vpack.c.bf16 %v1540, %v1538
      %v2036 = vpack.c.bf16 %v1544, %v1542
      %v2037 = vpack.c.bf16 %v1548, %v1546
      %v2038 = vpack.c.bf16 %v1552, %v1550
      %v2039 = vpack.c.bf16 %v1556, %v1554
      %v2040 = vpack.c.bf16 %v1560, %v1558
      %v2041 = vpack.c.bf16 %v1564, %v1562
      %v2042 = vpack.c.bf16 %v1568, %v1566
      %v2043 = vpack.c.bf16 %v1572, %v1570
      %v2044 = vpack.c.bf16 %v1576, %v1574
      %v2045 = vpack.c.bf16 %v1580, %v1578
      %v2046 = vld [vmem:[%s385] sm:$0xf]
      %v2047 = vld [vmem:[%s385 + $0x4] sm:$0xf]
      %v2048 = vld [vmem:[%s385 + $0x8] sm:$0xf]
      %v2049 = vld [vmem:[%s385 + $0xc] sm:$0xf]
      %v2050 = vld [vmem:[%s385 + $0x10] sm:$0xf]
      %v2051 = vld [vmem:[%s385 + $0x14] sm:$0xf]
      %v2052 = vld [vmem:[%s385 + $0x18] sm:$0xf]
      %v2053 = vld [vmem:[%s385 + $0x1c] sm:$0xf]
      %v2062 = vunpack.c.l.b16 %v2046
      %v2063 = vunpack.c.l.b16 %v2047
      %v2064 = vunpack.c.l.b16 %v2048
      %v2065 = vunpack.c.l.b16 %v2049
      %v2066 = vunpack.c.l.b16 %v2050
      %v2067 = vunpack.c.l.b16 %v2051
      %v2068 = vunpack.c.l.b16 %v2052
      %v2069 = vunpack.c.l.b16 %v2053
      %v2070 = vpack.c.b16 %v2063, %v2062
      %v2071 = vpack.c.b16 %v2065, %v2064
      %v2072 = vpack.c.b16 %v2067, %v2066
      %v2073 = vpack.c.b16 %v2069, %v2068
      %v2079 = vsel %vm1100, %v2030, 0
      %v2082 = vsel %vm1100, %v2031, 0
      %v2085 = vsel %vm1100, %v2032, 0
      %v2088 = vsel %vm1100, %v2033, 0
      %v2091 = vsel %vm1100, %v2034, 0
      %v2094 = vsel %vm1100, %v2035, 0
      %v2097 = vsel %vm1100, %v2036, 0
      %v2100 = vsel %vm1100, %v2037, 0
      %v2103 = vsel %vm1100, %v2038, 0
      %v2106 = vsel %vm1100, %v2039, 0
      %v2109 = vsel %vm1100, %v2040, 0
      %v2112 = vsel %vm1100, %v2041, 0
      %v2115 = vsel %vm1100, %v2042, 0
      %v2118 = vsel %vm1100, %v2043, 0
      %v2121 = vsel %vm1100, %v2044, 0
      %v2124 = vsel %vm1100, %v2045, 0
      %2126 = vmatprep.subr.bf16.mxu0 0
      %2127 = vmatpush1.bf16.msra.mxu0 %v2070
      %2128 = vmatprep.subr.bf16.mxu0 0
      %2129 = vmatpush1.bf16.msra.mxu0 %v2071
      %2130 = vmatprep.subr.bf16.mxu0 0
      %2131 = vmatpush1.bf16.msra.mxu0 %v2072
      %2132 = vmatprep.subr.bf16.mxu0 0
      %2133 = vmatpush1.bf16.msra.mxu0 %v2073
      %2134 = vmatprep.subr.bf16.mxu0 0
      %2135 = vmatpush1.bf16.msra.mxu0 0
      %2136 = vmatprep.subr.bf16.mxu0 0
      %2137 = vmatpush1.bf16.msra.mxu0 0
      %2138 = vmatprep.subr.bf16.mxu0 0
      %2139 = vmatpush1.bf16.msra.mxu0 0
      %2140 = vmatprep.subr.bf16.mxu0 0
      %2141 = vmatpush1.bf16.msra.mxu0 0
      %2142 = vmatprep.subr.bf16.mxu0 0
      %2143 = vmatpush1.bf16.msra.mxu0 0
      %2144 = vmatprep.subr.bf16.mxu0 0
      %2145 = vmatpush1.bf16.msra.mxu0 0
      %2146 = vmatprep.subr.bf16.mxu0 0
      %2147 = vmatpush1.bf16.msra.mxu0 0
      %2148 = vmatprep.subr.bf16.mxu0 0
      %2149 = vmatpush1.bf16.msra.mxu0 0
      %2150 = vmatprep.subr.bf16.mxu0 0
      %2151 = vmatpush1.bf16.msra.mxu0 0
      %2152 = vmatprep.subr.bf16.mxu0 0
      %2153 = vmatpush1.bf16.msra.mxu0 0
      %2154 = vmatprep.subr.bf16.mxu0 0
      %2155 = vmatpush1.bf16.msra.mxu0 0
      %2156 = vmatprep.subr.bf16.mxu0 0
      %2157 = vmatpush1.bf16.msra.mxu0 0
      %2158 = vmatprep.mubr.bf16.mxu0 0
      %2159 = vmatmul.mubr.bf16.gmra.mrb[0].mxu0 %v2079
      %v2160 = vpop.f32.mrb[0].mxu0
      %v2161 = vadd.f32 0.0, %v2160
      %v2162 = vpop.f32.mrb[0].mxu0
      %v2163 = vpop.f32.mrb[0].mxu0
      %v2164 = vadd.f32 0.0, %v2163
      %v2165 = vpop.f32.mrb[0].mxu0
      %2166 = vmatprep.mubr.bf16.mxu0 0
      %2167 = vmatmul.mubr.bf16.gmra.mrb[0].mxu0 %v2082
      %v2168 = vpop.f32.mrb[0].mxu0
      %v2169 = vadd.f32 0.0, %v2168
      %v2170 = vpop.f32.mrb[0].mxu0
      %v2171 = vpop.f32.mrb[0].mxu0
      %v2172 = vadd.f32 0.0, %v2171
      %v2173 = vpop.f32.mrb[0].mxu0
      %2174 = vmatprep.mubr.bf16.mxu0 0
      %2175 = vmatmul.mubr.bf16.gmra.mrb[0].mxu0 %v2085
      %v2176 = vpop.f32.mrb[0].mxu0
      %v2177 = vadd.f32 0.0, %v2176
      %v2178 = vpop.f32.mrb[0].mxu0
      %v2179 = vpop.f32.mrb[0].mxu0
      %v2180 = vadd.f32 0.0, %v2179
      %v2181 = vpop.f32.mrb[0].mxu0
      %2182 = vmatprep.mubr.bf16.mxu0 0
      %2183 = vmatmul.mubr.bf16.gmra.mrb[0].mxu0 %v2088
      %v2184 = vpop.f32.mrb[0].mxu0
      %v2185 = vadd.f32 0.0, %v2184
      %v2186 = vpop.f32.mrb[0].mxu0
      %v2187 = vpop.f32.mrb[0].mxu0
      %v2188 = vadd.f32 0.0, %v2187
      %v2189 = vpop.f32.mrb[0].mxu0
      %2190 = vmatprep.mubr.bf16.mxu0 0
      %2191 = vmatmul.mubr.bf16.gmra.mrb[0].mxu0 %v2091
      %v2192 = vpop.f32.mrb[0].mxu0
      %v2193 = vadd.f32 0.0, %v2192
      %v2194 = vpop.f32.mrb[0].mxu0
      %v2195 = vpop.f32.mrb[0].mxu0
      %v2196 = vadd.f32 0.0, %v2195
      %v2197 = vpop.f32.mrb[0].mxu0
      %2198 = vmatprep.mubr.bf16.mxu0 0
      %2199 = vmatmul.mubr.bf16.gmra.mrb[0].mxu0 %v2094
      %v2200 = vpop.f32.mrb[0].mxu0
      %v2201 = vadd.f32 0.0, %v2200
      %v2202 = vpop.f32.mrb[0].mxu0
      %v2203 = vpop.f32.mrb[0].mxu0
      %v2204 = vadd.f32 0.0, %v2203
      %v2205 = vpop.f32.mrb[0].mxu0
      %2206 = vmatprep.mubr.bf16.mxu0 0
      %2207 = vmatmul.mubr.bf16.gmra.mrb[0].mxu0 %v2097
      %v2208 = vpop.f32.mrb[0].mxu0
      %v2209 = vadd.f32 0.0, %v2208
      %v2210 = vpop.f32.mrb[0].mxu0
      %v2211 = vpop.f32.mrb[0].mxu0
      %v2212 = vadd.f32 0.0, %v2211
      %v2213 = vpop.f32.mrb[0].mxu0
      %2214 = vmatprep.mubr.bf16.mxu0 0
      %2215 = vmatmul.mubr.bf16.gmra.mrb[0].mxu0 %v2100
      %v2216 = vpop.f32.mrb[0].mxu0
      %v2217 = vadd.f32 0.0, %v2216
      %v2218 = vpop.f32.mrb[0].mxu0
      %v2219 = vpop.f32.mrb[0].mxu0
      %v2220 = vadd.f32 0.0, %v2219
      %v2221 = vpop.f32.mrb[0].mxu0
      %2222 = vmatprep.mubr.bf16.mxu0 0
      %2223 = vmatmul.mubr.bf16.gmra.mrb[0].mxu0 %v2103
      %v2224 = vpop.f32.mrb[0].mxu0
      %v2225 = vadd.f32 0.0, %v2224
      %v2226 = vpop.f32.mrb[0].mxu0
      %v2227 = vpop.f32.mrb[0].mxu0
      %v2228 = vadd.f32 0.0, %v2227
      %v2229 = vpop.f32.mrb[0].mxu0
      %2230 = vmatprep.mubr.bf16.mxu0 0
      %2231 = vmatmul.mubr.bf16.gmra.mrb[0].mxu0 %v2106
      %v2232 = vpop.f32.mrb[0].mxu0
      %v2233 = vadd.f32 0.0, %v2232
      %v2234 = vpop.f32.mrb[0].mxu0
      %v2235 = vpop.f32.mrb[0].mxu0
      %v2236 = vadd.f32 0.0, %v2235
      %v2237 = vpop.f32.mrb[0].mxu0
      %2238 = vmatprep.mubr.bf16.mxu0 0
      %2239 = vmatmul.mubr.bf16.gmra.mrb[0].mxu0 %v2109
      %v2240 = vpop.f32.mrb[0].mxu0
      %v2241 = vadd.f32 0.0, %v2240
      %v2242 = vpop.f32.mrb[0].mxu0
      %v2243 = vpop.f32.mrb[0].mxu0
      %v2244 = vadd.f32 0.0, %v2243
      %v2245 = vpop.f32.mrb[0].mxu0
      %2246 = vmatprep.mubr.bf16.mxu0 0
      %2247 = vmatmul.mubr.bf16.gmra.mrb[0].mxu0 %v2112
      %v2248 = vpop.f32.mrb[0].mxu0
      %v2249 = vadd.f32 0.0, %v2248
      %v2250 = vpop.f32.mrb[0].mxu0
      %v2251 = vpop.f32.mrb[0].mxu0
      %v2252 = vadd.f32 0.0, %v2251
      %v2253 = vpop.f32.mrb[0].mxu0
      %2254 = vmatprep.mubr.bf16.mxu0 0
      %2255 = vmatmul.mubr.bf16.gmra.mrb[0].mxu0 %v2115
      %v2256 = vpop.f32.mrb[0].mxu0
      %v2257 = vadd.f32 0.0, %v2256
      %v2258 = vpop.f32.mrb[0].mxu0
      %v2259 = vpop.f32.mrb[0].mxu0
      %v2260 = vadd.f32 0.0, %v2259
      %v2261 = vpop.f32.mrb[0].mxu0
      %2262 = vmatprep.mubr.bf16.mxu0 0
      %2263 = vmatmul.mubr.bf16.gmra.mrb[0].mxu0 %v2118
      %v2264 = vpop.f32.mrb[0].mxu0
      %v2265 = vadd.f32 0.0, %v2264
      %v2266 = vpop.f32.mrb[0].mxu0
      %v2267 = vpop.f32.mrb[0].mxu0
      %v2268 = vadd.f32 0.0, %v2267
      %v2269 = vpop.f32.mrb[0].mxu0
      %2270 = vmatprep.mubr.bf16.mxu0 0
      %2271 = vmatmul.mubr.bf16.gmra.mrb[0].mxu0 %v2121
      %v2272 = vpop.f32.mrb[0].mxu0
      %v2273 = vadd.f32 0.0, %v2272
      %v2274 = vpop.f32.mrb[0].mxu0
      %v2275 = vpop.f32.mrb[0].mxu0
      %v2276 = vadd.f32 0.0, %v2275
      %v2277 = vpop.f32.mrb[0].mxu0
      %2278 = vmatprep.mubr.bf16.mxu0 0
      %2279 = vmatmul.mubr.bf16.gmra.mrb[0].mxu0 %v2124
      %v2280 = vpop.f32.mrb[0].mxu0
      %v2281 = vadd.f32 0.0, %v2280
      %v2282 = vpop.f32.mrb[0].mxu0
      %v2283 = vpop.f32.mrb[0].mxu0
      %v2284 = vadd.f32 0.0, %v2283
      %v2285 = vpop.f32.mrb[0].mxu0
      %2286 = vdwg.mxu0
      %v2287 = vadd.f32 %v1998, %v2161
      %v2288 = vadd.f32 %v1999, %v2164
      %v2289 = vadd.f32 %v2000, %v2169
      %v2290 = vadd.f32 %v2001, %v2172
      %v2291 = vadd.f32 %v2002, %v2177
      %v2292 = vadd.f32 %v2003, %v2180
      %v2293 = vadd.f32 %v2004, %v2185
      %v2294 = vadd.f32 %v2005, %v2188
      %v2295 = vadd.f32 %v2006, %v2193
      %v2296 = vadd.f32 %v2007, %v2196
      %v2297 = vadd.f32 %v2008, %v2201
      %v2298 = vadd.f32 %v2009, %v2204
      %v2299 = vadd.f32 %v2010, %v2209
      %v2300 = vadd.f32 %v2011, %v2212
      %v2301 = vadd.f32 %v2012, %v2217
      %v2302 = vadd.f32 %v2013, %v2220
      %v2303 = vadd.f32 %v2014, %v2225
      %v2304 = vadd.f32 %v2015, %v2228
      %v2305 = vadd.f32 %v2016, %v2233
      %v2306 = vadd.f32 %v2017, %v2236
      %v2307 = vadd.f32 %v2018, %v2241
      %v2308 = vadd.f32 %v2019, %v2244
      %v2309 = vadd.f32 %v2020, %v2249
      %v2310 = vadd.f32 %v2021, %v2252
      %v2311 = vadd.f32 %v2022, %v2257
      %v2312 = vadd.f32 %v2023, %v2260
      %v2313 = vadd.f32 %v2024, %v2265
      %v2314 = vadd.f32 %v2025, %v2268
      %v2315 = vadd.f32 %v2026, %v2273
      %v2316 = vadd.f32 %v2027, %v2276
      %v2317 = vadd.f32 %v2028, %v2281
      %v2318 = vadd.f32 %v2029, %v2284
      %2319 = vst.msk [vmem:[#allocation5] sm:$0xff] %vm846, %v2287
      %2320 = vst.msk [vmem:[#allocation5 + $0x8] sm:$0xff] %vm846, %v2288
      %2321 = vst.msk [vmem:[#allocation5 + $0x10] sm:$0xff] %vm846, %v2289
      %2322 = vst.msk [vmem:[#allocation5 + $0x18] sm:$0xff] %vm846, %v2290
      %2323 = vst.msk [vmem:[#allocation5 + $0x20] sm:$0xff] %vm846, %v2291
      %2324 = vst.msk [vmem:[#allocation5 + $0x28] sm:$0xff] %vm846, %v2292
      %2325 = vst.msk [vmem:[#allocation5 + $0x30] sm:$0xff] %vm846, %v2293
      %2326 = vst.msk [vmem:[#allocation5 + $0x38] sm:$0xff] %vm846, %v2294
      %2327 = vst.msk [vmem:[#allocation5 + $0x40] sm:$0xff] %vm846, %v2295
      %2328 = vst.msk [vmem:[#allocation5 + $0x48] sm:$0xff] %vm846, %v2296
      %2329 = vst.msk [vmem:[#allocation5 + $0x50] sm:$0xff] %vm846, %v2297
      %2330 = vst.msk [vmem:[#allocation5 + $0x58] sm:$0xff] %vm846, %v2298
      %2331 = vst.msk [vmem:[#allocation5 + $0x60] sm:$0xff] %vm846, %v2299
      %2332 = vst.msk [vmem:[#allocation5 + $0x68] sm:$0xff] %vm846, %v2300
      %2333 = vst.msk [vmem:[#allocation5 + $0x70] sm:$0xff] %vm846, %v2301
      %2334 = vst.msk [vmem:[#allocation5 + $0x78] sm:$0xff] %vm846, %v2302
      %2335 = vst.msk [vmem:[#allocation5 + $0x80] sm:$0xff] %vm846, %v2303
      %2336 = vst.msk [vmem:[#allocation5 + $0x88] sm:$0xff] %vm846, %v2304
      %2337 = vst.msk [vmem:[#allocation5 + $0x90] sm:$0xff] %vm846, %v2305
      %2338 = vst.msk [vmem:[#allocation5 + $0x98] sm:$0xff] %vm846, %v2306
      %2339 = vst.msk [vmem:[#allocation5 + $0xa0] sm:$0xff] %vm846, %v2307
      %2340 = vst.msk [vmem:[#allocation5 + $0xa8] sm:$0xff] %vm846, %v2308
      %2341 = vst.msk [vmem:[#allocation5 + $0xb0] sm:$0xff] %vm846, %v2309
      %2342 = vst.msk [vmem:[#allocation5 + $0xb8] sm:$0xff] %vm846, %v2310
      %2343 = vst.msk [vmem:[#allocation5 + $0xc0] sm:$0xff] %vm846, %v2311
      %2344 = vst.msk [vmem:[#allocation5 + $0xc8] sm:$0xff] %vm846, %v2312
      %2345 = vst.msk [vmem:[#allocation5 + $0xd0] sm:$0xff] %vm846, %v2313
      %2346 = vst.msk [vmem:[#allocation5 + $0xd8] sm:$0xff] %vm846, %v2314
      %2347 = vst.msk [vmem:[#allocation5 + $0xe0] sm:$0xff] %vm846, %v2315
      %2348 = vst.msk [vmem:[#allocation5 + $0xe8] sm:$0xff] %vm846, %v2316
      %2349 = vst.msk [vmem:[#allocation5 + $0xf0] sm:$0xff] %vm846, %v2317
      %2350 = vst.msk [vmem:[#allocation5 + $0xf8] sm:$0xff] %vm846, %v2318
      %2351 = vst.msk [vmem:[#allocation3] sm:$0xff] %vm1773, %v1197
      %2352 = vst.msk [vmem:[#allocation3 + $0x8] sm:$0xff] %vm1773, %v1198
      %2353 = vst.msk [vmem:[#allocation3 + $0x10] sm:$0xff] %vm1773, %v1199
      %2354 = vst.msk [vmem:[#allocation3 + $0x18] sm:$0xff] %vm1773, %v1200
      %2355 = vst.msk [vmem:[#allocation3 + $0x20] sm:$0xff] %vm1773, %v1201
      %2356 = vst.msk [vmem:[#allocation3 + $0x28] sm:$0xff] %vm1773, %v1202
      %2357 = vst.msk [vmem:[#allocation3 + $0x30] sm:$0xff] %vm1773, %v1203
      %2358 = vst.msk [vmem:[#allocation3 + $0x38] sm:$0xff] %vm1773, %v1204
      %2359 = vst.msk [vmem:[#allocation3 + $0x40] sm:$0xff] %vm1773, %v1205
      %2360 = vst.msk [vmem:[#allocation3 + $0x48] sm:$0xff] %vm1773, %v1206
      %2361 = vst.msk [vmem:[#allocation3 + $0x50] sm:$0xff] %vm1773, %v1207
      %2362 = vst.msk [vmem:[#allocation3 + $0x58] sm:$0xff] %vm1773, %v1208
      %2363 = vst.msk [vmem:[#allocation3 + $0x60] sm:$0xff] %vm1773, %v1209
      %2364 = vst.msk [vmem:[#allocation3 + $0x68] sm:$0xff] %vm1773, %v1210
      %2365 = vst.msk [vmem:[#allocation3 + $0x70] sm:$0xff] %vm1773, %v1211
      %2366 = vst.msk [vmem:[#allocation3 + $0x78] sm:$0xff] %vm1773, %v1212
      %2367 = vst.msk [vmem:[#allocation3 + $0x80] sm:$0xff] %vm1773, %v1213
      %2368 = vst.msk [vmem:[#allocation3 + $0x88] sm:$0xff] %vm1773, %v1214
      %2369 = vst.msk [vmem:[#allocation3 + $0x90] sm:$0xff] %vm1773, %v1215
      %2370 = vst.msk [vmem:[#allocation3 + $0x98] sm:$0xff] %vm1773, %v1216
      %2371 = vst.msk [vmem:[#allocation3 + $0xa0] sm:$0xff] %vm1773, %v1217
      %2372 = vst.msk [vmem:[#allocation3 + $0xa8] sm:$0xff] %vm1773, %v1218
      %2373 = vst.msk [vmem:[#allocation3 + $0xb0] sm:$0xff] %vm1773, %v1219
      %2374 = vst.msk [vmem:[#allocation3 + $0xb8] sm:$0xff] %vm1773, %v1220
      %2375 = vst.msk [vmem:[#allocation3 + $0xc0] sm:$0xff] %vm1773, %v1221
      %2376 = vst.msk [vmem:[#allocation3 + $0xc8] sm:$0xff] %vm1773, %v1222
      %2377 = vst.msk [vmem:[#allocation3 + $0xd0] sm:$0xff] %vm1773, %v1223
      %2378 = vst.msk [vmem:[#allocation3 + $0xd8] sm:$0xff] %vm1773, %v1224
      %2379 = vst.msk [vmem:[#allocation3 + $0xe0] sm:$0xff] %vm1773, %v1225
      %2380 = vst.msk [vmem:[#allocation3 + $0xe8] sm:$0xff] %vm1773, %v1226
      %2381 = vst.msk [vmem:[#allocation3 + $0xf0] sm:$0xff] %vm1773, %v1227
      %2382 = vst.msk [vmem:[#allocation3 + $0xf8] sm:$0xff] %vm1773, %v1228
      // Predicated region
      $region53: #{non_local_block_forward.3} parent=47 // pred_check
        %p2383 = pneg %p398
      $region54: #{non_local_block_forward.3} parent=47 // pred_check_branch
        %2385 = sbr.rel (%p2383) target = $region56
      $region55: #{non_local_block_forward.3} parent=47 // pred_region
        %v2386 = vld [vmem:[#allocation5] sm:$0xff]
        %v2387 = vld [vmem:[#allocation5 + $0x8] sm:$0xff]
        %v2388 = vld [vmem:[#allocation5 + $0x10] sm:$0xff]
        %v2389 = vld [vmem:[#allocation5 + $0x18] sm:$0xff]
        %v2390 = vld [vmem:[#allocation5 + $0x20] sm:$0xff]
        %v2391 = vld [vmem:[#allocation5 + $0x28] sm:$0xff]
        %v2392 = vld [vmem:[#allocation5 + $0x30] sm:$0xff]
        %v2393 = vld [vmem:[#allocation5 + $0x38] sm:$0xff]
        %v2394 = vld [vmem:[#allocation5 + $0x40] sm:$0xff]
        %v2395 = vld [vmem:[#allocation5 + $0x48] sm:$0xff]
        %v2396 = vld [vmem:[#allocation5 + $0x50] sm:$0xff]
        %v2397 = vld [vmem:[#allocation5 + $0x58] sm:$0xff]
        %v2398 = vld [vmem:[#allocation5 + $0x60] sm:$0xff]
        %v2399 = vld [vmem:[#allocation5 + $0x68] sm:$0xff]
        %v2400 = vld [vmem:[#allocation5 + $0x70] sm:$0xff]
        %v2401 = vld [vmem:[#allocation5 + $0x78] sm:$0xff]
        %v2402 = vld [vmem:[#allocation5 + $0x80] sm:$0xff]
        %v2403 = vld [vmem:[#allocation5 + $0x88] sm:$0xff]
        %v2404 = vld [vmem:[#allocation5 + $0x90] sm:$0xff]
        %v2405 = vld [vmem:[#allocation5 + $0x98] sm:$0xff]
        %v2406 = vld [vmem:[#allocation5 + $0xa0] sm:$0xff]
        %v2407 = vld [vmem:[#allocation5 + $0xa8] sm:$0xff]
        %v2408 = vld [vmem:[#allocation5 + $0xb0] sm:$0xff]
        %v2409 = vld [vmem:[#allocation5 + $0xb8] sm:$0xff]
        %v2410 = vld [vmem:[#allocation5 + $0xc0] sm:$0xff]
        %v2411 = vld [vmem:[#allocation5 + $0xc8] sm:$0xff]
        %v2412 = vld [vmem:[#allocation5 + $0xd0] sm:$0xff]
        %v2413 = vld [vmem:[#allocation5 + $0xd8] sm:$0xff]
        %v2414 = vld [vmem:[#allocation5 + $0xe0] sm:$0xff]
        %v2415 = vld [vmem:[#allocation5 + $0xe8] sm:$0xff]
        %v2416 = vld [vmem:[#allocation5 + $0xf0] sm:$0xff]
        %v2417 = vld [vmem:[#allocation5 + $0xf8] sm:$0xff]
        %v2418 = vld [vmem:[#allocation4] sm:$0xff]
        %v2419 = vld [vmem:[#allocation4 + $0x8] sm:$0xff]
        %v2420 = vld [vmem:[#allocation4 + $0x10] sm:$0xff]
        %v2421 = vld [vmem:[#allocation4 + $0x18] sm:$0xff]
        %v2422 = vld [vmem:[#allocation4 + $0x20] sm:$0xff]
        %v2423 = vld [vmem:[#allocation4 + $0x28] sm:$0xff]
        %v2424 = vld [vmem:[#allocation4 + $0x30] sm:$0xff]
        %v2425 = vld [vmem:[#allocation4 + $0x38] sm:$0xff]
        %v2426 = vld [vmem:[#allocation4 + $0x40] sm:$0xff]
        %v2427 = vld [vmem:[#allocation4 + $0x48] sm:$0xff]
        %v2428 = vld [vmem:[#allocation4 + $0x50] sm:$0xff]
        %v2429 = vld [vmem:[#allocation4 + $0x58] sm:$0xff]
        %v2430 = vld [vmem:[#allocation4 + $0x60] sm:$0xff]
        %v2431 = vld [vmem:[#allocation4 + $0x68] sm:$0xff]
        %v2432 = vld [vmem:[#allocation4 + $0x70] sm:$0xff]
        %v2433 = vld [vmem:[#allocation4 + $0x78] sm:$0xff]
        %v2434 = vld [vmem:[#allocation4 + $0x80] sm:$0xff]
        %v2435 = vld [vmem:[#allocation4 + $0x88] sm:$0xff]
        %v2436 = vld [vmem:[#allocation4 + $0x90] sm:$0xff]
        %v2437 = vld [vmem:[#allocation4 + $0x98] sm:$0xff]
        %v2438 = vld [vmem:[#allocation4 + $0xa0] sm:$0xff]
        %v2439 = vld [vmem:[#allocation4 + $0xa8] sm:$0xff]
        %v2440 = vld [vmem:[#allocation4 + $0xb0] sm:$0xff]
        %v2441 = vld [vmem:[#allocation4 + $0xb8] sm:$0xff]
        %v2442 = vld [vmem:[#allocation4 + $0xc0] sm:$0xff]
        %v2443 = vld [vmem:[#allocation4 + $0xc8] sm:$0xff]
        %v2444 = vld [vmem:[#allocation4 + $0xd0] sm:$0xff]
        %v2445 = vld [vmem:[#allocation4 + $0xd8] sm:$0xff]
        %v2446 = vld [vmem:[#allocation4 + $0xe0] sm:$0xff]
        %v2447 = vld [vmem:[#allocation4 + $0xe8] sm:$0xff]
        %v2448 = vld [vmem:[#allocation4 + $0xf0] sm:$0xff]
        %v2449 = vld [vmem:[#allocation4 + $0xf8] sm:$0xff]
        %v2450 = vrcp.pop %v2418
        %v2451 = vrcp.pop %v2419
        %v2452 = vrcp.pop %v2420
        %v2453 = vrcp.pop %v2421
        %v2454 = vrcp.pop %v2422
        %v2455 = vrcp.pop %v2423
        %v2456 = vrcp.pop %v2424
        %v2457 = vrcp.pop %v2425
        %v2458 = vrcp.pop %v2426
        %v2459 = vrcp.pop %v2427
        %v2460 = vrcp.pop %v2428
        %v2461 = vrcp.pop %v2429
        %v2462 = vrcp.pop %v2430
        %v2463 = vrcp.pop %v2431
        %v2464 = vrcp.pop %v2432
        %v2465 = vrcp.pop %v2433
        %v2466 = vrcp.pop %v2434
        %v2467 = vrcp.pop %v2435
        %v2468 = vrcp.pop %v2436
        %v2469 = vrcp.pop %v2437
        %v2470 = vrcp.pop %v2438
        %v2471 = vrcp.pop %v2439
        %v2472 = vrcp.pop %v2440
        %v2473 = vrcp.pop %v2441
        %v2474 = vrcp.pop %v2442
        %v2475 = vrcp.pop %v2443
        %v2476 = vrcp.pop %v2444
        %v2477 = vrcp.pop %v2445
        %v2478 = vrcp.pop %v2446
        %v2479 = vrcp.pop %v2447
        %v2480 = vrcp.pop %v2448
        %v2481 = vrcp.pop %v2449
        %2483 = vset.pattern.permute.xlu0 0
        %2484 = vperm.xlu0 %2483, %v2450
        %v2485 = vpop.permute.xlu0 %2484
        %2488 = vset.pattern.permute.xlu0 0
        %2489 = vperm.xlu0 %2488, %v2451
        %v2490 = vpop.permute.xlu0 %2489
        %2493 = vset.pattern.permute.xlu0 0
        %2494 = vperm.xlu0 %2493, %v2452
        %v2495 = vpop.permute.xlu0 %2494
        %2498 = vset.pattern.permute.xlu0 0
        %2499 = vperm.xlu0 %2498, %v2453
        %v2500 = vpop.permute.xlu0 %2499
        %2503 = vset.pattern.permute.xlu0 0
        %2504 = vperm.xlu0 %2503, %v2454
        %v2505 = vpop.permute.xlu0 %2504
        %2508 = vset.pattern.permute.xlu0 0
        %2509 = vperm.xlu0 %2508, %v2455
        %v2510 = vpop.permute.xlu0 %2509
        %2513 = vset.pattern.permute.xlu0 0
        %2514 = vperm.xlu0 %2513, %v2456
        %v2515 = vpop.permute.xlu0 %2514
        %2518 = vset.pattern.permute.xlu0 0
        %2519 = vperm.xlu0 %2518, %v2457
        %v2520 = vpop.permute.xlu0 %2519
        %2523 = vset.pattern.permute.xlu0 0
        %2524 = vperm.xlu0 %2523, %v2458
        %v2525 = vpop.permute.xlu0 %2524
        %2528 = vset.pattern.permute.xlu0 0
        %2529 = vperm.xlu0 %2528, %v2459
        %v2530 = vpop.permute.xlu0 %2529
        %2533 = vset.pattern.permute.xlu0 0
        %2534 = vperm.xlu0 %2533, %v2460
        %v2535 = vpop.permute.xlu0 %2534
        %2538 = vset.pattern.permute.xlu0 0
        %2539 = vperm.xlu0 %2538, %v2461
        %v2540 = vpop.permute.xlu0 %2539
        %2543 = vset.pattern.permute.xlu0 0
        %2544 = vperm.xlu0 %2543, %v2462
        %v2545 = vpop.permute.xlu0 %2544
        %2548 = vset.pattern.permute.xlu0 0
        %2549 = vperm.xlu0 %2548, %v2463
        %v2550 = vpop.permute.xlu0 %2549
        %2553 = vset.pattern.permute.xlu0 0
        %2554 = vperm.xlu0 %2553, %v2464
        %v2555 = vpop.permute.xlu0 %2554
        %2558 = vset.pattern.permute.xlu0 0
        %2559 = vperm.xlu0 %2558, %v2465
        %v2560 = vpop.permute.xlu0 %2559
        %2563 = vset.pattern.permute.xlu0 0
        %2564 = vperm.xlu0 %2563, %v2466
        %v2565 = vpop.permute.xlu0 %2564
        %2568 = vset.pattern.permute.xlu0 0
        %2569 = vperm.xlu0 %2568, %v2467
        %v2570 = vpop.permute.xlu0 %2569
        %2573 = vset.pattern.permute.xlu0 0
        %2574 = vperm.xlu0 %2573, %v2468
        %v2575 = vpop.permute.xlu0 %2574
        %2578 = vset.pattern.permute.xlu0 0
        %2579 = vperm.xlu0 %2578, %v2469
        %v2580 = vpop.permute.xlu0 %2579
        %2583 = vset.pattern.permute.xlu0 0
        %2584 = vperm.xlu0 %2583, %v2470
        %v2585 = vpop.permute.xlu0 %2584
        %2588 = vset.pattern.permute.xlu0 0
        %2589 = vperm.xlu0 %2588, %v2471
        %v2590 = vpop.permute.xlu0 %2589
        %2593 = vset.pattern.permute.xlu0 0
        %2594 = vperm.xlu0 %2593, %v2472
        %v2595 = vpop.permute.xlu0 %2594
        %2598 = vset.pattern.permute.xlu0 0
        %2599 = vperm.xlu0 %2598, %v2473
        %v2600 = vpop.permute.xlu0 %2599
        %2603 = vset.pattern.permute.xlu0 0
        %2604 = vperm.xlu0 %2603, %v2474
        %v2605 = vpop.permute.xlu0 %2604
        %2608 = vset.pattern.permute.xlu0 0
        %2609 = vperm.xlu0 %2608, %v2475
        %v2610 = vpop.permute.xlu0 %2609
        %2613 = vset.pattern.permute.xlu0 0
        %2614 = vperm.xlu0 %2613, %v2476
        %v2615 = vpop.permute.xlu0 %2614
        %2618 = vset.pattern.permute.xlu0 0
        %2619 = vperm.xlu0 %2618, %v2477
        %v2620 = vpop.permute.xlu0 %2619
        %2623 = vset.pattern.permute.xlu0 0
        %2624 = vperm.xlu0 %2623, %v2478
        %v2625 = vpop.permute.xlu0 %2624
        %2628 = vset.pattern.permute.xlu0 0
        %2629 = vperm.xlu0 %2628, %v2479
        %v2630 = vpop.permute.xlu0 %2629
        %2633 = vset.pattern.permute.xlu0 0
        %2634 = vperm.xlu0 %2633, %v2480
        %v2635 = vpop.permute.xlu0 %2634
        %2638 = vset.pattern.permute.xlu0 0
        %2639 = vperm.xlu0 %2638, %v2481
        %v2640 = vpop.permute.xlu0 %2639
        %v2642 = vmul.f32 %v2386, %v2485
        %v2643 = vmul.f32 %v2387, %v2490
        %v2644 = vmul.f32 %v2388, %v2495
        %v2645 = vmul.f32 %v2389, %v2500
        %v2646 = vmul.f32 %v2390, %v2505
        %v2647 = vmul.f32 %v2391, %v2510
        %v2648 = vmul.f32 %v2392, %v2515
        %v2649 = vmul.f32 %v2393, %v2520
        %v2650 = vmul.f32 %v2394, %v2525
        %v2651 = vmul.f32 %v2395, %v2530
        %v2652 = vmul.f32 %v2396, %v2535
        %v2653 = vmul.f32 %v2397, %v2540
        %v2654 = vmul.f32 %v2398, %v2545
        %v2655 = vmul.f32 %v2399, %v2550
        %v2656 = vmul.f32 %v2400, %v2555
        %v2657 = vmul.f32 %v2401, %v2560
        %v2658 = vmul.f32 %v2402, %v2565
        %v2659 = vmul.f32 %v2403, %v2570
        %v2660 = vmul.f32 %v2404, %v2575
        %v2661 = vmul.f32 %v2405, %v2580
        %v2662 = vmul.f32 %v2406, %v2585
        %v2663 = vmul.f32 %v2407, %v2590
        %v2664 = vmul.f32 %v2408, %v2595
        %v2665 = vmul.f32 %v2409, %v2600
        %v2666 = vmul.f32 %v2410, %v2605
        %v2667 = vmul.f32 %v2411, %v2610
        %v2668 = vmul.f32 %v2412, %v2615
        %v2669 = vmul.f32 %v2413, %v2620
        %v2670 = vmul.f32 %v2414, %v2625
        %v2671 = vmul.f32 %v2415, %v2630
        %v2672 = vmul.f32 %v2416, %v2635
        %v2673 = vmul.f32 %v2417, %v2640
        %v2674 = vpack.c.bf16 %v2643, %v2642
        %v2675 = vpack.c.bf16 %v2645, %v2644
        %v2676 = vpack.c.bf16 %v2647, %v2646
        %v2677 = vpack.c.bf16 %v2649, %v2648
        %v2678 = vpack.c.bf16 %v2651, %v2650
        %v2679 = vpack.c.bf16 %v2653, %v2652
        %v2680 = vpack.c.bf16 %v2655, %v2654
        %v2681 = vpack.c.bf16 %v2657, %v2656
        %v2682 = vpack.c.bf16 %v2659, %v2658
        %v2683 = vpack.c.bf16 %v2661, %v2660
        %v2684 = vpack.c.bf16 %v2663, %v2662
        %v2685 = vpack.c.bf16 %v2665, %v2664
        %v2686 = vpack.c.bf16 %v2667, %v2666
        %v2687 = vpack.c.bf16 %v2669, %v2668
        %v2688 = vpack.c.bf16 %v2671, %v2670
        %v2689 = vpack.c.bf16 %v2673, %v2672
        %v2690 = vld [vmem:[%s5] sm:$0x1]
        %v2691 = vld [vmem:[%s6] sm:$0x1]
        %v2693 = vlaneseq
        %v2694 = vshrl.u32 %v2693, 7
        %v2695 = vsub.s32 0, %v2694
        %v2696 = vrot.slane %v2691, %v2695
        %v2699 = vsel %vm846, %v2674, 0
        %v2702 = vsel %vm846, %v2675, 0
        %v2705 = vsel %vm846, %v2676, 0
        %v2708 = vsel %vm846, %v2677, 0
        %v2711 = vsel %vm846, %v2678, 0
        %v2714 = vsel %vm846, %v2679, 0
        %v2717 = vsel %vm846, %v2680, 0
        %v2720 = vsel %vm846, %v2681, 0
        %v2723 = vsel %vm846, %v2682, 0
        %v2726 = vsel %vm846, %v2683, 0
        %v2729 = vsel %vm846, %v2684, 0
        %v2732 = vsel %vm846, %v2685, 0
        %v2735 = vsel %vm846, %v2686, 0
        %v2738 = vsel %vm846, %v2687, 0
        %v2741 = vsel %vm846, %v2688, 0
        %v2744 = vsel %vm846, %v2689, 0
        %vm2746 = vcmask 1040384
        %v2748 = vsel %vm2746, %v2690, 0
        %2750 = vmatprep.subr.bf16.mxu0 0
        %2751 = vmatpush1.bf16.msra.mxu0 %v2748
        %2752 = vmatprep.subr.bf16.mxu0 0
        %2753 = vmatpush1.bf16.msra.mxu0 0
        %2754 = vmatprep.subr.bf16.mxu0 0
        %2755 = vmatpush1.bf16.msra.mxu0 0
        %2756 = vmatprep.subr.bf16.mxu0 0
        %2757 = vmatpush1.bf16.msra.mxu0 0
        %2758 = vmatprep.subr.bf16.mxu0 0
        %2759 = vmatpush1.bf16.msra.mxu0 0
        %2760 = vmatprep.subr.bf16.mxu0 0
        %2761 = vmatpush1.bf16.msra.mxu0 0
        %2762 = vmatprep.subr.bf16.mxu0 0
        %2763 = vmatpush1.bf16.msra.mxu0 0
        %2764 = vmatprep.subr.bf16.mxu0 0
        %2765 = vmatpush1.bf16.msra.mxu0 0
        %2766 = vmatprep.subr.bf16.mxu0 0
        %2767 = vmatpush1.bf16.msra.mxu0 0
        %2768 = vmatprep.subr.bf16.mxu0 0
        %2769 = vmatpush1.bf16.msra.mxu0 0
        %2770 = vmatprep.subr.bf16.mxu0 0
        %2771 = vmatpush1.bf16.msra.mxu0 0
        %2772 = vmatprep.subr.bf16.mxu0 0
        %2773 = vmatpush1.bf16.msra.mxu0 0
        %2774 = vmatprep.subr.bf16.mxu0 0
        %2775 = vmatpush1.bf16.msra.mxu0 0
        %2776 = vmatprep.subr.bf16.mxu0 0
        %2777 = vmatpush1.bf16.msra.mxu0 0
        %2778 = vmatprep.subr.bf16.mxu0 0
        %2779 = vmatpush1.bf16.msra.mxu0 0
        %2780 = vmatprep.subr.bf16.mxu0 0
        %2781 = vmatpush1.bf16.msra.mxu0 0
        %2782 = vmatprep.mubr.bf16.mxu0 0
        %2783 = vmatmul.mubr.bf16.gmra.mrb[0].mxu0 %v2699
        %v2784 = vpop.f32.mrb[0].mxu0
        %v2785 = vadd.f32 %v2696, %v2784
        %v2786 = vpop.f32.mrb[0].mxu0
        %v2787 = vpop.f32.mrb[0].mxu0
        %v2788 = vadd.f32 %v2696, %v2787
        %v2789 = vpop.f32.mrb[0].mxu0
        %2790 = vmatprep.mubr.bf16.mxu0 0
        %2791 = vmatmul.mubr.bf16.gmra.mrb[0].mxu0 %v2702
        %v2792 = vpop.f32.mrb[0].mxu0
        %v2793 = vadd.f32 %v2696, %v2792
        %v2794 = vpop.f32.mrb[0].mxu0
        %v2795 = vpop.f32.mrb[0].mxu0
        %v2796 = vadd.f32 %v2696, %v2795
        %v2797 = vpop.f32.mrb[0].mxu0
        %2798 = vmatprep.mubr.bf16.mxu0 0
        %2799 = vmatmul.mubr.bf16.gmra.mrb[0].mxu0 %v2705
        %v2800 = vpop.f32.mrb[0].mxu0
        %v2801 = vadd.f32 %v2696, %v2800
        %v2802 = vpop.f32.mrb[0].mxu0
        %v2803 = vpop.f32.mrb[0].mxu0
        %v2804 = vadd.f32 %v2696, %v2803
        %v2805 = vpop.f32.mrb[0].mxu0
        %2806 = vmatprep.mubr.bf16.mxu0 0
        %2807 = vmatmul.mubr.bf16.gmra.mrb[0].mxu0 %v2708
        %v2808 = vpop.f32.mrb[0].mxu0
        %v2809 = vadd.f32 %v2696, %v2808
        %v2810 = vpop.f32.mrb[0].mxu0
        %v2811 = vpop.f32.mrb[0].mxu0
        %v2812 = vadd.f32 %v2696, %v2811
        %v2813 = vpop.f32.mrb[0].mxu0
        %2814 = vmatprep.mubr.bf16.mxu0 0
        %2815 = vmatmul.mubr.bf16.gmra.mrb[0].mxu0 %v2711
        %v2816 = vpop.f32.mrb[0].mxu0
        %v2817 = vadd.f32 %v2696, %v2816
        %v2818 = vpop.f32.mrb[0].mxu0
        %v2819 = vpop.f32.mrb[0].mxu0
        %v2820 = vadd.f32 %v2696, %v2819
        %v2821 = vpop.f32.mrb[0].mxu0
        %2822 = vmatprep.mubr.bf16.mxu0 0
        %2823 = vmatmul.mubr.bf16.gmra.mrb[0].mxu0 %v2714
        %v2824 = vpop.f32.mrb[0].mxu0
        %v2825 = vadd.f32 %v2696, %v2824
        %v2826 = vpop.f32.mrb[0].mxu0
        %v2827 = vpop.f32.mrb[0].mxu0
        %v2828 = vadd.f32 %v2696, %v2827
        %v2829 = vpop.f32.mrb[0].mxu0
        %2830 = vmatprep.mubr.bf16.mxu0 0
        %2831 = vmatmul.mubr.bf16.gmra.mrb[0].mxu0 %v2717
        %v2832 = vpop.f32.mrb[0].mxu0
        %v2833 = vadd.f32 %v2696, %v2832
        %v2834 = vpop.f32.mrb[0].mxu0
        %v2835 = vpop.f32.mrb[0].mxu0
        %v2836 = vadd.f32 %v2696, %v2835
        %v2837 = vpop.f32.mrb[0].mxu0
        %2838 = vmatprep.mubr.bf16.mxu0 0
        %2839 = vmatmul.mubr.bf16.gmra.mrb[0].mxu0 %v2720
        %v2840 = vpop.f32.mrb[0].mxu0
        %v2841 = vadd.f32 %v2696, %v2840
        %v2842 = vpop.f32.mrb[0].mxu0
        %v2843 = vpop.f32.mrb[0].mxu0
        %v2844 = vadd.f32 %v2696, %v2843
        %v2845 = vpop.f32.mrb[0].mxu0
        %2846 = vmatprep.mubr.bf16.mxu0 0
        %2847 = vmatmul.mubr.bf16.gmra.mrb[0].mxu0 %v2723
        %v2848 = vpop.f32.mrb[0].mxu0
        %v2849 = vadd.f32 %v2696, %v2848
        %v2850 = vpop.f32.mrb[0].mxu0
        %v2851 = vpop.f32.mrb[0].mxu0
        %v2852 = vadd.f32 %v2696, %v2851
        %v2853 = vpop.f32.mrb[0].mxu0
        %2854 = vmatprep.mubr.bf16.mxu0 0
        %2855 = vmatmul.mubr.bf16.gmra.mrb[0].mxu0 %v2726
        %v2856 = vpop.f32.mrb[0].mxu0
        %v2857 = vadd.f32 %v2696, %v2856
        %v2858 = vpop.f32.mrb[0].mxu0
        %v2859 = vpop.f32.mrb[0].mxu0
        %v2860 = vadd.f32 %v2696, %v2859
        %v2861 = vpop.f32.mrb[0].mxu0
        %2862 = vmatprep.mubr.bf16.mxu0 0
        %2863 = vmatmul.mubr.bf16.gmra.mrb[0].mxu0 %v2729
        %v2864 = vpop.f32.mrb[0].mxu0
        %v2865 = vadd.f32 %v2696, %v2864
        %v2866 = vpop.f32.mrb[0].mxu0
        %v2867 = vpop.f32.mrb[0].mxu0
        %v2868 = vadd.f32 %v2696, %v2867
        %v2869 = vpop.f32.mrb[0].mxu0
        %2870 = vmatprep.mubr.bf16.mxu0 0
        %2871 = vmatmul.mubr.bf16.gmra.mrb[0].mxu0 %v2732
        %v2872 = vpop.f32.mrb[0].mxu0
        %v2873 = vadd.f32 %v2696, %v2872
        %v2874 = vpop.f32.mrb[0].mxu0
        %v2875 = vpop.f32.mrb[0].mxu0
        %v2876 = vadd.f32 %v2696, %v2875
        %v2877 = vpop.f32.mrb[0].mxu0
        %2878 = vmatprep.mubr.bf16.mxu0 0
        %2879 = vmatmul.mubr.bf16.gmra.mrb[0].mxu0 %v2735
        %v2880 = vpop.f32.mrb[0].mxu0
        %v2881 = vadd.f32 %v2696, %v2880
        %v2882 = vpop.f32.mrb[0].mxu0
        %v2883 = vpop.f32.mrb[0].mxu0
        %v2884 = vadd.f32 %v2696, %v2883
        %v2885 = vpop.f32.mrb[0].mxu0
        %2886 = vmatprep.mubr.bf16.mxu0 0
        %2887 = vmatmul.mubr.bf16.gmra.mrb[0].mxu0 %v2738
        %v2888 = vpop.f32.mrb[0].mxu0
        %v2889 = vadd.f32 %v2696, %v2888
        %v2890 = vpop.f32.mrb[0].mxu0
        %v2891 = vpop.f32.mrb[0].mxu0
        %v2892 = vadd.f32 %v2696, %v2891
        %v2893 = vpop.f32.mrb[0].mxu0
        %2894 = vmatprep.mubr.bf16.mxu0 0
        %2895 = vmatmul.mubr.bf16.gmra.mrb[0].mxu0 %v2741
        %v2896 = vpop.f32.mrb[0].mxu0
        %v2897 = vadd.f32 %v2696, %v2896
        %v2898 = vpop.f32.mrb[0].mxu0
        %v2899 = vpop.f32.mrb[0].mxu0
        %v2900 = vadd.f32 %v2696, %v2899
        %v2901 = vpop.f32.mrb[0].mxu0
        %2902 = vmatprep.mubr.bf16.mxu0 0
        %2903 = vmatmul.mubr.bf16.gmra.mrb[0].mxu0 %v2744
        %v2904 = vpop.f32.mrb[0].mxu0
        %v2905 = vadd.f32 %v2696, %v2904
        %v2906 = vpop.f32.mrb[0].mxu0
        %v2907 = vpop.f32.mrb[0].mxu0
        %v2908 = vadd.f32 %v2696, %v2907
        %v2909 = vpop.f32.mrb[0].mxu0
        %2910 = vdwg.mxu0
        %v2911 = vld [vmem:[%s365] sm:$0xff]
        %v2912 = vld [vmem:[%s365 + $0x8] sm:$0xff]
        %v2913 = vld [vmem:[%s365 + $0x10] sm:$0xff]
        %v2914 = vld [vmem:[%s365 + $0x18] sm:$0xff]
        %v2915 = vld [vmem:[%s365 + $0x20] sm:$0xff]
        %v2916 = vld [vmem:[%s365 + $0x28] sm:$0xff]
        %v2917 = vld [vmem:[%s365 + $0x30] sm:$0xff]
        %v2918 = vld [vmem:[%s365 + $0x38] sm:$0xff]
        %v2919 = vld [vmem:[%s365 + $0x40] sm:$0xff]
        %v2920 = vld [vmem:[%s365 + $0x48] sm:$0xff]
        %v2921 = vld [vmem:[%s365 + $0x50] sm:$0xff]
        %v2922 = vld [vmem:[%s365 + $0x58] sm:$0xff]
        %v2923 = vld [vmem:[%s365 + $0x60] sm:$0xff]
        %v2924 = vld [vmem:[%s365 + $0x68] sm:$0xff]
        %v2925 = vld [vmem:[%s365 + $0x70] sm:$0xff]
        %v2926 = vld [vmem:[%s365 + $0x78] sm:$0xff]
        %v2927 = vld [vmem:[%s365 + $0x80] sm:$0xff]
        %v2928 = vld [vmem:[%s365 + $0x88] sm:$0xff]
        %v2929 = vld [vmem:[%s365 + $0x90] sm:$0xff]
        %v2930 = vld [vmem:[%s365 + $0x98] sm:$0xff]
        %v2931 = vld [vmem:[%s365 + $0xa0] sm:$0xff]
        %v2932 = vld [vmem:[%s365 + $0xa8] sm:$0xff]
        %v2933 = vld [vmem:[%s365 + $0xb0] sm:$0xff]
        %v2934 = vld [vmem:[%s365 + $0xb8] sm:$0xff]
        %v2935 = vld [vmem:[%s365 + $0xc0] sm:$0xff]
        %v2936 = vld [vmem:[%s365 + $0xc8] sm:$0xff]
        %v2937 = vld [vmem:[%s365 + $0xd0] sm:$0xff]
        %v2938 = vld [vmem:[%s365 + $0xd8] sm:$0xff]
        %v2939 = vld [vmem:[%s365 + $0xe0] sm:$0xff]
        %v2940 = vld [vmem:[%s365 + $0xe8] sm:$0xff]
        %v2941 = vld [vmem:[%s365 + $0xf0] sm:$0xff]
        %v2942 = vld [vmem:[%s365 + $0xf8] sm:$0xff]
        %v2943 = vadd.f32 %v2785, %v2911
        %v2944 = vadd.f32 %v2788, %v2912
        %v2945 = vadd.f32 %v2793, %v2913
        %v2946 = vadd.f32 %v2796, %v2914
        %v2947 = vadd.f32 %v2801, %v2915
        %v2948 = vadd.f32 %v2804, %v2916
        %v2949 = vadd.f32 %v2809, %v2917
        %v2950 = vadd.f32 %v2812, %v2918
        %v2951 = vadd.f32 %v2817, %v2919
        %v2952 = vadd.f32 %v2820, %v2920
        %v2953 = vadd.f32 %v2825, %v2921
        %v2954 = vadd.f32 %v2828, %v2922
        %v2955 = vadd.f32 %v2833, %v2923
        %v2956 = vadd.f32 %v2836, %v2924
        %v2957 = vadd.f32 %v2841, %v2925
        %v2958 = vadd.f32 %v2844, %v2926
        %v2959 = vadd.f32 %v2849, %v2927
        %v2960 = vadd.f32 %v2852, %v2928
        %v2961 = vadd.f32 %v2857, %v2929
        %v2962 = vadd.f32 %v2860, %v2930
        %v2963 = vadd.f32 %v2865, %v2931
        %v2964 = vadd.f32 %v2868, %v2932
        %v2965 = vadd.f32 %v2873, %v2933
        %v2966 = vadd.f32 %v2876, %v2934
        %v2967 = vadd.f32 %v2881, %v2935
        %v2968 = vadd.f32 %v2884, %v2936
        %v2969 = vadd.f32 %v2889, %v2937
        %v2970 = vadd.f32 %v2892, %v2938
        %v2971 = vadd.f32 %v2897, %v2939
        %v2972 = vadd.f32 %v2900, %v2940
        %v2973 = vadd.f32 %v2905, %v2941
        %v2974 = vadd.f32 %v2908, %v2942
        %vm2975 = vcmask 31744
        %2976 = vst.msk [vmem:[%s395] sm:$0xff] %vm2975, %v2943
        %2977 = vst.msk [vmem:[%s395 + $0x8] sm:$0xff] %vm2975, %v2944
        %2978 = vst.msk [vmem:[%s395 + $0x10] sm:$0xff] %vm2975, %v2945
        %2979 = vst.msk [vmem:[%s395 + $0x18] sm:$0xff] %vm2975, %v2946
        %2980 = vst.msk [vmem:[%s395 + $0x20] sm:$0xff] %vm2975, %v2947
        %2981 = vst.msk [vmem:[%s395 + $0x28] sm:$0xff] %vm2975, %v2948
        %2982 = vst.msk [vmem:[%s395 + $0x30] sm:$0xff] %vm2975, %v2949
        %2983 = vst.msk [vmem:[%s395 + $0x38] sm:$0xff] %vm2975, %v2950
        %2984 = vst.msk [vmem:[%s395 + $0x40] sm:$0xff] %vm2975, %v2951
        %2985 = vst.msk [vmem:[%s395 + $0x48] sm:$0xff] %vm2975, %v2952
        %2986 = vst.msk [vmem:[%s395 + $0x50] sm:$0xff] %vm2975, %v2953
        %2987 = vst.msk [vmem:[%s395 + $0x58] sm:$0xff] %vm2975, %v2954
        %2988 = vst.msk [vmem:[%s395 + $0x60] sm:$0xff] %vm2975, %v2955
        %2989 = vst.msk [vmem:[%s395 + $0x68] sm:$0xff] %vm2975, %v2956
        %2990 = vst.msk [vmem:[%s395 + $0x70] sm:$0xff] %vm2975, %v2957
        %2991 = vst.msk [vmem:[%s395 + $0x78] sm:$0xff] %vm2975, %v2958
        %2992 = vst.msk [vmem:[%s395 + $0x80] sm:$0xff] %vm2975, %v2959
        %2993 = vst.msk [vmem:[%s395 + $0x88] sm:$0xff] %vm2975, %v2960
        %2994 = vst.msk [vmem:[%s395 + $0x90] sm:$0xff] %vm2975, %v2961
        %2995 = vst.msk [vmem:[%s395 + $0x98] sm:$0xff] %vm2975, %v2962
        %2996 = vst.msk [vmem:[%s395 + $0xa0] sm:$0xff] %vm2975, %v2963
        %2997 = vst.msk [vmem:[%s395 + $0xa8] sm:$0xff] %vm2975, %v2964
        %2998 = vst.msk [vmem:[%s395 + $0xb0] sm:$0xff] %vm2975, %v2965
        %2999 = vst.msk [vmem:[%s395 + $0xb8] sm:$0xff] %vm2975, %v2966
        %3000 = vst.msk [vmem:[%s395 + $0xc0] sm:$0xff] %vm2975, %v2967
        %3001 = vst.msk [vmem:[%s395 + $0xc8] sm:$0xff] %vm2975, %v2968
        %3002 = vst.msk [vmem:[%s395 + $0xd0] sm:$0xff] %vm2975, %v2969
        %3003 = vst.msk [vmem:[%s395 + $0xd8] sm:$0xff] %vm2975, %v2970
        %3004 = vst.msk [vmem:[%s395 + $0xe0] sm:$0xff] %vm2975, %v2971
        %3005 = vst.msk [vmem:[%s395 + $0xe8] sm:$0xff] %vm2975, %v2972
        %3006 = vst.msk [vmem:[%s395 + $0xf0] sm:$0xff] %vm2975, %v2973
        %3007 = vst.msk [vmem:[%s395 + $0xf8] sm:$0xff] %vm2975, %v2974
      $region56: #{non_local_block_forward.3} parent=47 // pred_fallthru
        _
      %s3008 = smul.u32 32, %s24
      %p3009 = scmp.lt.s32.totalorder %s23, 1
      %s3010 = scalar_select %p3009, %s23, 1
      %p3011 = scmp.lt.s32.totalorder %s3008, 31
      %s3012 = scalar_select %p3011, %s3008, 31
      %s3013 = smul.addr %s3010, 32
      %s3014 = sadd.s32 %s3012, %s3013
      %s3015 = smul.addr %s3014, 8
      %s3016 = scalar_lea.vmem %s7, %s3015
      // Predicated region
      $region57: #{non_local_block_forward.3} parent=47 // pred_check
        %p3017 = pneg %p225
      $region58: #{non_local_block_forward.3} parent=47 // pred_check_branch
        %3019 = sbr.rel (%p3017) target = $region60
      $region59: #{non_local_block_forward.3} parent=47 // pred_region
        %s3020 = smul.u32 32, %s24
      $region60: #{non_local_block_forward.3} parent=47 // pred_fallthru
        _
    $region48: #{non_local_block_forward.3} parent=5 // pred_fallthru
      _
    %p3021 = scmp.le.s32.totalorder 2, %s13
    // Predicated region
    $region61: #{non_local_block_forward.3} parent=5 // pred_check
      %p3022 = pneg %p3021
    $region62: #{non_local_block_forward.3} parent=5 // pred_check_branch
      %3024 = sbr.rel (%p3022) target = $region64
    $region63: #{non_local_block_forward.3} parent=5 // pred_region
      %s3025 = ssub.s32 %s13, 2
      // Predicated region
      $region65: #{non_local_block_forward.3} parent=63 // pred_check
        %p3026 = pneg %p231
      $region66: #{non_local_block_forward.3} parent=63 // pred_check_branch
        %3028 = sbr.rel (%p3026) target = $region68
      $region67: #{non_local_block_forward.3} parent=63 // pred_region
        %s3029 = smul.u32 32, %s27
        %p3030 = scmp.lt.s32.totalorder %s26, 1
        %s3031 = scalar_select %p3030, %s26, 1
        %p3032 = scmp.lt.s32.totalorder %s3029, 31
        %s3033 = scalar_select %p3032, %s3029, 31
        %s3034 = smul.addr %s3031, 32
        %s3035 = sadd.s32 %s3033, %s3034
        %s3036 = smul.addr %s3035, 8
        %s3037 = scalar_lea.vmem %s7, %s3036
      $region68: #{non_local_block_forward.3} parent=63 // pred_fallthru
        _
    $region64: #{non_local_block_forward.3} parent=5 // pred_fallthru
      _
  $region6: #{non_local_block_forward.3} parent=0 // loop_footer
    %s17 = sadd.s32 1, %s13
  $region7: #{non_local_block_forward.3} parent=0 // loop_footer_branch
    %12 = sbr.rel target = $region3
  $region8: #{non_local_block_forward.3} parent=0 // loop_exit
    _

</llo_original>
